<compile_context>
chip_gen: v6e
topology: v6e:2x2x1
jax: 0.10.0
libtpu: 0.0.40
codegen_flags: <defaults>
</compile_context>

<pallas_src>
import math
import numpy as np
import jax
import jax.numpy as jnp
from jax import lax
from jax.experimental import pallas as pl
from jax.experimental.pallas import tpu as pltpu

D_MODEL = 128
D_FF = 256
HEADS = 4
NUM_LAYERS = 2
LN_EPS = 1e-6


def make_encoder_kernel(num_layers, heads):
    c_gelu = math.sqrt(2.0 / math.pi)

    def layer_norm(x, g, b):                       # x [N, D], g/b [1, D]
        mu = jnp.mean(x, axis=-1, keepdims=True)
        xc = x - mu
        var = jnp.mean(xc * xc, axis=-1, keepdims=True)
        return xc * lax.rsqrt(var + LN_EPS) * g + b

    def gelu(x):
        return 0.5 * x * (1.0 + jnp.tanh(c_gelu * (x + 0.044715 * x * x * x)))

    def kernel(x_ref, mask_ref, pe_ref,
               ln1g_ref, ln1b_ref, wqkv_ref, bqkv_ref, woa_ref, boa_ref,
               ffg_ref, ffb_ref, w1_ref, b1_ref, w2_ref, b2_ref,
               lnfg_ref, lnfb_ref, wo_ref, bwo_ref, out_ref):
        B, S, D = x_ref.shape
        hd = D // heads
        q_scale = 1.0 / math.sqrt(hd)

        mask = mask_ref[...]                                          # [B, S]
        x = x_ref[...] * mask[:, :, None] + pe_ref[...][None, :, :]   # [B, S, D]
        # additive attention bias over keys: 0 for real tokens, -1e18 for padding
        attn_bias = ((mask - 1.0) * 1e18)[:, None, :]                 # [B, 1, S]

        x2 = x.reshape(B * S, D)                                      # [BS, D]
        for l in range(num_layers):
            h2 = layer_norm(x2, ln1g_ref[l], ln1b_ref[l]) if l != 0 else x2

            # fused lane-dense QKV projection: one [BS, D] @ [D, 3D] matmul
            qkv = jnp.dot(h2, wqkv_ref[l],
                          preferred_element_type=jnp.float32) + bqkv_ref[l]
            q = (qkv[:, :D] * q_scale).reshape(B, S, D)
            k = qkv[:, D:2 * D].reshape(B, S, D)
            v = qkv[:, 2 * D:].reshape(B, S, D)

            # per-head attention; each head's context is accumulated directly through the
            # matching rows of the output projection (no head concat).
            attn_out = boa_ref[l] + jnp.zeros((B * S, D), jnp.float32)
            for hh in range(heads):
                lo, hi = hh * hd, (hh + 1) * hd
                qh, kh, vh = q[:, :, lo:hi], k[:, :, lo:hi], v[:, :, lo:hi]
                sc = jnp.einsum('bqd,bkd->bqk', qh, kh,
                                preferred_element_type=jnp.float32) + attn_bias
                m = jnp.max(sc, axis=-1, keepdims=True)
                e = jnp.exp(sc - m)
                p = e / jnp.sum(e, axis=-1, keepdims=True)
                ch = jnp.einsum('bqk,bkd->bqd', p, vh,
                                preferred_element_type=jnp.float32)    # [B, S, hd]
                attn_out = attn_out + jnp.dot(
                    ch.reshape(B * S, hd), woa_ref[l][lo:hi, :],
                    preferred_element_type=jnp.float32)

            # TODO(synk): attention/residual dropouts are identity in eval mode (omitted).
            out2 = attn_out + x2                                       # residual

            # PositionwiseFeedForward: x + W2(gelu(W1(LN(x))))
            ffn_in = layer_norm(out2, ffg_ref[l], ffb_ref[l])
            inter = gelu(jnp.dot(ffn_in, w1_ref[l],
                                 preferred_element_type=jnp.float32) + b1_ref[l])
            ffn_out = jnp.dot(inter, w2_ref[l],
                              preferred_element_type=jnp.float32) + b2_ref[l]
            x2 = ffn_out + out2

        # final LayerNorm + sigmoid(wo(x)) * mask
        xf = layer_norm(x2, lnfg_ref[...], lnfb_ref[...]).reshape(B, S, D)
        logits = jnp.sum(xf * wo_ref[...][None, :, :], axis=-1) + bwo_ref[...]  # [B, S]
        scores = (1.0 / (1.0 + jnp.exp(-logits))) * mask
        out_ref[...] = scores.astype(out_ref.dtype)

    return kernel


def ext_transformer_encoder_forward(params, top_vecs, mask):
    """top_vecs: [B, S, D] f32, mask: [B, S] bool/float (1 = real sentence)."""
    B, S, D = top_vecs.shape
    mask_f = mask.astype(jnp.float32)
    pe = params["pe"][:S]                                   # [S, D]
    vmem = pl.BlockSpec(memory_space=pltpu.MemorySpace.VMEM)
    kernel = make_encoder_kernel(NUM_LAYERS, HEADS)
    return pl.pallas_call(
        kernel,
        out_shape=jax.ShapeDtypeStruct((B, S), jnp.float32),
        in_specs=[vmem] * 19,
        out_specs=vmem,
    )(top_vecs, mask_f, pe,
      params["ln1_g"], params["ln1_b"],
      params["wqkv"], params["bqkv"],
      params["woa"], params["boa"],
      params["ff_g"], params["ff_b"],
      params["w1"], params["b1"], params["w2"], params["b2"],
      params["lnf_g"], params["lnf_b"],
      params["wo"], params["bwo"])


def init_params(key, num_layers, d_model, d_ff, max_len=512):
    L, D, DF = num_layers, d_model, d_ff
    ks = jax.random.split(key, 10)

    def u(k, shape, fan_in):                      # torch nn.Linear default init
        s = 1.0 / float(np.sqrt(fan_in))
        return jax.random.uniform(k, shape, jnp.float32, -s, s)

    p = {}
    p["ln1_g"] = jnp.ones((L, 1, D), jnp.float32)
    p["ln1_b"] = jnp.zeros((L, 1, D), jnp.float32)
    p["wqkv"] = u(ks[0], (L, D, 3 * D), D)        # [Wq | Wk | Wv] stacked on output dim
    p["bqkv"] = u(ks[1], (L, 1, 3 * D), D)
    p["woa"] = u(ks[2], (L, D, D), D)             # attention final_linear
    p["boa"] = u(ks[3], (L, 1, D), D)
    p["ff_g"] = jnp.ones((L, 1, D), jnp.float32)
    p["ff_b"] = jnp.zeros((L, 1, D), jnp.float32)
    p["w1"] = u(ks[4], (L, D, DF), D)
    p["b1"] = u(ks[5], (L, 1, DF), D)
    p["w2"] = u(ks[6], (L, DF, D), DF)
    p["b2"] = u(ks[7], (L, 1, D), DF)
    p["lnf_g"] = jnp.ones((1, D), jnp.float32)
    p["lnf_b"] = jnp.zeros((1, D), jnp.float32)
    p["wo"] = u(ks[8], (1, D), D)                 # scorer weight (stored as a row)
    p["bwo"] = u(ks[9], (1, 1), D)

    # PositionalEncoding.pe table (precomputed host-side, sliced to seq len in wrapper)
    pe = np.zeros((max_len, D), np.float32)
    position = np.arange(max_len, dtype=np.float32)[:, None]
    div_term = np.exp(np.arange(0, D, 2, dtype=np.float32) * -(math.log(10000.0) / D))
    pe[:, 0::2] = np.sin(position * div_term)
    pe[:, 1::2] = np.cos(position * div_term)
    p["pe"] = jnp.asarray(pe)
    return p


if __name__ == "__main__":
    key = jax.random.PRNGKey(0)
    kp, kx = jax.random.split(key)

    B, S = 2, 8
    params = init_params(kp, NUM_LAYERS, D_MODEL, D_FF)
    top_vecs = jax.random.normal(kx, (B, S, D_MODEL), jnp.float32)
    # batch 0: all 8 sentences real; batch 1: 6 real + 2 padding
    mask = jnp.array([[1] * 8, [1] * 6 + [0] * 2], dtype=jnp.bool_)

    fwd = jax.jit(ext_transformer_encoder_forward)
    sent_scores = fwd(params, top_vecs, mask)
    jax.block_until_ready(sent_scores)
    sent_scores = fwd(params, top_vecs, mask)          # cached (no recompilation) path
    jax.block_until_ready(sent_scores)

    assert sent_scores.shape == (B, S)
    assert bool(jnp.all(jnp.isfinite(sent_scores)))
    assert bool(jnp.all((sent_scores >= 0.0) & (sent_scores <= 1.0)))
    assert bool(jnp.all(sent_scores[1, 6:] == 0.0))    # padded sentences scored 0
    print("KERNEL_OK")
</pallas_src>

<mosaic_0001>
module attributes {stable_mosaic.version = 11 : i64} {
  func.func @kernel(%arg0: memref<2x8x128xf32, #tpu.memory_space<vmem>>, %arg1: memref<2x8xf32, #tpu.memory_space<vmem>>, %arg2: memref<8x128xf32, #tpu.memory_space<vmem>>, %arg3: memref<2x1x128xf32, #tpu.memory_space<vmem>>, %arg4: memref<2x1x128xf32, #tpu.memory_space<vmem>>, %arg5: memref<2x128x384xf32, #tpu.memory_space<vmem>>, %arg6: memref<2x1x384xf32, #tpu.memory_space<vmem>>, %arg7: memref<2x128x128xf32, #tpu.memory_space<vmem>>, %arg8: memref<2x1x128xf32, #tpu.memory_space<vmem>>, %arg9: memref<2x1x128xf32, #tpu.memory_space<vmem>>, %arg10: memref<2x1x128xf32, #tpu.memory_space<vmem>>, %arg11: memref<2x128x256xf32, #tpu.memory_space<vmem>>, %arg12: memref<2x1x256xf32, #tpu.memory_space<vmem>>, %arg13: memref<2x256x128xf32, #tpu.memory_space<vmem>>, %arg14: memref<2x1x128xf32, #tpu.memory_space<vmem>>, %arg15: memref<1x128xf32, #tpu.memory_space<vmem>>, %arg16: memref<1x128xf32, #tpu.memory_space<vmem>>, %arg17: memref<1x128xf32, #tpu.memory_space<vmem>>, %arg18: memref<1x1xf32, #tpu.memory_space<vmem>>, %arg19: memref<2x8xf32, #tpu.memory_space<vmem>>) attributes {dimension_semantics = [], scalar_prefetch = 0 : i64, scratch_operands = 0 : i64, tpu.core_type = #tpu.core_type<tc>} {
    %c0 = arith.constant 0 : index
    %c0_0 = arith.constant 0 : index
    %0 = vector.load %arg1[%c0, %c0_0] : memref<2x8xf32, #tpu.memory_space<vmem>>, vector<2x8xf32>
    %c0_1 = arith.constant 0 : index
    %c0_2 = arith.constant 0 : index
    %c0_3 = arith.constant 0 : index
    %1 = vector.load %arg0[%c0_1, %c0_2, %c0_3] : memref<2x8x128xf32, #tpu.memory_space<vmem>>, vector<2x8x128xf32>
    %2 = vector.shape_cast %0 : vector<2x8xf32> to vector<2x8x1xf32>
    %3 = vector.broadcast %2 : vector<2x8x1xf32> to vector<2x8x128xf32>
    %4 = arith.mulf %1, %3 : vector<2x8x128xf32>
    %c0_4 = arith.constant 0 : index
    %c0_5 = arith.constant 0 : index
    %5 = vector.load %arg2[%c0_4, %c0_5] : memref<8x128xf32, #tpu.memory_space<vmem>>, vector<8x128xf32>
    %6 = vector.shape_cast %5 : vector<8x128xf32> to vector<1x8x128xf32>
    %7 = vector.broadcast %6 : vector<1x8x128xf32> to vector<2x8x128xf32>
    %8 = arith.addf %4, %7 : vector<2x8x128xf32>
    %cst = arith.constant 1.000000e+00 : f32
    %9 = vector.broadcast %cst : f32 to vector<2x8xf32>
    %10 = arith.subf %0, %9 : vector<2x8xf32>
    %cst_6 = arith.constant 9.99999984E+17 : f32
    %11 = vector.broadcast %cst_6 : f32 to vector<2x8xf32>
    %12 = arith.mulf %10, %11 : vector<2x8xf32>
    %13 = vector.shape_cast %12 : vector<2x8xf32> to vector<2x1x8xf32>
    %14 = vector.shape_cast %8 : vector<2x8x128xf32> to vector<16x128xf32>
    %c0_7 = arith.constant 0 : index
    %c0_8 = arith.constant 0 : index
    %c0_9 = arith.constant 0 : index
    %15 = vector.load %arg5[%c0_7, %c0_8, %c0_9] : memref<2x128x384xf32, #tpu.memory_space<vmem>>, vector<1x128x384xf32>
    %16 = vector.shape_cast %15 : vector<1x128x384xf32> to vector<128x384xf32>
    %cst_10 = arith.constant dense<0.000000e+00> : vector<16x384xf32>
    %17 = tpu.matmul %14, %16, %cst_10 {dimension_numbers = #tpu.dot_dimension_numbers<[1], [0], [0], [1], [0, 0, 1, 1], [], []>} : vector<16x128xf32>, vector<128x384xf32>, vector<16x384xf32> -> vector<16x384xf32>
    %c0_11 = arith.constant 0 : index
    %c0_12 = arith.constant 0 : index
    %c0_13 = arith.constant 0 : index
    %18 = vector.load %arg6[%c0_11, %c0_12, %c0_13] : memref<2x1x384xf32, #tpu.memory_space<vmem>>, vector<1x1x384xf32>
    %19 = vector.shape_cast %18 : vector<1x1x384xf32> to vector<1x384xf32>
    %20 = vector.broadcast %19 : vector<1x384xf32> to vector<16x384xf32>
    %21 = arith.addf %17, %20 : vector<16x384xf32>
    %22 = vector.extract_strided_slice %21 {offsets = [0, 0], sizes = [16, 128], strides = [1, 1]} : vector<16x384xf32> to vector<16x128xf32>
    %cst_14 = arith.constant 0.176776692 : f32
    %23 = vector.broadcast %cst_14 : f32 to vector<16x128xf32>
    %24 = arith.mulf %22, %23 : vector<16x128xf32>
    %25 = vector.shape_cast %24 : vector<16x128xf32> to vector<2x8x128xf32>
    %26 = vector.extract_strided_slice %21 {offsets = [0, 128], sizes = [16, 128], strides = [1, 1]} : vector<16x384xf32> to vector<16x128xf32>
    %27 = vector.shape_cast %26 : vector<16x128xf32> to vector<2x8x128xf32>
    %28 = vector.extract_strided_slice %21 {offsets = [0, 256], sizes = [16, 128], strides = [1, 1]} : vector<16x384xf32> to vector<16x128xf32>
    %29 = vector.shape_cast %28 : vector<16x128xf32> to vector<2x8x128xf32>
    %c0_15 = arith.constant 0 : index
    %c0_16 = arith.constant 0 : index
    %c0_17 = arith.constant 0 : index
    %30 = vector.load %arg8[%c0_15, %c0_16, %c0_17] : memref<2x1x128xf32, #tpu.memory_space<vmem>>, vector<1x1x128xf32>
    %31 = vector.shape_cast %30 : vector<1x1x128xf32> to vector<1x128xf32>
    %cst_18 = arith.constant 0.000000e+00 : f32
    %32 = vector.broadcast %cst_18 : f32 to vector<16x128xf32>
    %33 = vector.broadcast %31 : vector<1x128xf32> to vector<16x128xf32>
    %34 = arith.addf %33, %32 : vector<16x128xf32>
    %35 = vector.extract_strided_slice %25 {offsets = [0, 0, 0], sizes = [2, 8, 32], strides = [1, 1, 1]} : vector<2x8x128xf32> to vector<2x8x32xf32>
    %36 = vector.extract_strided_slice %27 {offsets = [0, 0, 0], sizes = [2, 8, 32], strides = [1, 1, 1]} : vector<2x8x128xf32> to vector<2x8x32xf32>
    %37 = vector.extract_strided_slice %29 {offsets = [0, 0, 0], sizes = [2, 8, 32], strides = [1, 1, 1]} : vector<2x8x128xf32> to vector<2x8x32xf32>
    "tpu.trace_start"() <{level = 10 : i32, message = "bqd,bkd->bqk"}> : () -> ()
    %cst_19 = arith.constant dense<0.000000e+00> : vector<2x8x8xf32>
    %38 = tpu.matmul %35, %36, %cst_19 {dimension_numbers = #tpu.dot_dimension_numbers<[2], [2], [1], [1], [0, 0, 0, 1, 1, 1], [0], [0]>} : vector<2x8x32xf32>, vector<2x8x32xf32>, vector<2x8x8xf32> -> vector<2x8x8xf32>
    "tpu.trace_stop"() : () -> ()
    %39 = vector.broadcast %13 : vector<2x1x8xf32> to vector<2x8x8xf32>
    %40 = arith.addf %38, %39 : vector<2x8x8xf32>
    %cst_20 = arith.constant dense<0xFF800000> : vector<2x8xf32>
    %41 = vector.multi_reduction <maximumf>, %40, %cst_20 [2] : vector<2x8x8xf32> to vector<2x8xf32>
    %42 = vector.shape_cast %41 : vector<2x8xf32> to vector<2x8x1xf32>
    %43 = vector.broadcast %42 : vector<2x8x1xf32> to vector<2x8x8xf32>
    %44 = arith.subf %40, %43 : vector<2x8x8xf32>
    %45 = math.exp %44 : vector<2x8x8xf32>
    %cst_21 = arith.constant dense<0.000000e+00> : vector<2x8xf32>
    %46 = vector.multi_reduction <add>, %45, %cst_21 [2] : vector<2x8x8xf32> to vector<2x8xf32>
    %47 = vector.shape_cast %46 : vector<2x8xf32> to vector<2x8x1xf32>
    %48 = vector.broadcast %47 : vector<2x8x1xf32> to vector<2x8x8xf32>
    %49 = arith.divf %45, %48 : vector<2x8x8xf32>
    "tpu.trace_start"() <{level = 10 : i32, message = "bqk,bkd->bqd"}> : () -> ()
    %cst_22 = arith.constant dense<0.000000e+00> : vector<2x8x32xf32>
    %50 = tpu.matmul %49, %37, %cst_22 {dimension_numbers = #tpu.dot_dimension_numbers<[2], [1], [1], [2], [0, 0, 0, 1, 1, 2], [0], [0]>} : vector<2x8x8xf32>, vector<2x8x32xf32>, vector<2x8x32xf32> -> vector<2x8x32xf32>
    "tpu.trace_stop"() : () -> ()
    %51 = vector.shape_cast %50 : vector<2x8x32xf32> to vector<16x32xf32>
    %c0_23 = arith.constant 0 : index
    %c0_24 = arith.constant 0 : index
    %c0_25 = arith.constant 0 : index
    %52 = vector.load %arg7[%c0_23, %c0_24, %c0_25] : memref<2x128x128xf32, #tpu.memory_space<vmem>>, vector<1x128x128xf32>
    %53 = vector.shape_cast %52 : vector<1x128x128xf32> to vector<128x128xf32>
    %54 = vector.extract_strided_slice %53 {offsets = [0, 0], sizes = [32, 128], strides = [1, 1]} : vector<128x128xf32> to vector<32x128xf32>
    %cst_26 = arith.constant dense<0.000000e+00> : vector<16x128xf32>
    %55 = tpu.matmul %51, %54, %cst_26 {dimension_numbers = #tpu.dot_dimension_numbers<[1], [0], [0], [1], [0, 0, 1, 1], [], []>} : vector<16x32xf32>, vector<32x128xf32>, vector<16x128xf32> -> vector<16x128xf32>
    %56 = arith.addf %34, %55 : vector<16x128xf32>
    %57 = vector.extract_strided_slice %25 {offsets = [0, 0, 32], sizes = [2, 8, 32], strides = [1, 1, 1]} : vector<2x8x128xf32> to vector<2x8x32xf32>
    %58 = vector.extract_strided_slice %27 {offsets = [0, 0, 32], sizes = [2, 8, 32], strides = [1, 1, 1]} : vector<2x8x128xf32> to vector<2x8x32xf32>
    %59 = vector.extract_strided_slice %29 {offsets = [0, 0, 32], sizes = [2, 8, 32], strides = [1, 1, 1]} : vector<2x8x128xf32> to vector<2x8x32xf32>
    "tpu.trace_start"() <{level = 10 : i32, message = "bqd,bkd->bqk"}> : () -> ()
    %cst_27 = arith.constant dense<0.000000e+00> : vector<2x8x8xf32>
    %60 = tpu.matmul %57, %58, %cst_27 {dimension_numbers = #tpu.dot_dimension_numbers<[2], [2], [1], [1], [0, 0, 0, 1, 1, 1], [0], [0]>} : vector<2x8x32xf32>, vector<2x8x32xf32>, vector<2x8x8xf32> -> vector<2x8x8xf32>
    "tpu.trace_stop"() : () -> ()
    %61 = vector.broadcast %13 : vector<2x1x8xf32> to vector<2x8x8xf32>
    %62 = arith.addf %60, %61 : vector<2x8x8xf32>
    %cst_28 = arith.constant dense<0xFF800000> : vector<2x8xf32>
    %63 = vector.multi_reduction <maximumf>, %62, %cst_28 [2] : vector<2x8x8xf32> to vector<2x8xf32>
    %64 = vector.shape_cast %63 : vector<2x8xf32> to vector<2x8x1xf32>
    %65 = vector.broadcast %64 : vector<2x8x1xf32> to vector<2x8x8xf32>
    %66 = arith.subf %62, %65 : vector<2x8x8xf32>
    %67 = math.exp %66 : vector<2x8x8xf32>
    %cst_29 = arith.constant dense<0.000000e+00> : vector<2x8xf32>
    %68 = vector.multi_reduction <add>, %67, %cst_29 [2] : vector<2x8x8xf32> to vector<2x8xf32>
    %69 = vector.shape_cast %68 : vector<2x8xf32> to vector<2x8x1xf32>
    %70 = vector.broadcast %69 : vector<2x8x1xf32> to vector<2x8x8xf32>
    %71 = arith.divf %67, %70 : vector<2x8x8xf32>
    "tpu.trace_start"() <{level = 10 : i32, message = "bqk,bkd->bqd"}> : () -> ()
    %cst_30 = arith.constant dense<0.000000e+00> : vector<2x8x32xf32>
    %72 = tpu.matmul %71, %59, %cst_30 {dimension_numbers = #tpu.dot_dimension_numbers<[2], [1], [1], [2], [0, 0, 0, 1, 1, 2], [0], [0]>} : vector<2x8x8xf32>, vector<2x8x32xf32>, vector<2x8x32xf32> -> vector<2x8x32xf32>
    "tpu.trace_stop"() : () -> ()
    %73 = vector.shape_cast %72 : vector<2x8x32xf32> to vector<16x32xf32>
    %c0_31 = arith.constant 0 : index
    %c0_32 = arith.constant 0 : index
    %c0_33 = arith.constant 0 : index
    %74 = vector.load %arg7[%c0_31, %c0_32, %c0_33] : memref<2x128x128xf32, #tpu.memory_space<vmem>>, vector<1x128x128xf32>
    %75 = vector.shape_cast %74 : vector<1x128x128xf32> to vector<128x128xf32>
    %76 = vector.extract_strided_slice %75 {offsets = [32, 0], sizes = [32, 128], strides = [1, 1]} : vector<128x128xf32> to vector<32x128xf32>
    %cst_34 = arith.constant dense<0.000000e+00> : vector<16x128xf32>
    %77 = tpu.matmul %73, %76, %cst_34 {dimension_numbers = #tpu.dot_dimension_numbers<[1], [0], [0], [1], [0, 0, 1, 1], [], []>} : vector<16x32xf32>, vector<32x128xf32>, vector<16x128xf32> -> vector<16x128xf32>
    %78 = arith.addf %56, %77 : vector<16x128xf32>
    %79 = vector.extract_strided_slice %25 {offsets = [0, 0, 64], sizes = [2, 8, 32], strides = [1, 1, 1]} : vector<2x8x128xf32> to vector<2x8x32xf32>
    %80 = vector.extract_strided_slice %27 {offsets = [0, 0, 64], sizes = [2, 8, 32], strides = [1, 1, 1]} : vector<2x8x128xf32> to vector<2x8x32xf32>
    %81 = vector.extract_strided_slice %29 {offsets = [0, 0, 64], sizes = [2, 8, 32], strides = [1, 1, 1]} : vector<2x8x128xf32> to vector<2x8x32xf32>
    "tpu.trace_start"() <{level = 10 : i32, message = "bqd,bkd->bqk"}> : () -> ()
    %cst_35 = arith.constant dense<0.000000e+00> : vector<2x8x8xf32>
    %82 = tpu.matmul %79, %80, %cst_35 {dimension_numbers = #tpu.dot_dimension_numbers<[2], [2], [1], [1], [0, 0, 0, 1, 1, 1], [0], [0]>} : vector<2x8x32xf32>, vector<2x8x32xf32>, vector<2x8x8xf32> -> vector<2x8x8xf32>
    "tpu.trace_stop"() : () -> ()
    %83 = vector.broadcast %13 : vector<2x1x8xf32> to vector<2x8x8xf32>
    %84 = arith.addf %82, %83 : vector<2x8x8xf32>
    %cst_36 = arith.constant dense<0xFF800000> : vector<2x8xf32>
    %85 = vector.multi_reduction <maximumf>, %84, %cst_36 [2] : vector<2x8x8xf32> to vector<2x8xf32>
    %86 = vector.shape_cast %85 : vector<2x8xf32> to vector<2x8x1xf32>
    %87 = vector.broadcast %86 : vector<2x8x1xf32> to vector<2x8x8xf32>
    %88 = arith.subf %84, %87 : vector<2x8x8xf32>
    %89 = math.exp %88 : vector<2x8x8xf32>
    %cst_37 = arith.constant dense<0.000000e+00> : vector<2x8xf32>
    %90 = vector.multi_reduction <add>, %89, %cst_37 [2] : vector<2x8x8xf32> to vector<2x8xf32>
    %91 = vector.shape_cast %90 : vector<2x8xf32> to vector<2x8x1xf32>
    %92 = vector.broadcast %91 : vector<2x8x1xf32> to vector<2x8x8xf32>
    %93 = arith.divf %89, %92 : vector<2x8x8xf32>
    "tpu.trace_start"() <{level = 10 : i32, message = "bqk,bkd->bqd"}> : () -> ()
    %cst_38 = arith.constant dense<0.000000e+00> : vector<2x8x32xf32>
    %94 = tpu.matmul %93, %81, %cst_38 {dimension_numbers = #tpu.dot_dimension_numbers<[2], [1], [1], [2], [0, 0, 0, 1, 1, 2], [0], [0]>} : vector<2x8x8xf32>, vector<2x8x32xf32>, vector<2x8x32xf32> -> vector<2x8x32xf32>
    "tpu.trace_stop"() : () -> ()
    %95 = vector.shape_cast %94 : vector<2x8x32xf32> to vector<16x32xf32>
    %c0_39 = arith.constant 0 : index
    %c0_40 = arith.constant 0 : index
    %c0_41 = arith.constant 0 : index
    %96 = vector.load %arg7[%c0_39, %c0_40, %c0_41] : memref<2x128x128xf32, #tpu.memory_space<vmem>>, vector<1x128x128xf32>
    %97 = vector.shape_cast %96 : vector<1x128x128xf32> to vector<128x128xf32>
    %98 = vector.extract_strided_slice %97 {offsets = [64, 0], sizes = [32, 128], strides = [1, 1]} : vector<128x128xf32> to vector<32x128xf32>
    %cst_42 = arith.constant dense<0.000000e+00> : vector<16x128xf32>
    %99 = tpu.matmul %95, %98, %cst_42 {dimension_numbers = #tpu.dot_dimension_numbers<[1], [0], [0], [1], [0, 0, 1, 1], [], []>} : vector<16x32xf32>, vector<32x128xf32>, vector<16x128xf32> -> vector<16x128xf32>
    %100 = arith.addf %78, %99 : vector<16x128xf32>
    %101 = vector.extract_strided_slice %25 {offsets = [0, 0, 96], sizes = [2, 8, 32], strides = [1, 1, 1]} : vector<2x8x128xf32> to vector<2x8x32xf32>
    %102 = vector.extract_strided_slice %27 {offsets = [0, 0, 96], sizes = [2, 8, 32], strides = [1, 1, 1]} : vector<2x8x128xf32> to vector<2x8x32xf32>
    %103 = vector.extract_strided_slice %29 {offsets = [0, 0, 96], sizes = [2, 8, 32], strides = [1, 1, 1]} : vector<2x8x128xf32> to vector<2x8x32xf32>
    "tpu.trace_start"() <{level = 10 : i32, message = "bqd,bkd->bqk"}> : () -> ()
    %cst_43 = arith.constant dense<0.000000e+00> : vector<2x8x8xf32>
    %104 = tpu.matmul %101, %102, %cst_43 {dimension_numbers = #tpu.dot_dimension_numbers<[2], [2], [1], [1], [0, 0, 0, 1, 1, 1], [0], [0]>} : vector<2x8x32xf32>, vector<2x8x32xf32>, vector<2x8x8xf32> -> vector<2x8x8xf32>
    "tpu.trace_stop"() : () -> ()
    %105 = vector.broadcast %13 : vector<2x1x8xf32> to vector<2x8x8xf32>
    %106 = arith.addf %104, %105 : vector<2x8x8xf32>
    %cst_44 = arith.constant dense<0xFF800000> : vector<2x8xf32>
    %107 = vector.multi_reduction <maximumf>, %106, %cst_44 [2] : vector<2x8x8xf32> to vector<2x8xf32>
    %108 = vector.shape_cast %107 : vector<2x8xf32> to vector<2x8x1xf32>
    %109 = vector.broadcast %108 : vector<2x8x1xf32> to vector<2x8x8xf32>
    %110 = arith.subf %106, %109 : vector<2x8x8xf32>
    %111 = math.exp %110 : vector<2x8x8xf32>
    %cst_45 = arith.constant dense<0.000000e+00> : vector<2x8xf32>
    %112 = vector.multi_reduction <add>, %111, %cst_45 [2] : vector<2x8x8xf32> to vector<2x8xf32>
    %113 = vector.shape_cast %112 : vector<2x8xf32> to vector<2x8x1xf32>
    %114 = vector.broadcast %113 : vector<2x8x1xf32> to vector<2x8x8xf32>
    %115 = arith.divf %111, %114 : vector<2x8x8xf32>
    "tpu.trace_start"() <{level = 10 : i32, message = "bqk,bkd->bqd"}> : () -> ()
    %cst_46 = arith.constant dense<0.000000e+00> : vector<2x8x32xf32>
    %116 = tpu.matmul %115, %103, %cst_46 {dimension_numbers = #tpu.dot_dimension_numbers<[2], [1], [1], [2], [0, 0, 0, 1, 1, 2], [0], [0]>} : vector<2x8x8xf32>, vector<2x8x32xf32>, vector<2x8x32xf32> -> vector<2x8x32xf32>
    "tpu.trace_stop"() : () -> ()
    %117 = vector.shape_cast %116 : vector<2x8x32xf32> to vector<16x32xf32>
    %c0_47 = arith.constant 0 : index
    %c0_48 = arith.constant 0 : index
    %c0_49 = arith.constant 0 : index
    %118 = vector.load %arg7[%c0_47, %c0_48, %c0_49] : memref<2x128x128xf32, #tpu.memory_space<vmem>>, vector<1x128x128xf32>
    %119 = vector.shape_cast %118 : vector<1x128x128xf32> to vector<128x128xf32>
    %120 = vector.extract_strided_slice %119 {offsets = [96, 0], sizes = [32, 128], strides = [1, 1]} : vector<128x128xf32> to vector<32x128xf32>
    %cst_50 = arith.constant dense<0.000000e+00> : vector<16x128xf32>
    %121 = tpu.matmul %117, %120, %cst_50 {dimension_numbers = #tpu.dot_dimension_numbers<[1], [0], [0], [1], [0, 0, 1, 1], [], []>} : vector<16x32xf32>, vector<32x128xf32>, vector<16x128xf32> -> vector<16x128xf32>
    %122 = arith.addf %100, %121 : vector<16x128xf32>
    %123 = arith.addf %122, %14 : vector<16x128xf32>
    %c0_51 = arith.constant 0 : index
    %c0_52 = arith.constant 0 : index
    %c0_53 = arith.constant 0 : index
    %124 = vector.load %arg9[%c0_51, %c0_52, %c0_53] : memref<2x1x128xf32, #tpu.memory_space<vmem>>, vector<1x1x128xf32>
    %125 = vector.shape_cast %124 : vector<1x1x128xf32> to vector<1x128xf32>
    %c0_54 = arith.constant 0 : index
    %c0_55 = arith.constant 0 : index
    %c0_56 = arith.constant 0 : index
    %126 = vector.load %arg10[%c0_54, %c0_55, %c0_56] : memref<2x1x128xf32, #tpu.memory_space<vmem>>, vector<1x1x128xf32>
    %127 = vector.shape_cast %126 : vector<1x1x128xf32> to vector<1x128xf32>
    %cst_57 = arith.constant dense<0.000000e+00> : vector<16xf32>
    %128 = vector.multi_reduction <add>, %123, %cst_57 [1] : vector<16x128xf32> to vector<16xf32>
    %129 = vector.shape_cast %128 : vector<16xf32> to vector<16x1xf32>
    %cst_58 = arith.constant 1.280000e+02 : f32
    %130 = vector.broadcast %cst_58 : f32 to vector<16x1xf32>
    %131 = arith.divf %129, %130 : vector<16x1xf32>
    %132 = vector.broadcast %131 : vector<16x1xf32> to vector<16x128xf32>
    %133 = arith.subf %123, %132 : vector<16x128xf32>
    %134 = arith.mulf %133, %133 : vector<16x128xf32>
    %cst_59 = arith.constant dense<0.000000e+00> : vector<16xf32>
    %135 = vector.multi_reduction <add>, %134, %cst_59 [1] : vector<16x128xf32> to vector<16xf32>
    %136 = vector.shape_cast %135 : vector<16xf32> to vector<16x1xf32>
    %cst_60 = arith.constant 1.280000e+02 : f32
    %137 = vector.broadcast %cst_60 : f32 to vector<16x1xf32>
    %138 = arith.divf %136, %137 : vector<16x1xf32>
    %cst_61 = arith.constant 9.99999997E-7 : f32
    %139 = vector.broadcast %cst_61 : f32 to vector<16x1xf32>
    %140 = arith.addf %138, %139 : vector<16x1xf32>
    %141 = math.rsqrt %140 : vector<16x1xf32>
    %142 = vector.broadcast %141 : vector<16x1xf32> to vector<16x128xf32>
    %143 = arith.mulf %133, %142 : vector<16x128xf32>
    %144 = vector.broadcast %125 : vector<1x128xf32> to vector<16x128xf32>
    %145 = arith.mulf %143, %144 : vector<16x128xf32>
    %146 = vector.broadcast %127 : vector<1x128xf32> to vector<16x128xf32>
    %147 = arith.addf %145, %146 : vector<16x128xf32>
    %c0_62 = arith.constant 0 : index
    %c0_63 = arith.constant 0 : index
    %c0_64 = arith.constant 0 : index
    %148 = vector.load %arg11[%c0_62, %c0_63, %c0_64] : memref<2x128x256xf32, #tpu.memory_space<vmem>>, vector<1x128x256xf32>
    %149 = vector.shape_cast %148 : vector<1x128x256xf32> to vector<128x256xf32>
    %cst_65 = arith.constant dense<0.000000e+00> : vector<16x256xf32>
    %150 = tpu.matmul %147, %149, %cst_65 {dimension_numbers = #tpu.dot_dimension_numbers<[1], [0], [0], [1], [0, 0, 1, 1], [], []>} : vector<16x128xf32>, vector<128x256xf32>, vector<16x256xf32> -> vector<16x256xf32>
    %c0_66 = arith.constant 0 : index
    %c0_67 = arith.constant 0 : index
    %c0_68 = arith.constant 0 : index
    %151 = vector.load %arg12[%c0_66, %c0_67, %c0_68] : memref<2x1x256xf32, #tpu.memory_space<vmem>>, vector<1x1x256xf32>
    %152 = vector.shape_cast %151 : vector<1x1x256xf32> to vector<1x256xf32>
    %153 = vector.broadcast %152 : vector<1x256xf32> to vector<16x256xf32>
    %154 = arith.addf %150, %153 : vector<16x256xf32>
    %cst_69 = arith.constant 5.000000e-01 : f32
    %155 = vector.broadcast %cst_69 : f32 to vector<16x256xf32>
    %156 = arith.mulf %155, %154 : vector<16x256xf32>
    %cst_70 = arith.constant 4.471500e-02 : f32
    %157 = vector.broadcast %cst_70 : f32 to vector<16x256xf32>
    %158 = arith.mulf %157, %154 : vector<16x256xf32>
    %159 = arith.mulf %158, %154 : vector<16x256xf32>
    %160 = arith.mulf %159, %154 : vector<16x256xf32>
    %161 = arith.addf %154, %160 : vector<16x256xf32>
    %cst_71 = arith.constant 0.797884583 : f32
    %162 = vector.broadcast %cst_71 : f32 to vector<16x256xf32>
    %163 = arith.mulf %162, %161 : vector<16x256xf32>
    %164 = math.tanh %163 : vector<16x256xf32>
    %cst_72 = arith.constant 1.000000e+00 : f32
    %165 = vector.broadcast %cst_72 : f32 to vector<16x256xf32>
    %166 = arith.addf %165, %164 : vector<16x256xf32>
    %167 = arith.mulf %156, %166 : vector<16x256xf32>
    %c0_73 = arith.constant 0 : index
    %c0_74 = arith.constant 0 : index
    %c0_75 = arith.constant 0 : index
    %168 = vector.load %arg13[%c0_73, %c0_74, %c0_75] : memref<2x256x128xf32, #tpu.memory_space<vmem>>, vector<1x256x128xf32>
    %169 = vector.shape_cast %168 : vector<1x256x128xf32> to vector<256x128xf32>
    %cst_76 = arith.constant dense<0.000000e+00> : vector<16x128xf32>
    %170 = tpu.matmul %167, %169, %cst_76 {dimension_numbers = #tpu.dot_dimension_numbers<[1], [0], [0], [1], [0, 0, 1, 1], [], []>} : vector<16x256xf32>, vector<256x128xf32>, vector<16x128xf32> -> vector<16x128xf32>
    %c0_77 = arith.constant 0 : index
    %c0_78 = arith.constant 0 : index
    %c0_79 = arith.constant 0 : index
    %171 = vector.load %arg14[%c0_77, %c0_78, %c0_79] : memref<2x1x128xf32, #tpu.memory_space<vmem>>, vector<1x1x128xf32>
    %172 = vector.shape_cast %171 : vector<1x1x128xf32> to vector<1x128xf32>
    %173 = vector.broadcast %172 : vector<1x128xf32> to vector<16x128xf32>
    %174 = arith.addf %170, %173 : vector<16x128xf32>
    %175 = arith.addf %174, %123 : vector<16x128xf32>
    %c1 = arith.constant 1 : index
    %c0_80 = arith.constant 0 : index
    %c0_81 = arith.constant 0 : index
    %176 = vector.load %arg3[%c1, %c0_80, %c0_81] : memref<2x1x128xf32, #tpu.memory_space<vmem>>, vector<1x1x128xf32>
    %177 = vector.shape_cast %176 : vector<1x1x128xf32> to vector<1x128xf32>
    %c1_82 = arith.constant 1 : index
    %c0_83 = arith.constant 0 : index
    %c0_84 = arith.constant 0 : index
    %178 = vector.load %arg4[%c1_82, %c0_83, %c0_84] : memref<2x1x128xf32, #tpu.memory_space<vmem>>, vector<1x1x128xf32>
    %179 = vector.shape_cast %178 : vector<1x1x128xf32> to vector<1x128xf32>
    %cst_85 = arith.constant dense<0.000000e+00> : vector<16xf32>
    %180 = vector.multi_reduction <add>, %175, %cst_85 [1] : vector<16x128xf32> to vector<16xf32>
    %181 = vector.shape_cast %180 : vector<16xf32> to vector<16x1xf32>
    %cst_86 = arith.constant 1.280000e+02 : f32
    %182 = vector.broadcast %cst_86 : f32 to vector<16x1xf32>
    %183 = arith.divf %181, %182 : vector<16x1xf32>
    %184 = vector.broadcast %183 : vector<16x1xf32> to vector<16x128xf32>
    %185 = arith.subf %175, %184 : vector<16x128xf32>
    %186 = arith.mulf %185, %185 : vector<16x128xf32>
    %cst_87 = arith.constant dense<0.000000e+00> : vector<16xf32>
    %187 = vector.multi_reduction <add>, %186, %cst_87 [1] : vector<16x128xf32> to vector<16xf32>
    %188 = vector.shape_cast %187 : vector<16xf32> to vector<16x1xf32>
    %cst_88 = arith.constant 1.280000e+02 : f32
    %189 = vector.broadcast %cst_88 : f32 to vector<16x1xf32>
    %190 = arith.divf %188, %189 : vector<16x1xf32>
    %cst_89 = arith.constant 9.99999997E-7 : f32
    %191 = vector.broadcast %cst_89 : f32 to vector<16x1xf32>
    %192 = arith.addf %190, %191 : vector<16x1xf32>
    %193 = math.rsqrt %192 : vector<16x1xf32>
    %194 = vector.broadcast %193 : vector<16x1xf32> to vector<16x128xf32>
    %195 = arith.mulf %185, %194 : vector<16x128xf32>
    %196 = vector.broadcast %177 : vector<1x128xf32> to vector<16x128xf32>
    %197 = arith.mulf %195, %196 : vector<16x128xf32>
    %198 = vector.broadcast %179 : vector<1x128xf32> to vector<16x128xf32>
    %199 = arith.addf %197, %198 : vector<16x128xf32>
    %c1_90 = arith.constant 1 : index
    %c0_91 = arith.constant 0 : index
    %c0_92 = arith.constant 0 : index
    %200 = vector.load %arg5[%c1_90, %c0_91, %c0_92] : memref<2x128x384xf32, #tpu.memory_space<vmem>>, vector<1x128x384xf32>
    %201 = vector.shape_cast %200 : vector<1x128x384xf32> to vector<128x384xf32>
    %cst_93 = arith.constant dense<0.000000e+00> : vector<16x384xf32>
    %202 = tpu.matmul %199, %201, %cst_93 {dimension_numbers = #tpu.dot_dimension_numbers<[1], [0], [0], [1], [0, 0, 1, 1], [], []>} : vector<16x128xf32>, vector<128x384xf32>, vector<16x384xf32> -> vector<16x384xf32>
    %c1_94 = arith.constant 1 : index
    %c0_95 = arith.constant 0 : index
    %c0_96 = arith.constant 0 : index
    %203 = vector.load %arg6[%c1_94, %c0_95, %c0_96] : memref<2x1x384xf32, #tpu.memory_space<vmem>>, vector<1x1x384xf32>
    %204 = vector.shape_cast %203 : vector<1x1x384xf32> to vector<1x384xf32>
    %205 = vector.broadcast %204 : vector<1x384xf32> to vector<16x384xf32>
    %206 = arith.addf %202, %205 : vector<16x384xf32>
    %207 = vector.extract_strided_slice %206 {offsets = [0, 0], sizes = [16, 128], strides = [1, 1]} : vector<16x384xf32> to vector<16x128xf32>
    %cst_97 = arith.constant 0.176776692 : f32
    %208 = vector.broadcast %cst_97 : f32 to vector<16x128xf32>
    %209 = arith.mulf %207, %208 : vector<16x128xf32>
    %210 = vector.shape_cast %209 : vector<16x128xf32> to vector<2x8x128xf32>
    %211 = vector.extract_strided_slice %206 {offsets = [0, 128], sizes = [16, 128], strides = [1, 1]} : vector<16x384xf32> to vector<16x128xf32>
    %212 = vector.shape_cast %211 : vector<16x128xf32> to vector<2x8x128xf32>
    %213 = vector.extract_strided_slice %206 {offsets = [0, 256], sizes = [16, 128], strides = [1, 1]} : vector<16x384xf32> to vector<16x128xf32>
    %214 = vector.shape_cast %213 : vector<16x128xf32> to vector<2x8x128xf32>
    %c1_98 = arith.constant 1 : index
    %c0_99 = arith.constant 0 : index
    %c0_100 = arith.constant 0 : index
    %215 = vector.load %arg8[%c1_98, %c0_99, %c0_100] : memref<2x1x128xf32, #tpu.memory_space<vmem>>, vector<1x1x128xf32>
    %216 = vector.shape_cast %215 : vector<1x1x128xf32> to vector<1x128xf32>
    %cst_101 = arith.constant 0.000000e+00 : f32
    %217 = vector.broadcast %cst_101 : f32 to vector<16x128xf32>
    %218 = vector.broadcast %216 : vector<1x128xf32> to vector<16x128xf32>
    %219 = arith.addf %218, %217 : vector<16x128xf32>
    %220 = vector.extract_strided_slice %210 {offsets = [0, 0, 0], sizes = [2, 8, 32], strides = [1, 1, 1]} : vector<2x8x128xf32> to vector<2x8x32xf32>
    %221 = vector.extract_strided_slice %212 {offsets = [0, 0, 0], sizes = [2, 8, 32], strides = [1, 1, 1]} : vector<2x8x128xf32> to vector<2x8x32xf32>
    %222 = vector.extract_strided_slice %214 {offsets = [0, 0, 0], sizes = [2, 8, 32], strides = [1, 1, 1]} : vector<2x8x128xf32> to vector<2x8x32xf32>
    "tpu.trace_start"() <{level = 10 : i32, message = "bqd,bkd->bqk"}> : () -> ()
    %cst_102 = arith.constant dense<0.000000e+00> : vector<2x8x8xf32>
    %223 = tpu.matmul %220, %221, %cst_102 {dimension_numbers = #tpu.dot_dimension_numbers<[2], [2], [1], [1], [0, 0, 0, 1, 1, 1], [0], [0]>} : vector<2x8x32xf32>, vector<2x8x32xf32>, vector<2x8x8xf32> -> vector<2x8x8xf32>
    "tpu.trace_stop"() : () -> ()
    %224 = vector.broadcast %13 : vector<2x1x8xf32> to vector<2x8x8xf32>
    %225 = arith.addf %223, %224 : vector<2x8x8xf32>
    %cst_103 = arith.constant dense<0xFF800000> : vector<2x8xf32>
    %226 = vector.multi_reduction <maximumf>, %225, %cst_103 [2] : vector<2x8x8xf32> to vector<2x8xf32>
    %227 = vector.shape_cast %226 : vector<2x8xf32> to vector<2x8x1xf32>
    %228 = vector.broadcast %227 : vector<2x8x1xf32> to vector<2x8x8xf32>
    %229 = arith.subf %225, %228 : vector<2x8x8xf32>
    %230 = math.exp %229 : vector<2x8x8xf32>
    %cst_104 = arith.constant dense<0.000000e+00> : vector<2x8xf32>
    %231 = vector.multi_reduction <add>, %230, %cst_104 [2] : vector<2x8x8xf32> to vector<2x8xf32>
    %232 = vector.shape_cast %231 : vector<2x8xf32> to vector<2x8x1xf32>
    %233 = vector.broadcast %232 : vector<2x8x1xf32> to vector<2x8x8xf32>
    %234 = arith.divf %230, %233 : vector<2x8x8xf32>
    "tpu.trace_start"() <{level = 10 : i32, message = "bqk,bkd->bqd"}> : () -> ()
    %cst_105 = arith.constant dense<0.000000e+00> : vector<2x8x32xf32>
    %235 = tpu.matmul %234, %222, %cst_105 {dimension_numbers = #tpu.dot_dimension_numbers<[2], [1], [1], [2], [0, 0, 0, 1, 1, 2], [0], [0]>} : vector<2x8x8xf32>, vector<2x8x32xf32>, vector<2x8x32xf32> -> vector<2x8x32xf32>
    "tpu.trace_stop"() : () -> ()
    %236 = vector.shape_cast %235 : vector<2x8x32xf32> to vector<16x32xf32>
    %c1_106 = arith.constant 1 : index
    %c0_107 = arith.constant 0 : index
    %c0_108 = arith.constant 0 : index
    %237 = vector.load %arg7[%c1_106, %c0_107, %c0_108] : memref<2x128x128xf32, #tpu.memory_space<vmem>>, vector<1x128x128xf32>
    %238 = vector.shape_cast %237 : vector<1x128x128xf32> to vector<128x128xf32>
    %239 = vector.extract_strided_slice %238 {offsets = [0, 0], sizes = [32, 128], strides = [1, 1]} : vector<128x128xf32> to vector<32x128xf32>
    %cst_109 = arith.constant dense<0.000000e+00> : vector<16x128xf32>
    %240 = tpu.matmul %236, %239, %cst_109 {dimension_numbers = #tpu.dot_dimension_numbers<[1], [0], [0], [1], [0, 0, 1, 1], [], []>} : vector<16x32xf32>, vector<32x128xf32>, vector<16x128xf32> -> vector<16x128xf32>
    %241 = arith.addf %219, %240 : vector<16x128xf32>
    %242 = vector.extract_strided_slice %210 {offsets = [0, 0, 32], sizes = [2, 8, 32], strides = [1, 1, 1]} : vector<2x8x128xf32> to vector<2x8x32xf32>
    %243 = vector.extract_strided_slice %212 {offsets = [0, 0, 32], sizes = [2, 8, 32], strides = [1, 1, 1]} : vector<2x8x128xf32> to vector<2x8x32xf32>
    %244 = vector.extract_strided_slice %214 {offsets = [0, 0, 32], sizes = [2, 8, 32], strides = [1, 1, 1]} : vector<2x8x128xf32> to vector<2x8x32xf32>
    "tpu.trace_start"() <{level = 10 : i32, message = "bqd,bkd->bqk"}> : () -> ()
    %cst_110 = arith.constant dense<0.000000e+00> : vector<2x8x8xf32>
    %245 = tpu.matmul %242, %243, %cst_110 {dimension_numbers = #tpu.dot_dimension_numbers<[2], [2], [1], [1], [0, 0, 0, 1, 1, 1], [0], [0]>} : vector<2x8x32xf32>, vector<2x8x32xf32>, vector<2x8x8xf32> -> vector<2x8x8xf32>
    "tpu.trace_stop"() : () -> ()
    %246 = vector.broadcast %13 : vector<2x1x8xf32> to vector<2x8x8xf32>
    %247 = arith.addf %245, %246 : vector<2x8x8xf32>
    %cst_111 = arith.constant dense<0xFF800000> : vector<2x8xf32>
    %248 = vector.multi_reduction <maximumf>, %247, %cst_111 [2] : vector<2x8x8xf32> to vector<2x8xf32>
    %249 = vector.shape_cast %248 : vector<2x8xf32> to vector<2x8x1xf32>
    %250 = vector.broadcast %249 : vector<2x8x1xf32> to vector<2x8x8xf32>
    %251 = arith.subf %247, %250 : vector<2x8x8xf32>
    %252 = math.exp %251 : vector<2x8x8xf32>
    %cst_112 = arith.constant dense<0.000000e+00> : vector<2x8xf32>
    %253 = vector.multi_reduction <add>, %252, %cst_112 [2] : vector<2x8x8xf32> to vector<2x8xf32>
    %254 = vector.shape_cast %253 : vector<2x8xf32> to vector<2x8x1xf32>
    %255 = vector.broadcast %254 : vector<2x8x1xf32> to vector<2x8x8xf32>
    %256 = arith.divf %252, %255 : vector<2x8x8xf32>
    "tpu.trace_start"() <{level = 10 : i32, message = "bqk,bkd->bqd"}> : () -> ()
    %cst_113 = arith.constant dense<0.000000e+00> : vector<2x8x32xf32>
    %257 = tpu.matmul %256, %244, %cst_113 {dimension_numbers = #tpu.dot_dimension_numbers<[2], [1], [1], [2], [0, 0, 0, 1, 1, 2], [0], [0]>} : vector<2x8x8xf32>, vector<2x8x32xf32>, vector<2x8x32xf32> -> vector<2x8x32xf32>
    "tpu.trace_stop"() : () -> ()
    %258 = vector.shape_cast %257 : vector<2x8x32xf32> to vector<16x32xf32>
    %c1_114 = arith.constant 1 : index
    %c0_115 = arith.constant 0 : index
    %c0_116 = arith.constant 0 : index
    %259 = vector.load %arg7[%c1_114, %c0_115, %c0_116] : memref<2x128x128xf32, #tpu.memory_space<vmem>>, vector<1x128x128xf32>
    %260 = vector.shape_cast %259 : vector<1x128x128xf32> to vector<128x128xf32>
    %261 = vector.extract_strided_slice %260 {offsets = [32, 0], sizes = [32, 128], strides = [1, 1]} : vector<128x128xf32> to vector<32x128xf32>
    %cst_117 = arith.constant dense<0.000000e+00> : vector<16x128xf32>
    %262 = tpu.matmul %258, %261, %cst_117 {dimension_numbers = #tpu.dot_dimension_numbers<[1], [0], [0], [1], [0, 0, 1, 1], [], []>} : vector<16x32xf32>, vector<32x128xf32>, vector<16x128xf32> -> vector<16x128xf32>
    %263 = arith.addf %241, %262 : vector<16x128xf32>
    %264 = vector.extract_strided_slice %210 {offsets = [0, 0, 64], sizes = [2, 8, 32], strides = [1, 1, 1]} : vector<2x8x128xf32> to vector<2x8x32xf32>
    %265 = vector.extract_strided_slice %212 {offsets = [0, 0, 64], sizes = [2, 8, 32], strides = [1, 1, 1]} : vector<2x8x128xf32> to vector<2x8x32xf32>
    %266 = vector.extract_strided_slice %214 {offsets = [0, 0, 64], sizes = [2, 8, 32], strides = [1, 1, 1]} : vector<2x8x128xf32> to vector<2x8x32xf32>
    "tpu.trace_start"() <{level = 10 : i32, message = "bqd,bkd->bqk"}> : () -> ()
    %cst_118 = arith.constant dense<0.000000e+00> : vector<2x8x8xf32>
    %267 = tpu.matmul %264, %265, %cst_118 {dimension_numbers = #tpu.dot_dimension_numbers<[2], [2], [1], [1], [0, 0, 0, 1, 1, 1], [0], [0]>} : vector<2x8x32xf32>, vector<2x8x32xf32>, vector<2x8x8xf32> -> vector<2x8x8xf32>
    "tpu.trace_stop"() : () -> ()
    %268 = vector.broadcast %13 : vector<2x1x8xf32> to vector<2x8x8xf32>
    %269 = arith.addf %267, %268 : vector<2x8x8xf32>
    %cst_119 = arith.constant dense<0xFF800000> : vector<2x8xf32>
    %270 = vector.multi_reduction <maximumf>, %269, %cst_119 [2] : vector<2x8x8xf32> to vector<2x8xf32>
    %271 = vector.shape_cast %270 : vector<2x8xf32> to vector<2x8x1xf32>
    %272 = vector.broadcast %271 : vector<2x8x1xf32> to vector<2x8x8xf32>
    %273 = arith.subf %269, %272 : vector<2x8x8xf32>
    %274 = math.exp %273 : vector<2x8x8xf32>
    %cst_120 = arith.constant dense<0.000000e+00> : vector<2x8xf32>
    %275 = vector.multi_reduction <add>, %274, %cst_120 [2] : vector<2x8x8xf32> to vector<2x8xf32>
    %276 = vector.shape_cast %275 : vector<2x8xf32> to vector<2x8x1xf32>
    %277 = vector.broadcast %276 : vector<2x8x1xf32> to vector<2x8x8xf32>
    %278 = arith.divf %274, %277 : vector<2x8x8xf32>
    "tpu.trace_start"() <{level = 10 : i32, message = "bqk,bkd->bqd"}> : () -> ()
    %cst_121 = arith.constant dense<0.000000e+00> : vector<2x8x32xf32>
    %279 = tpu.matmul %278, %266, %cst_121 {dimension_numbers = #tpu.dot_dimension_numbers<[2], [1], [1], [2], [0, 0, 0, 1, 1, 2], [0], [0]>} : vector<2x8x8xf32>, vector<2x8x32xf32>, vector<2x8x32xf32> -> vector<2x8x32xf32>
    "tpu.trace_stop"() : () -> ()
    %280 = vector.shape_cast %279 : vector<2x8x32xf32> to vector<16x32xf32>
    %c1_122 = arith.constant 1 : index
    %c0_123 = arith.constant 0 : index
    %c0_124 = arith.constant 0 : index
    %281 = vector.load %arg7[%c1_122, %c0_123, %c0_124] : memref<2x128x128xf32, #tpu.memory_space<vmem>>, vector<1x128x128xf32>
    %282 = vector.shape_cast %281 : vector<1x128x128xf32> to vector<128x128xf32>
    %283 = vector.extract_strided_slice %282 {offsets = [64, 0], sizes = [32, 128], strides = [1, 1]} : vector<128x128xf32> to vector<32x128xf32>
    %cst_125 = arith.constant dense<0.000000e+00> : vector<16x128xf32>
    %284 = tpu.matmul %280, %283, %cst_125 {dimension_numbers = #tpu.dot_dimension_numbers<[1], [0], [0], [1], [0, 0, 1, 1], [], []>} : vector<16x32xf32>, vector<32x128xf32>, vector<16x128xf32> -> vector<16x128xf32>
    %285 = arith.addf %263, %284 : vector<16x128xf32>
    %286 = vector.extract_strided_slice %210 {offsets = [0, 0, 96], sizes = [2, 8, 32], strides = [1, 1, 1]} : vector<2x8x128xf32> to vector<2x8x32xf32>
    %287 = vector.extract_strided_slice %212 {offsets = [0, 0, 96], sizes = [2, 8, 32], strides = [1, 1, 1]} : vector<2x8x128xf32> to vector<2x8x32xf32>
    %288 = vector.extract_strided_slice %214 {offsets = [0, 0, 96], sizes = [2, 8, 32], strides = [1, 1, 1]} : vector<2x8x128xf32> to vector<2x8x32xf32>
    "tpu.trace_start"() <{level = 10 : i32, message = "bqd,bkd->bqk"}> : () -> ()
    %cst_126 = arith.constant dense<0.000000e+00> : vector<2x8x8xf32>
    %289 = tpu.matmul %286, %287, %cst_126 {dimension_numbers = #tpu.dot_dimension_numbers<[2], [2], [1], [1], [0, 0, 0, 1, 1, 1], [0], [0]>} : vector<2x8x32xf32>, vector<2x8x32xf32>, vector<2x8x8xf32> -> vector<2x8x8xf32>
    "tpu.trace_stop"() : () -> ()
    %290 = vector.broadcast %13 : vector<2x1x8xf32> to vector<2x8x8xf32>
    %291 = arith.addf %289, %290 : vector<2x8x8xf32>
    %cst_127 = arith.constant dense<0xFF800000> : vector<2x8xf32>
    %292 = vector.multi_reduction <maximumf>, %291, %cst_127 [2] : vector<2x8x8xf32> to vector<2x8xf32>
    %293 = vector.shape_cast %292 : vector<2x8xf32> to vector<2x8x1xf32>
    %294 = vector.broadcast %293 : vector<2x8x1xf32> to vector<2x8x8xf32>
    %295 = arith.subf %291, %294 : vector<2x8x8xf32>
    %296 = math.exp %295 : vector<2x8x8xf32>
    %cst_128 = arith.constant dense<0.000000e+00> : vector<2x8xf32>
    %297 = vector.multi_reduction <add>, %296, %cst_128 [2] : vector<2x8x8xf32> to vector<2x8xf32>
    %298 = vector.shape_cast %297 : vector<2x8xf32> to vector<2x8x1xf32>
    %299 = vector.broadcast %298 : vector<2x8x1xf32> to vector<2x8x8xf32>
    %300 = arith.divf %296, %299 : vector<2x8x8xf32>
    "tpu.trace_start"() <{level = 10 : i32, message = "bqk,bkd->bqd"}> : () -> ()
    %cst_129 = arith.constant dense<0.000000e+00> : vector<2x8x32xf32>
    %301 = tpu.matmul %300, %288, %cst_129 {dimension_numbers = #tpu.dot_dimension_numbers<[2], [1], [1], [2], [0, 0, 0, 1, 1, 2], [0], [0]>} : vector<2x8x8xf32>, vector<2x8x32xf32>, vector<2x8x32xf32> -> vector<2x8x32xf32>
    "tpu.trace_stop"() : () -> ()
    %302 = vector.shape_cast %301 : vector<2x8x32xf32> to vector<16x32xf32>
    %c1_130 = arith.constant 1 : index
    %c0_131 = arith.constant 0 : index
    %c0_132 = arith.constant 0 : index
    %303 = vector.load %arg7[%c1_130, %c0_131, %c0_132] : memref<2x128x128xf32, #tpu.memory_space<vmem>>, vector<1x128x128xf32>
    %304 = vector.shape_cast %303 : vector<1x128x128xf32> to vector<128x128xf32>
    %305 = vector.extract_strided_slice %304 {offsets = [96, 0], sizes = [32, 128], strides = [1, 1]} : vector<128x128xf32> to vector<32x128xf32>
    %cst_133 = arith.constant dense<0.000000e+00> : vector<16x128xf32>
    %306 = tpu.matmul %302, %305, %cst_133 {dimension_numbers = #tpu.dot_dimension_numbers<[1], [0], [0], [1], [0, 0, 1, 1], [], []>} : vector<16x32xf32>, vector<32x128xf32>, vector<16x128xf32> -> vector<16x128xf32>
    %307 = arith.addf %285, %306 : vector<16x128xf32>
    %308 = arith.addf %307, %175 : vector<16x128xf32>
    %c1_134 = arith.constant 1 : index
    %c0_135 = arith.constant 0 : index
    %c0_136 = arith.constant 0 : index
    %309 = vector.load %arg9[%c1_134, %c0_135, %c0_136] : memref<2x1x128xf32, #tpu.memory_space<vmem>>, vector<1x1x128xf32>
    %310 = vector.shape_cast %309 : vector<1x1x128xf32> to vector<1x128xf32>
    %c1_137 = arith.constant 1 : index
    %c0_138 = arith.constant 0 : index
    %c0_139 = arith.constant 0 : index
    %311 = vector.load %arg10[%c1_137, %c0_138, %c0_139] : memref<2x1x128xf32, #tpu.memory_space<vmem>>, vector<1x1x128xf32>
    %312 = vector.shape_cast %311 : vector<1x1x128xf32> to vector<1x128xf32>
    %cst_140 = arith.constant dense<0.000000e+00> : vector<16xf32>
    %313 = vector.multi_reduction <add>, %308, %cst_140 [1] : vector<16x128xf32> to vector<16xf32>
    %314 = vector.shape_cast %313 : vector<16xf32> to vector<16x1xf32>
    %cst_141 = arith.constant 1.280000e+02 : f32
    %315 = vector.broadcast %cst_141 : f32 to vector<16x1xf32>
    %316 = arith.divf %314, %315 : vector<16x1xf32>
    %317 = vector.broadcast %316 : vector<16x1xf32> to vector<16x128xf32>
    %318 = arith.subf %308, %317 : vector<16x128xf32>
    %319 = arith.mulf %318, %318 : vector<16x128xf32>
    %cst_142 = arith.constant dense<0.000000e+00> : vector<16xf32>
    %320 = vector.multi_reduction <add>, %319, %cst_142 [1] : vector<16x128xf32> to vector<16xf32>
    %321 = vector.shape_cast %320 : vector<16xf32> to vector<16x1xf32>
    %cst_143 = arith.constant 1.280000e+02 : f32
    %322 = vector.broadcast %cst_143 : f32 to vector<16x1xf32>
    %323 = arith.divf %321, %322 : vector<16x1xf32>
    %cst_144 = arith.constant 9.99999997E-7 : f32
    %324 = vector.broadcast %cst_144 : f32 to vector<16x1xf32>
    %325 = arith.addf %323, %324 : vector<16x1xf32>
    %326 = math.rsqrt %325 : vector<16x1xf32>
    %327 = vector.broadcast %326 : vector<16x1xf32> to vector<16x128xf32>
    %328 = arith.mulf %318, %327 : vector<16x128xf32>
    %329 = vector.broadcast %310 : vector<1x128xf32> to vector<16x128xf32>
    %330 = arith.mulf %328, %329 : vector<16x128xf32>
    %331 = vector.broadcast %312 : vector<1x128xf32> to vector<16x128xf32>
    %332 = arith.addf %330, %331 : vector<16x128xf32>
    %c1_145 = arith.constant 1 : index
    %c0_146 = arith.constant 0 : index
    %c0_147 = arith.constant 0 : index
    %333 = vector.load %arg11[%c1_145, %c0_146, %c0_147] : memref<2x128x256xf32, #tpu.memory_space<vmem>>, vector<1x128x256xf32>
    %334 = vector.shape_cast %333 : vector<1x128x256xf32> to vector<128x256xf32>
    %cst_148 = arith.constant dense<0.000000e+00> : vector<16x256xf32>
    %335 = tpu.matmul %332, %334, %cst_148 {dimension_numbers = #tpu.dot_dimension_numbers<[1], [0], [0], [1], [0, 0, 1, 1], [], []>} : vector<16x128xf32>, vector<128x256xf32>, vector<16x256xf32> -> vector<16x256xf32>
    %c1_149 = arith.constant 1 : index
    %c0_150 = arith.constant 0 : index
    %c0_151 = arith.constant 0 : index
    %336 = vector.load %arg12[%c1_149, %c0_150, %c0_151] : memref<2x1x256xf32, #tpu.memory_space<vmem>>, vector<1x1x256xf32>
    %337 = vector.shape_cast %336 : vector<1x1x256xf32> to vector<1x256xf32>
    %338 = vector.broadcast %337 : vector<1x256xf32> to vector<16x256xf32>
    %339 = arith.addf %335, %338 : vector<16x256xf32>
    %cst_152 = arith.constant 5.000000e-01 : f32
    %340 = vector.broadcast %cst_152 : f32 to vector<16x256xf32>
    %341 = arith.mulf %340, %339 : vector<16x256xf32>
    %cst_153 = arith.constant 4.471500e-02 : f32
    %342 = vector.broadcast %cst_153 : f32 to vector<16x256xf32>
    %343 = arith.mulf %342, %339 : vector<16x256xf32>
    %344 = arith.mulf %343, %339 : vector<16x256xf32>
    %345 = arith.mulf %344, %339 : vector<16x256xf32>
    %346 = arith.addf %339, %345 : vector<16x256xf32>
    %cst_154 = arith.constant 0.797884583 : f32
    %347 = vector.broadcast %cst_154 : f32 to vector<16x256xf32>
    %348 = arith.mulf %347, %346 : vector<16x256xf32>
    %349 = math.tanh %348 : vector<16x256xf32>
    %cst_155 = arith.constant 1.000000e+00 : f32
    %350 = vector.broadcast %cst_155 : f32 to vector<16x256xf32>
    %351 = arith.addf %350, %349 : vector<16x256xf32>
    %352 = arith.mulf %341, %351 : vector<16x256xf32>
    %c1_156 = arith.constant 1 : index
    %c0_157 = arith.constant 0 : index
    %c0_158 = arith.constant 0 : index
    %353 = vector.load %arg13[%c1_156, %c0_157, %c0_158] : memref<2x256x128xf32, #tpu.memory_space<vmem>>, vector<1x256x128xf32>
    %354 = vector.shape_cast %353 : vector<1x256x128xf32> to vector<256x128xf32>
    %cst_159 = arith.constant dense<0.000000e+00> : vector<16x128xf32>
    %355 = tpu.matmul %352, %354, %cst_159 {dimension_numbers = #tpu.dot_dimension_numbers<[1], [0], [0], [1], [0, 0, 1, 1], [], []>} : vector<16x256xf32>, vector<256x128xf32>, vector<16x128xf32> -> vector<16x128xf32>
    %c1_160 = arith.constant 1 : index
    %c0_161 = arith.constant 0 : index
    %c0_162 = arith.constant 0 : index
    %356 = vector.load %arg14[%c1_160, %c0_161, %c0_162] : memref<2x1x128xf32, #tpu.memory_space<vmem>>, vector<1x1x128xf32>
    %357 = vector.shape_cast %356 : vector<1x1x128xf32> to vector<1x128xf32>
    %358 = vector.broadcast %357 : vector<1x128xf32> to vector<16x128xf32>
    %359 = arith.addf %355, %358 : vector<16x128xf32>
    %360 = arith.addf %359, %308 : vector<16x128xf32>
    %c0_163 = arith.constant 0 : index
    %c0_164 = arith.constant 0 : index
    %361 = vector.load %arg15[%c0_163, %c0_164] : memref<1x128xf32, #tpu.memory_space<vmem>>, vector<1x128xf32>
    %c0_165 = arith.constant 0 : index
    %c0_166 = arith.constant 0 : index
    %362 = vector.load %arg16[%c0_165, %c0_166] : memref<1x128xf32, #tpu.memory_space<vmem>>, vector<1x128xf32>
    %cst_167 = arith.constant dense<0.000000e+00> : vector<16xf32>
    %363 = vector.multi_reduction <add>, %360, %cst_167 [1] : vector<16x128xf32> to vector<16xf32>
    %364 = vector.shape_cast %363 : vector<16xf32> to vector<16x1xf32>
    %cst_168 = arith.constant 1.280000e+02 : f32
    %365 = vector.broadcast %cst_168 : f32 to vector<16x1xf32>
    %366 = arith.divf %364, %365 : vector<16x1xf32>
    %367 = vector.broadcast %366 : vector<16x1xf32> to vector<16x128xf32>
    %368 = arith.subf %360, %367 : vector<16x128xf32>
    %369 = arith.mulf %368, %368 : vector<16x128xf32>
    %cst_169 = arith.constant dense<0.000000e+00> : vector<16xf32>
    %370 = vector.multi_reduction <add>, %369, %cst_169 [1] : vector<16x128xf32> to vector<16xf32>
    %371 = vector.shape_cast %370 : vector<16xf32> to vector<16x1xf32>
    %cst_170 = arith.constant 1.280000e+02 : f32
    %372 = vector.broadcast %cst_170 : f32 to vector<16x1xf32>
    %373 = arith.divf %371, %372 : vector<16x1xf32>
    %cst_171 = arith.constant 9.99999997E-7 : f32
    %374 = vector.broadcast %cst_171 : f32 to vector<16x1xf32>
    %375 = arith.addf %373, %374 : vector<16x1xf32>
    %376 = math.rsqrt %375 : vector<16x1xf32>
    %377 = vector.broadcast %376 : vector<16x1xf32> to vector<16x128xf32>
    %378 = arith.mulf %368, %377 : vector<16x128xf32>
    %379 = vector.broadcast %361 : vector<1x128xf32> to vector<16x128xf32>
    %380 = arith.mulf %378, %379 : vector<16x128xf32>
    %381 = vector.broadcast %362 : vector<1x128xf32> to vector<16x128xf32>
    %382 = arith.addf %380, %381 : vector<16x128xf32>
    %383 = vector.shape_cast %382 : vector<16x128xf32> to vector<2x8x128xf32>
    %c0_172 = arith.constant 0 : index
    %c0_173 = arith.constant 0 : index
    %384 = vector.load %arg17[%c0_172, %c0_173] : memref<1x128xf32, #tpu.memory_space<vmem>>, vector<1x128xf32>
    %385 = vector.shape_cast %384 : vector<1x128xf32> to vector<1x1x128xf32>
    %386 = vector.broadcast %385 : vector<1x1x128xf32> to vector<2x8x128xf32>
    %387 = arith.mulf %383, %386 : vector<2x8x128xf32>
    %cst_174 = arith.constant dense<0.000000e+00> : vector<2x8xf32>
    %388 = vector.multi_reduction <add>, %387, %cst_174 [2] : vector<2x8x128xf32> to vector<2x8xf32>
    %c0_175 = arith.constant 0 : index
    %c0_176 = arith.constant 0 : index
    %389 = vector.load %arg18[%c0_175, %c0_176] : memref<1x1xf32, #tpu.memory_space<vmem>>, vector<1x1xf32>
    %390 = vector.broadcast %389 : vector<1x1xf32> to vector<2x8xf32>
    %391 = arith.addf %388, %390 : vector<2x8xf32>
    %cst_177 = arith.constant 0.000000e+00 : f32
    %392 = vector.broadcast %cst_177 : f32 to vector<2x8xf32>
    %393 = arith.subf %392, %391 : vector<2x8xf32>
    %394 = math.exp %393 : vector<2x8xf32>
    %cst_178 = arith.constant 1.000000e+00 : f32
    %395 = vector.broadcast %cst_178 : f32 to vector<2x8xf32>
    %396 = arith.addf %395, %394 : vector<2x8xf32>
    %cst_179 = arith.constant 1.000000e+00 : f32
    %397 = vector.broadcast %cst_179 : f32 to vector<2x8xf32>
    %398 = arith.divf %397, %396 : vector<2x8xf32>
    %399 = arith.mulf %398, %0 : vector<2x8xf32>
    %c0_180 = arith.constant 0 : index
    %c0_181 = arith.constant 0 : index
    %400 = vector.load %arg19[%c0_180, %c0_181] : memref<2x8xf32, #tpu.memory_space<vmem>>, vector<2x8xf32>
    tpu.vector_store %arg19[%c0_180, %c0_181], %399 {strides = array<i32>} : memref<2x8xf32, #tpu.memory_space<vmem>>, vector<2x8xf32>,
    return
  }
}

</mosaic_0001>

<llo_original>
// kernel: ext_transformer_encoder_forward.1
$region0: #{ext_transformer_encoder_forward.1}
  #allocation0 [shape = 'u32[]', space=smem, size = 0x4, offset = 0x4, fixed_abs, tag = 'smem constant byte address 0x4 - core index']
  #allocation1 [shape = 'u32[144,128]{1,0:T(1,128)}', space=vmem, size = 0x12000, scoped, tag = 'internal scratch']
  #allocation2 [shape = 'f32[1,1]{1,0:T(1,128)S(1)}', space=vmem, size = 0x200, scoped, tag = 'scoped memory for ext_transformer_encoder_forward.1']
  %s0 = inlined_call_operand.vmem [shape: f32[2,8,128], index: 0, kind: input, shape index: {}]
  %s1 = inlined_call_operand.vmem [shape: f32[2,8], index: 1, kind: input, shape index: {}]
  %s2 = inlined_call_operand.vmem [shape: f32[8,128], index: 2, kind: input, shape index: {}]
  %s3 = inlined_call_operand.vmem [shape: f32[2,1,128], index: 3, kind: input, shape index: {}]
  %s4 = inlined_call_operand.hbm [shape: f32[2,1,128], index: 4, kind: input, shape index: {}]
  %s5 = inlined_call_operand.hbm [shape: f32[2,128,384], index: 5, kind: input, shape index: {}]
  %s6 = inlined_call_operand.vmem [shape: f32[2,1,384], index: 6, kind: input, shape index: {}]
  %s7 = inlined_call_operand.hbm [shape: f32[2,128,128], index: 7, kind: input, shape index: {}]
  %s8 = inlined_call_operand.hbm [shape: f32[2,1,128], index: 8, kind: input, shape index: {}]
  %s9 = inlined_call_operand.hbm [shape: f32[2,1,128], index: 9, kind: input, shape index: {}]
  %s10 = inlined_call_operand.hbm [shape: f32[2,1,128], index: 10, kind: input, shape index: {}]
  %s11 = inlined_call_operand.hbm [shape: f32[2,128,256], index: 11, kind: input, shape index: {}]
  %s12 = inlined_call_operand.hbm [shape: f32[2,1,256], index: 12, kind: input, shape index: {}]
  %s13 = inlined_call_operand.hbm [shape: f32[2,256,128], index: 13, kind: input, shape index: {}]
  %s14 = inlined_call_operand.hbm [shape: f32[2,1,128], index: 14, kind: input, shape index: {}]
  %s15 = inlined_call_operand.vmem [shape: f32[1,128], index: 15, kind: input, shape index: {}]
  %s16 = inlined_call_operand.vmem [shape: f32[1,128], index: 16, kind: input, shape index: {}]
  %s17 = inlined_call_operand.vmem [shape: f32[1,128], index: 17, kind: input, shape index: {}]
  %s18 = inlined_call_operand.<no memory space> [shape: f32[1,1], index: 18, kind: input, shape index: {}]
  %s19 = inlined_call_operand.hbm [shape: f32[2,8], index: 19, kind: output, shape index: {}]
  %s20 = sld [smem:[#allocation0]]
  $region126: #{ext_transformer_encoder_forward.1} parent=0
    _
  %s22 = ssub.s32 1, %s20
  %s23 = scalar_select 0, %s22, %s20
  %v24 = vstv %s18
  %25 = vst [vmem:[#allocation2] sm:$0x1] %v24
  $region1: #{ext_transformer_encoder_forward.1} parent=0
    #allocation3 [shape = 'u8[1024]{0}', space=vmem, size = 0x400, scoped, tag = 'input window, operand 4, single buffered']
    #allocation4 [shape = 's32[1]{0}', space=sflag, size = 0x4, scoped, tag = 'scoped memory for ext_transformer_encoder_forward.1']
    #allocation5 [shape = 's32[1]{0}', space=sflag, size = 0x4, scoped, tag = 'scoped memory for ext_transformer_encoder_forward.1']
    #allocation6 [shape = 'u8[393216]{0}', space=vmem, size = 0x60000, scoped, tag = 'input window, operand 5, single buffered']
    #allocation7 [shape = 's32[1]{0}', space=sflag, size = 0x4, scoped, tag = 'scoped memory for ext_transformer_encoder_forward.1']
    #allocation8 [shape = 'u8[131072]{0}', space=vmem, size = 0x20000, scoped, tag = 'input window, operand 7, single buffered']
    #allocation9 [shape = 'u8[1024]{0}', space=vmem, size = 0x400, scoped, tag = 'input window, operand 8, single buffered']
    #allocation10 [shape = 's32[1]{0}', space=sflag, size = 0x4, scoped, tag = 'scoped memory for ext_transformer_encoder_forward.1']
    #allocation11 [shape = 'u8[1024]{0}', space=vmem, size = 0x400, scoped, tag = 'input window, operand 9, single buffered']
    #allocation12 [shape = 'u8[1024]{0}', space=vmem, size = 0x400, scoped, tag = 'input window, operand 10, single buffered']
    #allocation13 [shape = 's32[1]{0}', space=sflag, size = 0x4, scoped, tag = 'scoped memory for ext_transformer_encoder_forward.1']
    #allocation14 [shape = 'u8[262144]{0}', space=vmem, size = 0x40000, scoped, tag = 'input window, operand 11, single buffered']
    #allocation15 [shape = 'u8[2048]{0}', space=vmem, size = 0x800, scoped, tag = 'input window, operand 12, single buffered']
    #allocation16 [shape = 's32[1]{0}', space=sflag, size = 0x4, scoped, tag = 'scoped memory for ext_transformer_encoder_forward.1']
    #allocation17 [shape = 'u8[262144]{0}', space=vmem, size = 0x40000, scoped, tag = 'input window, operand 13, single buffered']
    #allocation18 [shape = 'u8[1024]{0}', space=vmem, size = 0x400, scoped, tag = 'input window, operand 14, single buffered']
    #allocation19 [shape = 's32[1]{0}', space=sflag, size = 0x4, scoped, tag = 'scoped memory for ext_transformer_encoder_forward.1']
    #allocation20 [shape = 'u8[1024]{0}', space=vmem, size = 0x400, scoped, tag = 'output window, operand 0, single buffered']
    %26 = vsyncpa [#allocation4], 0
    %27 = vsyncpa [#allocation7], 0
    %28 = vsyncpa [#allocation10], 0
    %29 = vsyncpa [#allocation13], 0
    %30 = vsyncpa [#allocation16], 0
    %31 = vsyncpa [#allocation19], 0
    %32 = vsyncpa [#allocation5], 0
    // Predicated region
    $region2: #{ext_transformer_encoder_forward.1} parent=1 // pred_check
      _
    $region3: #{ext_transformer_encoder_forward.1} parent=1 // pred_check_branch
      %34 = sbr.rel (0) target = $region5
    $region4: #{ext_transformer_encoder_forward.1} parent=1 // pred_region
      _
    $region5: #{ext_transformer_encoder_forward.1} parent=1 // pred_fallthru
      _
    // Predicated region
    $region6: #{ext_transformer_encoder_forward.1} parent=1 // pred_check
      _
    $region7: #{ext_transformer_encoder_forward.1} parent=1 // pred_check_branch
      %36 = sbr.rel (0) target = $region9
    $region8: #{ext_transformer_encoder_forward.1} parent=1 // pred_region
      _
    $region9: #{ext_transformer_encoder_forward.1} parent=1 // pred_fallthru
      _
    // Predicated region
    $region10: #{ext_transformer_encoder_forward.1} parent=1 // pred_check
      _
    $region11: #{ext_transformer_encoder_forward.1} parent=1 // pred_check_branch
      %38 = sbr.rel (0) target = $region13
    $region12: #{ext_transformer_encoder_forward.1} parent=1 // pred_region
      _
    $region13: #{ext_transformer_encoder_forward.1} parent=1 // pred_fallthru
      _
    // Predicated region
    $region14: #{ext_transformer_encoder_forward.1} parent=1 // pred_check
      _
    $region15: #{ext_transformer_encoder_forward.1} parent=1 // pred_check_branch
      %40 = sbr.rel (0) target = $region17
    $region16: #{ext_transformer_encoder_forward.1} parent=1 // pred_region
      _
    $region17: #{ext_transformer_encoder_forward.1} parent=1 // pred_fallthru
      _
    // Predicated region
    $region18: #{ext_transformer_encoder_forward.1} parent=1 // pred_check
      _
    $region19: #{ext_transformer_encoder_forward.1} parent=1 // pred_check_branch
      %42 = sbr.rel (0) target = $region21
    $region20: #{ext_transformer_encoder_forward.1} parent=1 // pred_region
      %s44 = ssub.s32 32, 32
      %45 = vsyncadd [#allocation4], %s44
      %s46 = sshll.u32 [#allocation3], 4
      %s47 = int_to_ptr.vmem [resolvable:$true] %s46
      %52 = dma.hbm_to_vmem [thread:$0]  %s4, 32, %s47, [#allocation4], 16, 16, 1
    $region21: #{ext_transformer_encoder_forward.1} parent=1 // pred_fallthru
      _
    // Predicated region
    $region22: #{ext_transformer_encoder_forward.1} parent=1 // pred_check
      _
    $region23: #{ext_transformer_encoder_forward.1} parent=1 // pred_check_branch
      %54 = sbr.rel (0) target = $region25
    $region24: #{ext_transformer_encoder_forward.1} parent=1 // pred_region
      %s56 = ssub.s32 12288, 12288
      %57 = vsyncadd [#allocation7], %s56
      %s58 = sshll.u32 [#allocation6], 4
      %s59 = int_to_ptr.vmem [resolvable:$true] %s58
      %64 = dma.hbm_to_vmem [thread:$0]  %s5, 12288, %s59, [#allocation7], 384, 384, 24
    $region25: #{ext_transformer_encoder_forward.1} parent=1 // pred_fallthru
      _
    // Predicated region
    $region26: #{ext_transformer_encoder_forward.1} parent=1 // pred_check
      _
    $region27: #{ext_transformer_encoder_forward.1} parent=1 // pred_check_branch
      %66 = sbr.rel (0) target = $region29
    $region28: #{ext_transformer_encoder_forward.1} parent=1 // pred_region
      _
    $region29: #{ext_transformer_encoder_forward.1} parent=1 // pred_fallthru
      _
    // Predicated region
    $region30: #{ext_transformer_encoder_forward.1} parent=1 // pred_check
      _
    $region31: #{ext_transformer_encoder_forward.1} parent=1 // pred_check_branch
      %68 = sbr.rel (0) target = $region33
    $region32: #{ext_transformer_encoder_forward.1} parent=1 // pred_region
      %s70 = ssub.s32 4096, 4096
      %71 = vsyncadd [#allocation7], %s70
      %s72 = sshll.u32 [#allocation8], 4
      %s73 = int_to_ptr.vmem [resolvable:$true] %s72
      %78 = dma.hbm_to_vmem [thread:$0]  %s7, 4096, %s73, [#allocation7], 128, 128, 8
    $region33: #{ext_transformer_encoder_forward.1} parent=1 // pred_fallthru
      _
    // Predicated region
    $region34: #{ext_transformer_encoder_forward.1} parent=1 // pred_check
      _
    $region35: #{ext_transformer_encoder_forward.1} parent=1 // pred_check_branch
      %80 = sbr.rel (0) target = $region37
    $region36: #{ext_transformer_encoder_forward.1} parent=1 // pred_region
      %s82 = ssub.s32 32, 32
      %83 = vsyncadd [#allocation10], %s82
      %s84 = sshll.u32 [#allocation9], 4
      %s85 = int_to_ptr.vmem [resolvable:$true] %s84
      %90 = dma.hbm_to_vmem [thread:$0]  %s8, 32, %s85, [#allocation10], 16, 16, 1
    $region37: #{ext_transformer_encoder_forward.1} parent=1 // pred_fallthru
      _
    // Predicated region
    $region38: #{ext_transformer_encoder_forward.1} parent=1 // pred_check
      _
    $region39: #{ext_transformer_encoder_forward.1} parent=1 // pred_check_branch
      %92 = sbr.rel (0) target = $region41
    $region40: #{ext_transformer_encoder_forward.1} parent=1 // pred_region
      %s94 = ssub.s32 32, 32
      %95 = vsyncadd [#allocation10], %s94
      %s96 = sshll.u32 [#allocation11], 4
      %s97 = int_to_ptr.vmem [resolvable:$true] %s96
      %102 = dma.hbm_to_vmem [thread:$0]  %s9, 32, %s97, [#allocation10], 16, 16, 1
    $region41: #{ext_transformer_encoder_forward.1} parent=1 // pred_fallthru
      _
    // Predicated region
    $region42: #{ext_transformer_encoder_forward.1} parent=1 // pred_check
      _
    $region43: #{ext_transformer_encoder_forward.1} parent=1 // pred_check_branch
      %104 = sbr.rel (0) target = $region45
    $region44: #{ext_transformer_encoder_forward.1} parent=1 // pred_region
      %s106 = ssub.s32 32, 32
      %107 = vsyncadd [#allocation13], %s106
      %s108 = sshll.u32 [#allocation12], 4
      %s109 = int_to_ptr.vmem [resolvable:$true] %s108
      %114 = dma.hbm_to_vmem [thread:$0]  %s10, 32, %s109, [#allocation13], 16, 16, 1
    $region45: #{ext_transformer_encoder_forward.1} parent=1 // pred_fallthru
      _
    // Predicated region
    $region46: #{ext_transformer_encoder_forward.1} parent=1 // pred_check
      _
    $region47: #{ext_transformer_encoder_forward.1} parent=1 // pred_check_branch
      %116 = sbr.rel (0) target = $region49
    $region48: #{ext_transformer_encoder_forward.1} parent=1 // pred_region
      %s118 = ssub.s32 8192, 8192
      %119 = vsyncadd [#allocation13], %s118
      %s120 = sshll.u32 [#allocation14], 4
      %s121 = int_to_ptr.vmem [resolvable:$true] %s120
      %126 = dma.hbm_to_vmem [thread:$0]  %s11, 8192, %s121, [#allocation13], 256, 256, 16
    $region49: #{ext_transformer_encoder_forward.1} parent=1 // pred_fallthru
      _
    // Predicated region
    $region50: #{ext_transformer_encoder_forward.1} parent=1 // pred_check
      _
    $region51: #{ext_transformer_encoder_forward.1} parent=1 // pred_check_branch
      %128 = sbr.rel (0) target = $region53
    $region52: #{ext_transformer_encoder_forward.1} parent=1 // pred_region
      %s130 = ssub.s32 64, 64
      %131 = vsyncadd [#allocation16], %s130
      %s132 = sshll.u32 [#allocation15], 4
      %s133 = int_to_ptr.vmem [resolvable:$true] %s132
      %138 = dma.hbm_to_vmem [thread:$0]  %s12, 64, %s133, [#allocation16], 32, 32, 2
    $region53: #{ext_transformer_encoder_forward.1} parent=1 // pred_fallthru
      _
    // Predicated region
    $region54: #{ext_transformer_encoder_forward.1} parent=1 // pred_check
      _
    $region55: #{ext_transformer_encoder_forward.1} parent=1 // pred_check_branch
      %140 = sbr.rel (0) target = $region57
    $region56: #{ext_transformer_encoder_forward.1} parent=1 // pred_region
      %s142 = ssub.s32 8192, 8192
      %143 = vsyncadd [#allocation16], %s142
      %s144 = sshll.u32 [#allocation17], 4
      %s145 = int_to_ptr.vmem [resolvable:$true] %s144
      %150 = dma.hbm_to_vmem [thread:$0]  %s13, 8192, %s145, [#allocation16], 128, 128, 8
    $region57: #{ext_transformer_encoder_forward.1} parent=1 // pred_fallthru
      _
    // Predicated region
    $region58: #{ext_transformer_encoder_forward.1} parent=1 // pred_check
      _
    $region59: #{ext_transformer_encoder_forward.1} parent=1 // pred_check_branch
      %152 = sbr.rel (0) target = $region61
    $region60: #{ext_transformer_encoder_forward.1} parent=1 // pred_region
      %s154 = ssub.s32 32, 32
      %155 = vsyncadd [#allocation19], %s154
      %s156 = sshll.u32 [#allocation18], 4
      %s157 = int_to_ptr.vmem [resolvable:$true] %s156
      %162 = dma.hbm_to_vmem [thread:$0]  %s14, 32, %s157, [#allocation19], 16, 16, 1
    $region61: #{ext_transformer_encoder_forward.1} parent=1 // pred_fallthru
      _
    // Predicated region
    $region62: #{ext_transformer_encoder_forward.1} parent=1 // pred_check
      _
    $region63: #{ext_transformer_encoder_forward.1} parent=1 // pred_check_branch
      %164 = sbr.rel (0) target = $region65
    $region64: #{ext_transformer_encoder_forward.1} parent=1 // pred_region
      _
    $region65: #{ext_transformer_encoder_forward.1} parent=1 // pred_fallthru
      _
    // Predicated region
    $region66: #{ext_transformer_encoder_forward.1} parent=1 // pred_check
      _
    $region67: #{ext_transformer_encoder_forward.1} parent=1 // pred_check_branch
      %166 = sbr.rel (0) target = $region69
    $region68: #{ext_transformer_encoder_forward.1} parent=1 // pred_region
      _
    $region69: #{ext_transformer_encoder_forward.1} parent=1 // pred_fallthru
      _
    // Predicated region
    $region70: #{ext_transformer_encoder_forward.1} parent=1 // pred_check
      _
    $region71: #{ext_transformer_encoder_forward.1} parent=1 // pred_check_branch
      %168 = sbr.rel (0) target = $region73
    $region72: #{ext_transformer_encoder_forward.1} parent=1 // pred_region
      _
    $region73: #{ext_transformer_encoder_forward.1} parent=1 // pred_fallthru
      _
    // Predicated region
    $region74: #{ext_transformer_encoder_forward.1} parent=1 // pred_check
      _
    $region75: #{ext_transformer_encoder_forward.1} parent=1 // pred_check_branch
      %170 = sbr.rel (0) target = $region77
    $region76: #{ext_transformer_encoder_forward.1} parent=1 // pred_region
      _
    $region77: #{ext_transformer_encoder_forward.1} parent=1 // pred_fallthru
      _
    // Predicated region
    $region78: #{ext_transformer_encoder_forward.1} parent=1 // pred_check
      _
    $region79: #{ext_transformer_encoder_forward.1} parent=1 // pred_check_branch
      %172 = sbr.rel (0) target = $region81
    $region80: #{ext_transformer_encoder_forward.1} parent=1 // pred_region
      %173 = dma.done [#allocation4], 32
    $region81: #{ext_transformer_encoder_forward.1} parent=1 // pred_fallthru
      _
    // Predicated region
    $region82: #{ext_transformer_encoder_forward.1} parent=1 // pred_check
      _
    $region83: #{ext_transformer_encoder_forward.1} parent=1 // pred_check_branch
      %175 = sbr.rel (0) target = $region85
    $region84: #{ext_transformer_encoder_forward.1} parent=1 // pred_region
      %176 = dma.done [#allocation7], 12288
    $region85: #{ext_transformer_encoder_forward.1} parent=1 // pred_fallthru
      _
    // Predicated region
    $region86: #{ext_transformer_encoder_forward.1} parent=1 // pred_check
      _
    $region87: #{ext_transformer_encoder_forward.1} parent=1 // pred_check_branch
      %178 = sbr.rel (0) target = $region89
    $region88: #{ext_transformer_encoder_forward.1} parent=1 // pred_region
      %179 = dma.done [#allocation7], 4096
    $region89: #{ext_transformer_encoder_forward.1} parent=1 // pred_fallthru
      _
    // Predicated region
    $region90: #{ext_transformer_encoder_forward.1} parent=1 // pred_check
      _
    $region91: #{ext_transformer_encoder_forward.1} parent=1 // pred_check_branch
      %181 = sbr.rel (0) target = $region93
    $region92: #{ext_transformer_encoder_forward.1} parent=1 // pred_region
      %182 = dma.done [#allocation10], 32
    $region93: #{ext_transformer_encoder_forward.1} parent=1 // pred_fallthru
      _
    // Predicated region
    $region94: #{ext_transformer_encoder_forward.1} parent=1 // pred_check
      _
    $region95: #{ext_transformer_encoder_forward.1} parent=1 // pred_check_branch
      %184 = sbr.rel (0) target = $region97
    $region96: #{ext_transformer_encoder_forward.1} parent=1 // pred_region
      %185 = dma.done [#allocation10], 32
    $region97: #{ext_transformer_encoder_forward.1} parent=1 // pred_fallthru
      _
    // Predicated region
    $region98: #{ext_transformer_encoder_forward.1} parent=1 // pred_check
      _
    $region99: #{ext_transformer_encoder_forward.1} parent=1 // pred_check_branch
      %187 = sbr.rel (0) target = $region101
    $region100: #{ext_transformer_encoder_forward.1} parent=1 // pred_region
      %188 = dma.done [#allocation13], 32
    $region101: #{ext_transformer_encoder_forward.1} parent=1 // pred_fallthru
      _
    // Predicated region
    $region102: #{ext_transformer_encoder_forward.1} parent=1 // pred_check
      _
    $region103: #{ext_transformer_encoder_forward.1} parent=1 // pred_check_branch
      %190 = sbr.rel (0) target = $region105
    $region104: #{ext_transformer_encoder_forward.1} parent=1 // pred_region
      %191 = dma.done [#allocation13], 8192
    $region105: #{ext_transformer_encoder_forward.1} parent=1 // pred_fallthru
      _
    // Predicated region
    $region106: #{ext_transformer_encoder_forward.1} parent=1 // pred_check
      _
    $region107: #{ext_transformer_encoder_forward.1} parent=1 // pred_check_branch
      %193 = sbr.rel (0) target = $region109
    $region108: #{ext_transformer_encoder_forward.1} parent=1 // pred_region
      %194 = dma.done [#allocation16], 64
    $region109: #{ext_transformer_encoder_forward.1} parent=1 // pred_fallthru
      _
    // Predicated region
    $region110: #{ext_transformer_encoder_forward.1} parent=1 // pred_check
      _
    $region111: #{ext_transformer_encoder_forward.1} parent=1 // pred_check_branch
      %196 = sbr.rel (0) target = $region113
    $region112: #{ext_transformer_encoder_forward.1} parent=1 // pred_region
      %197 = dma.done [#allocation16], 8192
    $region113: #{ext_transformer_encoder_forward.1} parent=1 // pred_fallthru
      _
    // Predicated region
    $region114: #{ext_transformer_encoder_forward.1} parent=1 // pred_check
      _
    $region115: #{ext_transformer_encoder_forward.1} parent=1 // pred_check_branch
      %199 = sbr.rel (0) target = $region117
    $region116: #{ext_transformer_encoder_forward.1} parent=1 // pred_region
      %200 = dma.done [#allocation19], 32
    $region117: #{ext_transformer_encoder_forward.1} parent=1 // pred_fallthru
      _
    %v201 = vld [vmem:[%s1] sm:$0x3]
    %v202 = vld [vmem:[%s0] sm:$0xff]
    %v203 = vld [vmem:[%s0 + $0x8] sm:$0xff]
    %v204 = vlaneseq
    %v205 = vshrl.u32 %v204, 7
    %v206 = vsub.s32 0, %v205
    %v207 = vrot.slane %v201, %v206
    %209 = vbcast.lane.b32.xlu0 %v207, 256
    %v210 = vpop.permute.xlu0 %209
    %v211 = vlaneseq
    %v212 = vshrl.u32 %v211, 7
    %v213 = vsub.s32 1, %v212
    %v214 = vrot.slane %v201, %v213
    %216 = vbcast.lane.b32.xlu0 %v214, 256
    %v217 = vpop.permute.xlu0 %216
    %v218 = vmul.f32 %v202, %v210
    %v219 = vmul.f32 %v203, %v217
    %v220 = vld [vmem:[%s2] sm:$0xff]
    %v221 = vadd.f32 %v218, %v220
    %v222 = vadd.f32 %v219, %v220
    %v223 = vsub.f32 %v201, 1.0
    %v224 = vmul.f32 %v223, 1e+18
    %v227 = vunpack.c.l.s4 1966171168
    %v228 = vunpack.c.0.s8 %v227
    %v229 = vlaneseq
    %v230 = vshrl.u32 %v229, 7
    %v231 = vsub.s32 %v228, %v230
    %v232 = vrot.slane %v224, %v231
    %v233 = vcombine.high %v232, %v232
    %v235 = vunpack.c.l.s4 1966171168
    %v236 = vunpack.c.0.s8 %v235
    %v237 = vlaneseq
    %v238 = vshrl.u32 %v237, 7
    %v239 = vsub.s32 %v236, %v238
    %v240 = vrot.slane %v232, %v239
    %v242 = vunpack.c.l.s4 1966171168
    %v243 = vunpack.c.0.s8 %v242
    %v244 = vlaneseq
    %v245 = vshrl.u32 %v244, 7
    %v246 = vsub.s32 %v243, %v245
    %v247 = vrot.slane %v233, %v246
    %v248 = vld [vmem:[#allocation6] sm:$0xff]
    %v249 = vld [vmem:[#allocation6 + $0x8] sm:$0xff]
    %v250 = vld [vmem:[#allocation6 + $0x10] sm:$0xff]
    %v251 = vld [vmem:[#allocation6 + $0x18] sm:$0xff]
    %v252 = vld [vmem:[#allocation6 + $0x20] sm:$0xff]
    %v253 = vld [vmem:[#allocation6 + $0x28] sm:$0xff]
    %v254 = vld [vmem:[#allocation6 + $0x30] sm:$0xff]
    %v255 = vld [vmem:[#allocation6 + $0x38] sm:$0xff]
    %v256 = vld [vmem:[#allocation6 + $0x40] sm:$0xff]
    %v257 = vld [vmem:[#allocation6 + $0x48] sm:$0xff]
    %v258 = vld [vmem:[#allocation6 + $0x50] sm:$0xff]
    %v259 = vld [vmem:[#allocation6 + $0x58] sm:$0xff]
    %v260 = vld [vmem:[#allocation6 + $0x60] sm:$0xff]
    %v261 = vld [vmem:[#allocation6 + $0x68] sm:$0xff]
    %v262 = vld [vmem:[#allocation6 + $0x70] sm:$0xff]
    %v263 = vld [vmem:[#allocation6 + $0x78] sm:$0xff]
    %v264 = vld [vmem:[#allocation6 + $0x80] sm:$0xff]
    %v265 = vld [vmem:[#allocation6 + $0x88] sm:$0xff]
    %v266 = vld [vmem:[#allocation6 + $0x90] sm:$0xff]
    %v267 = vld [vmem:[#allocation6 + $0x98] sm:$0xff]
    %v268 = vld [vmem:[#allocation6 + $0xa0] sm:$0xff]
    %v269 = vld [vmem:[#allocation6 + $0xa8] sm:$0xff]
    %v270 = vld [vmem:[#allocation6 + $0xb0] sm:$0xff]
    %v271 = vld [vmem:[#allocation6 + $0xb8] sm:$0xff]
    %v272 = vld [vmem:[#allocation6 + $0xc0] sm:$0xff]
    %v273 = vld [vmem:[#allocation6 + $0xc8] sm:$0xff]
    %v274 = vld [vmem:[#allocation6 + $0xd0] sm:$0xff]
    %v275 = vld [vmem:[#allocation6 + $0xd8] sm:$0xff]
    %v276 = vld [vmem:[#allocation6 + $0xe0] sm:$0xff]
    %v277 = vld [vmem:[#allocation6 + $0xe8] sm:$0xff]
    %v278 = vld [vmem:[#allocation6 + $0xf0] sm:$0xff]
    %v279 = vld [vmem:[#allocation6 + $0xf8] sm:$0xff]
    %v280 = vld [vmem:[#allocation6 + $0x100] sm:$0xff]
    %v281 = vld [vmem:[#allocation6 + $0x108] sm:$0xff]
    %v282 = vld [vmem:[#allocation6 + $0x110] sm:$0xff]
    %v283 = vld [vmem:[#allocation6 + $0x118] sm:$0xff]
    %v284 = vld [vmem:[#allocation6 + $0x120] sm:$0xff]
    %v285 = vld [vmem:[#allocation6 + $0x128] sm:$0xff]
    %v286 = vld [vmem:[#allocation6 + $0x130] sm:$0xff]
    %v287 = vld [vmem:[#allocation6 + $0x138] sm:$0xff]
    %v288 = vld [vmem:[#allocation6 + $0x140] sm:$0xff]
    %v289 = vld [vmem:[#allocation6 + $0x148] sm:$0xff]
    %v290 = vld [vmem:[#allocation6 + $0x150] sm:$0xff]
    %v291 = vld [vmem:[#allocation6 + $0x158] sm:$0xff]
    %v292 = vld [vmem:[#allocation6 + $0x160] sm:$0xff]
    %v293 = vld [vmem:[#allocation6 + $0x168] sm:$0xff]
    %v294 = vld [vmem:[#allocation6 + $0x170] sm:$0xff]
    %v295 = vld [vmem:[#allocation6 + $0x178] sm:$0xff]
    %v296 = vld [vmem:[%s6] sm:$0x7]
    %v298 = vlaneseq
    %v299 = vshrl.u32 %v298, 7
    %v300 = vsub.s32 0, %v299
    %v301 = vrot.slane %v296, %v300
    %v302 = vlaneseq
    %v303 = vshrl.u32 %v302, 7
    %v304 = vsub.s32 1, %v303
    %v305 = vrot.slane %v296, %v304
    %v306 = vlaneseq
    %v307 = vshrl.u32 %v306, 7
    %v308 = vsub.s32 2, %v307
    %v309 = vrot.slane %v296, %v308
    %313 = vmatprep.subr.mxu0 %v294
    %314 = vmatpush1.msra.mxu0 %v293
    %315 = vmatprep.subr.mxu0 %v291
    %316 = vmatpush1.msra.mxu0 %v290
    %317 = vmatprep.subr.mxu0 %v288
    %318 = vmatpush1.msra.mxu0 %v287
    %319 = vmatprep.subr.mxu0 %v285
    %320 = vmatpush1.msra.mxu0 %v284
    %321 = vmatprep.subr.mxu0 %v282
    %322 = vmatpush1.msra.mxu0 %v281
    %323 = vmatprep.subr.mxu0 %v279
    %324 = vmatpush1.msra.mxu0 %v278
    %325 = vmatprep.subr.mxu0 %v276
    %326 = vmatpush1.msra.mxu0 %v275
    %327 = vmatprep.subr.mxu0 %v273
    %328 = vmatpush1.msra.mxu0 %v272
    %329 = vmatprep.subr.mxu0 %v270
    %330 = vmatpush1.msra.mxu0 %v269
    %331 = vmatprep.subr.mxu0 %v267
    %332 = vmatpush1.msra.mxu0 %v266
    %333 = vmatprep.subr.mxu0 %v264
    %334 = vmatpush1.msra.mxu0 %v263
    %335 = vmatprep.subr.mxu0 %v261
    %336 = vmatpush1.msra.mxu0 %v260
    %337 = vmatprep.subr.mxu0 %v258
    %338 = vmatpush1.msra.mxu0 %v257
    %339 = vmatprep.subr.mxu0 %v255
    %340 = vmatpush1.msra.mxu0 %v254
    %341 = vmatprep.subr.mxu0 %v252
    %342 = vmatpush1.msra.mxu0 %v251
    %343 = vmatprep.subr.mxu0 %v249
    %344 = vmatpush1.msra.mxu0 %v248
    %345 = vmatprep.subr.mxu0 0.0
    %346 = vmatpush2.msra.mxu0 0.0
    %347 = vmatprep.subr.mxu0 0.0
    %348 = vmatpush2.msra.mxu0 0.0
    %349 = vmatprep.subr.mxu0 0.0
    %350 = vmatpush2.msra.mxu0 0.0
    %351 = vmatprep.subr.mxu0 0.0
    %352 = vmatpush2.msra.mxu0 0.0
    %353 = vmatprep.subr.mxu0 0.0
    %354 = vmatpush2.msra.mxu0 0.0
    %355 = vmatprep.subr.mxu0 0.0
    %356 = vmatpush2.msra.mxu0 0.0
    %357 = vmatprep.subr.mxu0 0.0
    %358 = vmatpush2.msra.mxu0 0.0
    %359 = vmatprep.subr.mxu0 0.0
    %360 = vmatpush2.msra.mxu0 0.0
    %361 = vmatprep.subr.mxu0 0.0
    %362 = vmatpush2.msra.mxu0 0.0
    %363 = vmatprep.subr.mxu0 0.0
    %364 = vmatpush2.msra.mxu0 0.0
    %365 = vmatprep.subr.mxu0 0.0
    %366 = vmatpush2.msra.mxu0 0.0
    %367 = vmatprep.subr.mxu0 0.0
    %368 = vmatpush2.msra.mxu0 0.0
    %369 = vmatprep.subr.mxu0 0.0
    %370 = vmatpush2.msra.mxu0 0.0
    %371 = vmatprep.subr.mxu0 0.0
    %372 = vmatpush2.msra.mxu0 0.0
    %373 = vmatprep.subr.mxu0 0.0
    %374 = vmatpush2.msra.mxu0 0.0
    %375 = vmatprep.subr.mxu0 0.0
    %376 = vmatpush2.msra.mxu0 0.0
    %377 = vmatprep.mubr.f32.mxu0 0.0
    %378 = vmatmul.mubr.f32.gmra.mxu0 %v221
    %v379 = vpop.f32.mrf.mxu0
    %v380 = vadd.f32 %v301, %v379
    %v381 = vpop.f32.mrf.mxu0
    %v382 = vadd.f32 %v305, %v381
    %383 = vmatprep.mubr.f32.mxu0 0.0
    %384 = vmatmul.mubr.f32.gmra.mxu0 %v222
    %v385 = vpop.f32.mrf.mxu0
    %v386 = vadd.f32 %v301, %v385
    %v387 = vpop.f32.mrf.mxu0
    %v388 = vadd.f32 %v305, %v387
    %389 = vdwg.mxu0
    %390 = vmatprep.subr.mxu0 0.0
    %391 = vmatpush1.msra.mxu0 %v295
    %392 = vmatprep.subr.mxu0 0.0
    %393 = vmatpush1.msra.mxu0 %v292
    %394 = vmatprep.subr.mxu0 0.0
    %395 = vmatpush1.msra.mxu0 %v289
    %396 = vmatprep.subr.mxu0 0.0
    %397 = vmatpush1.msra.mxu0 %v286
    %398 = vmatprep.subr.mxu0 0.0
    %399 = vmatpush1.msra.mxu0 %v283
    %400 = vmatprep.subr.mxu0 0.0
    %401 = vmatpush1.msra.mxu0 %v280
    %402 = vmatprep.subr.mxu0 0.0
    %403 = vmatpush1.msra.mxu0 %v277
    %404 = vmatprep.subr.mxu0 0.0
    %405 = vmatpush1.msra.mxu0 %v274
    %406 = vmatprep.subr.mxu0 0.0
    %407 = vmatpush1.msra.mxu0 %v271
    %408 = vmatprep.subr.mxu0 0.0
    %409 = vmatpush1.msra.mxu0 %v268
    %410 = vmatprep.subr.mxu0 0.0
    %411 = vmatpush1.msra.mxu0 %v265
    %412 = vmatprep.subr.mxu0 0.0
    %413 = vmatpush1.msra.mxu0 %v262
    %414 = vmatprep.subr.mxu0 0.0
    %415 = vmatpush1.msra.mxu0 %v259
    %416 = vmatprep.subr.mxu0 0.0
    %417 = vmatpush1.msra.mxu0 %v256
    %418 = vmatprep.subr.mxu0 0.0
    %419 = vmatpush1.msra.mxu0 %v253
    %420 = vmatprep.subr.mxu0 0.0
    %421 = vmatpush1.msra.mxu0 %v250
    %422 = vmatprep.subr.mxu0 0.0
    %423 = vmatpush2.msra.mxu0 0.0
    %424 = vmatprep.subr.mxu0 0.0
    %425 = vmatpush2.msra.mxu0 0.0
    %426 = vmatprep.subr.mxu0 0.0
    %427 = vmatpush2.msra.mxu0 0.0
    %428 = vmatprep.subr.mxu0 0.0
    %429 = vmatpush2.msra.mxu0 0.0
    %430 = vmatprep.subr.mxu0 0.0
    %431 = vmatpush2.msra.mxu0 0.0
    %432 = vmatprep.subr.mxu0 0.0
    %433 = vmatpush2.msra.mxu0 0.0
    %434 = vmatprep.subr.mxu0 0.0
    %435 = vmatpush2.msra.mxu0 0.0
    %436 = vmatprep.subr.mxu0 0.0
    %437 = vmatpush2.msra.mxu0 0.0
    %438 = vmatprep.subr.mxu0 0.0
    %439 = vmatpush2.msra.mxu0 0.0
    %440 = vmatprep.subr.mxu0 0.0
    %441 = vmatpush2.msra.mxu0 0.0
    %442 = vmatprep.subr.mxu0 0.0
    %443 = vmatpush2.msra.mxu0 0.0
    %444 = vmatprep.subr.mxu0 0.0
    %445 = vmatpush2.msra.mxu0 0.0
    %446 = vmatprep.subr.mxu0 0.0
    %447 = vmatpush2.msra.mxu0 0.0
    %448 = vmatprep.subr.mxu0 0.0
    %449 = vmatpush2.msra.mxu0 0.0
    %450 = vmatprep.subr.mxu0 0.0
    %451 = vmatpush2.msra.mxu0 0.0
    %452 = vmatprep.subr.mxu0 0.0
    %453 = vmatpush2.msra.mxu0 0.0
    %454 = vmatprep.mubr.f32.mxu0 0.0
    %455 = vmatmul.mubr.f32.gmra.mxu0 %v221
    %v456 = vpop.f32.mrf.mxu0
    %v457 = vadd.f32 %v309, %v456
    %v458 = vpop.f32.mrf.mxu0
    %459 = vmatprep.mubr.f32.mxu0 0.0
    %460 = vmatmul.mubr.f32.gmra.mxu0 %v222
    %v461 = vpop.f32.mrf.mxu0
    %v462 = vadd.f32 %v309, %v461
    %v463 = vpop.f32.mrf.mxu0
    %464 = vdwg.mxu0
    %v465 = vmul.f32 %v380, 0.17677669
    %v466 = vmul.f32 %v386, 0.17677669
    %v467 = vld [vmem:[#allocation9] sm:$0x1]
    %v469 = vlaneseq
    %v470 = vshrl.u32 %v469, 7
    %v471 = vsub.s32 0, %v470
    %v472 = vrot.slane %v467, %v471
    %v474 = vadd.f32 %v472, 0.0
    %v475 = vlaneseq
    %v476 = vshrl.u32 %v475, 7
    %v477 = vsub.s32 0, %v476
    %v478 = vrot.slane %v240, %v477
    %v479 = vlaneseq
    %v480 = vshrl.u32 %v479, 7
    %v481 = vsub.s32 0, %v480
    %v482 = vrot.slane %v247, %v481
    %vm485 = vcmask 261120
    %v487 = vsel %vm485, %v465, 0
    %v490 = vsel %vm485, %v382, 0
    %492 = vmatprep.subr.mxu0 0.0
    %493 = vmatpush1.xpose.msra.mxu0 0.0
    %494 = vmatprep.subr.mxu0 0.0
    %495 = vmatpush1.xpose.msra.mxu0 0.0
    %496 = vmatprep.subr.mxu0 0.0
    %497 = vmatpush1.xpose.msra.mxu0 0.0
    %498 = vmatprep.subr.mxu0 0.0
    %499 = vmatpush1.xpose.msra.mxu0 0.0
    %500 = vmatprep.subr.mxu0 0.0
    %501 = vmatpush1.xpose.msra.mxu0 0.0
    %502 = vmatprep.subr.mxu0 0.0
    %503 = vmatpush1.xpose.msra.mxu0 0.0
    %504 = vmatprep.subr.mxu0 0.0
    %505 = vmatpush1.xpose.msra.mxu0 0.0
    %506 = vmatprep.subr.mxu0 0.0
    %507 = vmatpush1.xpose.msra.mxu0 0.0
    %508 = vmatprep.subr.mxu0 0.0
    %509 = vmatpush1.xpose.msra.mxu0 0.0
    %510 = vmatprep.subr.mxu0 0.0
    %511 = vmatpush1.xpose.msra.mxu0 0.0
    %512 = vmatprep.subr.mxu0 0.0
    %513 = vmatpush1.xpose.msra.mxu0 0.0
    %514 = vmatprep.subr.mxu0 0.0
    %515 = vmatpush1.xpose.msra.mxu0 0.0
    %516 = vmatprep.subr.mxu0 0.0
    %517 = vmatpush1.xpose.msra.mxu0 0.0
    %518 = vmatprep.subr.mxu0 0.0
    %519 = vmatpush1.xpose.msra.mxu0 0.0
    %520 = vmatprep.subr.mxu0 0.0
    %521 = vmatpush1.xpose.msra.mxu0 0.0
    %522 = vmatprep.subr.mxu0 0.0
    %523 = vmatpush1.xpose.msra.mxu0 %v490
    %524 = vmatprep.subr.mxu0 0.0
    %525 = vmatpush2.xpose.msra.mxu0 0.0
    %526 = vmatprep.subr.mxu0 0.0
    %527 = vmatpush2.xpose.msra.mxu0 0.0
    %528 = vmatprep.subr.mxu0 0.0
    %529 = vmatpush2.xpose.msra.mxu0 0.0
    %530 = vmatprep.subr.mxu0 0.0
    %531 = vmatpush2.xpose.msra.mxu0 0.0
    %532 = vmatprep.subr.mxu0 0.0
    %533 = vmatpush2.xpose.msra.mxu0 0.0
    %534 = vmatprep.subr.mxu0 0.0
    %535 = vmatpush2.xpose.msra.mxu0 0.0
    %536 = vmatprep.subr.mxu0 0.0
    %537 = vmatpush2.xpose.msra.mxu0 0.0
    %538 = vmatprep.subr.mxu0 0.0
    %539 = vmatpush2.xpose.msra.mxu0 0.0
    %540 = vmatprep.subr.mxu0 0.0
    %541 = vmatpush2.xpose.msra.mxu0 0.0
    %542 = vmatprep.subr.mxu0 0.0
    %543 = vmatpush2.xpose.msra.mxu0 0.0
    %544 = vmatprep.subr.mxu0 0.0
    %545 = vmatpush2.xpose.msra.mxu0 0.0
    %546 = vmatprep.subr.mxu0 0.0
    %547 = vmatpush2.xpose.msra.mxu0 0.0
    %548 = vmatprep.subr.mxu0 0.0
    %549 = vmatpush2.xpose.msra.mxu0 0.0
    %550 = vmatprep.subr.mxu0 0.0
    %551 = vmatpush2.xpose.msra.mxu0 0.0
    %552 = vmatprep.subr.mxu0 0.0
    %553 = vmatpush2.xpose.msra.mxu0 0.0
    %554 = vmatprep.subr.mxu0 0.0
    %555 = vmatpush2.xpose.msra.mxu0 0.0
    %556 = vmatprep.mubr.f32.mxu0 0.0
    %557 = vmatmul.mubr.f32.gmra.mxu0 %v487
    %v558 = vpop.f32.mrf.mxu0
    %v559 = vadd.f32 %v478, %v558
    %v560 = vpop.f32.mrf.mxu0
    %561 = vdwg.mxu0
    %v563 = vsel %vm485, %v466, 0
    %v566 = vsel %vm485, %v388, 0
    %568 = vmatprep.subr.mxu0 0.0
    %569 = vmatpush1.xpose.msra.mxu0 0.0
    %570 = vmatprep.subr.mxu0 0.0
    %571 = vmatpush1.xpose.msra.mxu0 0.0
    %572 = vmatprep.subr.mxu0 0.0
    %573 = vmatpush1.xpose.msra.mxu0 0.0
    %574 = vmatprep.subr.mxu0 0.0
    %575 = vmatpush1.xpose.msra.mxu0 0.0
    %576 = vmatprep.subr.mxu0 0.0
    %577 = vmatpush1.xpose.msra.mxu0 0.0
    %578 = vmatprep.subr.mxu0 0.0
    %579 = vmatpush1.xpose.msra.mxu0 0.0
    %580 = vmatprep.subr.mxu0 0.0
    %581 = vmatpush1.xpose.msra.mxu0 0.0
    %582 = vmatprep.subr.mxu0 0.0
    %583 = vmatpush1.xpose.msra.mxu0 0.0
    %584 = vmatprep.subr.mxu0 0.0
    %585 = vmatpush1.xpose.msra.mxu0 0.0
    %586 = vmatprep.subr.mxu0 0.0
    %587 = vmatpush1.xpose.msra.mxu0 0.0
    %588 = vmatprep.subr.mxu0 0.0
    %589 = vmatpush1.xpose.msra.mxu0 0.0
    %590 = vmatprep.subr.mxu0 0.0
    %591 = vmatpush1.xpose.msra.mxu0 0.0
    %592 = vmatprep.subr.mxu0 0.0
    %593 = vmatpush1.xpose.msra.mxu0 0.0
    %594 = vmatprep.subr.mxu0 0.0
    %595 = vmatpush1.xpose.msra.mxu0 0.0
    %596 = vmatprep.subr.mxu0 0.0
    %597 = vmatpush1.xpose.msra.mxu0 0.0
    %598 = vmatprep.subr.mxu0 0.0
    %599 = vmatpush1.xpose.msra.mxu0 %v566
    %600 = vmatprep.subr.mxu0 0.0
    %601 = vmatpush2.xpose.msra.mxu0 0.0
    %602 = vmatprep.subr.mxu0 0.0
    %603 = vmatpush2.xpose.msra.mxu0 0.0
    %604 = vmatprep.subr.mxu0 0.0
    %605 = vmatpush2.xpose.msra.mxu0 0.0
    %606 = vmatprep.subr.mxu0 0.0
    %607 = vmatpush2.xpose.msra.mxu0 0.0
    %608 = vmatprep.subr.mxu0 0.0
    %609 = vmatpush2.xpose.msra.mxu0 0.0
    %610 = vmatprep.subr.mxu0 0.0
    %611 = vmatpush2.xpose.msra.mxu0 0.0
    %612 = vmatprep.subr.mxu0 0.0
    %613 = vmatpush2.xpose.msra.mxu0 0.0
    %614 = vmatprep.subr.mxu0 0.0
    %615 = vmatpush2.xpose.msra.mxu0 0.0
    %616 = vmatprep.subr.mxu0 0.0
    %617 = vmatpush2.xpose.msra.mxu0 0.0
    %618 = vmatprep.subr.mxu0 0.0
    %619 = vmatpush2.xpose.msra.mxu0 0.0
    %620 = vmatprep.subr.mxu0 0.0
    %621 = vmatpush2.xpose.msra.mxu0 0.0
    %622 = vmatprep.subr.mxu0 0.0
    %623 = vmatpush2.xpose.msra.mxu0 0.0
    %624 = vmatprep.subr.mxu0 0.0
    %625 = vmatpush2.xpose.msra.mxu0 0.0
    %626 = vmatprep.subr.mxu0 0.0
    %627 = vmatpush2.xpose.msra.mxu0 0.0
    %628 = vmatprep.subr.mxu0 0.0
    %629 = vmatpush2.xpose.msra.mxu0 0.0
    %630 = vmatprep.subr.mxu0 0.0
    %631 = vmatpush2.xpose.msra.mxu0 0.0
    %632 = vmatprep.mubr.f32.mxu0 0.0
    %633 = vmatmul.mubr.f32.gmra.mxu0 %v563
    %v634 = vpop.f32.mrf.mxu0
    %v635 = vadd.f32 %v482, %v634
    %v636 = vpop.f32.mrf.mxu0
    %637 = vdwg.mxu0
    %vm638 = vcmask 64512
    %v639 = vsel %vm638, %v559, -inf
    %640 = vmax.xlane.f32.xlu0 %v639
    %v641 = vpop.xlane.xlu0 %640
    %v642 = vsel %vm638, %v635, -inf
    %643 = vmax.xlane.f32.xlu0 %v642
    %v644 = vpop.xlane.xlu0 %643
    %v645 = vsub.f32 %v559, %v641
    %v646 = vsub.f32 %v635, %v644
    %v647 = vmul.f32 %v645, 1.442695
    %v648 = vpow.pop %v647
    %v649 = vmul.f32 %v646, 1.442695
    %v650 = vpow.pop %v649
    %v651 = vsel %vm638, %v648, 0.0
    %652 = vadd.xlane.f32.xlu0 %v651
    %v653 = vpop.xlane.xlu0 %652
    %v654 = vsel %vm638, %v650, 0.0
    %655 = vadd.xlane.f32.xlu0 %v654
    %v656 = vpop.xlane.xlu0 %655
    %v657 = vrcp.pop %v653
    %v658 = vmul.f32 %v648, %v657
    %v659 = vrcp.pop %v656
    %v660 = vmul.f32 %v650, %v659
    %v662 = vsel %vm638, %v658, 0
    %664 = vmatprep.subr.mxu0 0.0
    %665 = vmatpush1.msra.mxu0 0.0
    %666 = vmatprep.subr.mxu0 0.0
    %667 = vmatpush1.msra.mxu0 0.0
    %668 = vmatprep.subr.mxu0 0.0
    %669 = vmatpush1.msra.mxu0 0.0
    %670 = vmatprep.subr.mxu0 0.0
    %671 = vmatpush1.msra.mxu0 0.0
    %672 = vmatprep.subr.mxu0 0.0
    %673 = vmatpush1.msra.mxu0 0.0
    %674 = vmatprep.subr.mxu0 0.0
    %675 = vmatpush1.msra.mxu0 0.0
    %676 = vmatprep.subr.mxu0 0.0
    %677 = vmatpush1.msra.mxu0 0.0
    %678 = vmatprep.subr.mxu0 0.0
    %679 = vmatpush1.msra.mxu0 0.0
    %680 = vmatprep.subr.mxu0 0.0
    %681 = vmatpush1.msra.mxu0 0.0
    %682 = vmatprep.subr.mxu0 0.0
    %683 = vmatpush1.msra.mxu0 0.0
    %684 = vmatprep.subr.mxu0 0.0
    %685 = vmatpush1.msra.mxu0 0.0
    %686 = vmatprep.subr.mxu0 0.0
    %687 = vmatpush1.msra.mxu0 0.0
    %688 = vmatprep.subr.mxu0 0.0
    %689 = vmatpush1.msra.mxu0 0.0
    %690 = vmatprep.subr.mxu0 0.0
    %691 = vmatpush1.msra.mxu0 0.0
    %692 = vmatprep.subr.mxu0 0.0
    %693 = vmatpush1.msra.mxu0 0.0
    %694 = vmatprep.subr.mxu0 0.0
    %695 = vmatpush1.msra.mxu0 %v457
    %696 = vmatprep.subr.mxu0 0.0
    %697 = vmatpush2.msra.mxu0 0.0
    %698 = vmatprep.subr.mxu0 0.0
    %699 = vmatpush2.msra.mxu0 0.0
    %700 = vmatprep.subr.mxu0 0.0
    %701 = vmatpush2.msra.mxu0 0.0
    %702 = vmatprep.subr.mxu0 0.0
    %703 = vmatpush2.msra.mxu0 0.0
    %704 = vmatprep.subr.mxu0 0.0
    %705 = vmatpush2.msra.mxu0 0.0
    %706 = vmatprep.subr.mxu0 0.0
    %707 = vmatpush2.msra.mxu0 0.0
    %708 = vmatprep.subr.mxu0 0.0
    %709 = vmatpush2.msra.mxu0 0.0
    %710 = vmatprep.subr.mxu0 0.0
    %711 = vmatpush2.msra.mxu0 0.0
    %712 = vmatprep.subr.mxu0 0.0
    %713 = vmatpush2.msra.mxu0 0.0
    %714 = vmatprep.subr.mxu0 0.0
    %715 = vmatpush2.msra.mxu0 0.0
    %716 = vmatprep.subr.mxu0 0.0
    %717 = vmatpush2.msra.mxu0 0.0
    %718 = vmatprep.subr.mxu0 0.0
    %719 = vmatpush2.msra.mxu0 0.0
    %720 = vmatprep.subr.mxu0 0.0
    %721 = vmatpush2.msra.mxu0 0.0
    %722 = vmatprep.subr.mxu0 0.0
    %723 = vmatpush2.msra.mxu0 0.0
    %724 = vmatprep.subr.mxu0 0.0
    %725 = vmatpush2.msra.mxu0 0.0
    %726 = vmatprep.subr.mxu0 0.0
    %727 = vmatpush2.msra.mxu0 0.0
    %728 = vmatprep.mubr.f32.mxu0 0.0
    %729 = vmatmul.mubr.f32.gmra.mxu0 %v662
    %v730 = vpop.f32.mrf.mxu0
    %v731 = vadd.f32 0.0, %v730
    %v732 = vpop.f32.mrf.mxu0
    %733 = vdwg.mxu0
    %v735 = vsel %vm638, %v660, 0
    %737 = vmatprep.subr.mxu0 0.0
    %738 = vmatpush1.msra.mxu0 0.0
    %739 = vmatprep.subr.mxu0 0.0
    %740 = vmatpush1.msra.mxu0 0.0
    %741 = vmatprep.subr.mxu0 0.0
    %742 = vmatpush1.msra.mxu0 0.0
    %743 = vmatprep.subr.mxu0 0.0
    %744 = vmatpush1.msra.mxu0 0.0
    %745 = vmatprep.subr.mxu0 0.0
    %746 = vmatpush1.msra.mxu0 0.0
    %747 = vmatprep.subr.mxu0 0.0
    %748 = vmatpush1.msra.mxu0 0.0
    %749 = vmatprep.subr.mxu0 0.0
    %750 = vmatpush1.msra.mxu0 0.0
    %751 = vmatprep.subr.mxu0 0.0
    %752 = vmatpush1.msra.mxu0 0.0
    %753 = vmatprep.subr.mxu0 0.0
    %754 = vmatpush1.msra.mxu0 0.0
    %755 = vmatprep.subr.mxu0 0.0
    %756 = vmatpush1.msra.mxu0 0.0
    %757 = vmatprep.subr.mxu0 0.0
    %758 = vmatpush1.msra.mxu0 0.0
    %759 = vmatprep.subr.mxu0 0.0
    %760 = vmatpush1.msra.mxu0 0.0
    %761 = vmatprep.subr.mxu0 0.0
    %762 = vmatpush1.msra.mxu0 0.0
    %763 = vmatprep.subr.mxu0 0.0
    %764 = vmatpush1.msra.mxu0 0.0
    %765 = vmatprep.subr.mxu0 0.0
    %766 = vmatpush1.msra.mxu0 0.0
    %767 = vmatprep.subr.mxu0 0.0
    %768 = vmatpush1.msra.mxu0 %v462
    %769 = vmatprep.subr.mxu0 0.0
    %770 = vmatpush2.msra.mxu0 0.0
    %771 = vmatprep.subr.mxu0 0.0
    %772 = vmatpush2.msra.mxu0 0.0
    %773 = vmatprep.subr.mxu0 0.0
    %774 = vmatpush2.msra.mxu0 0.0
    %775 = vmatprep.subr.mxu0 0.0
    %776 = vmatpush2.msra.mxu0 0.0
    %777 = vmatprep.subr.mxu0 0.0
    %778 = vmatpush2.msra.mxu0 0.0
    %779 = vmatprep.subr.mxu0 0.0
    %780 = vmatpush2.msra.mxu0 0.0
    %781 = vmatprep.subr.mxu0 0.0
    %782 = vmatpush2.msra.mxu0 0.0
    %783 = vmatprep.subr.mxu0 0.0
    %784 = vmatpush2.msra.mxu0 0.0
    %785 = vmatprep.subr.mxu0 0.0
    %786 = vmatpush2.msra.mxu0 0.0
    %787 = vmatprep.subr.mxu0 0.0
    %788 = vmatpush2.msra.mxu0 0.0
    %789 = vmatprep.subr.mxu0 0.0
    %790 = vmatpush2.msra.mxu0 0.0
    %791 = vmatprep.subr.mxu0 0.0
    %792 = vmatpush2.msra.mxu0 0.0
    %793 = vmatprep.subr.mxu0 0.0
    %794 = vmatpush2.msra.mxu0 0.0
    %795 = vmatprep.subr.mxu0 0.0
    %796 = vmatpush2.msra.mxu0 0.0
    %797 = vmatprep.subr.mxu0 0.0
    %798 = vmatpush2.msra.mxu0 0.0
    %799 = vmatprep.subr.mxu0 0.0
    %800 = vmatpush2.msra.mxu0 0.0
    %801 = vmatprep.mubr.f32.mxu0 0.0
    %802 = vmatmul.mubr.f32.gmra.mxu0 %v735
    %v803 = vpop.f32.mrf.mxu0
    %v804 = vadd.f32 0.0, %v803
    %v805 = vpop.f32.mrf.mxu0
    %806 = vdwg.mxu0
    %v807 = vld [vmem:[#allocation8] sm:$0xff]
    %v808 = vld [vmem:[#allocation8 + $0x8] sm:$0xff]
    %v809 = vld [vmem:[#allocation8 + $0x10] sm:$0xff]
    %v810 = vld [vmem:[#allocation8 + $0x18] sm:$0xff]
    %v812 = vsel %vm485, %v731, 0
    %v815 = vsel %vm485, %v804, 0
    %817 = vmatprep.subr.mxu0 0.0
    %818 = vmatpush1.msra.mxu0 0.0
    %819 = vmatprep.subr.mxu0 0.0
    %820 = vmatpush1.msra.mxu0 0.0
    %821 = vmatprep.subr.mxu0 0.0
    %822 = vmatpush1.msra.mxu0 0.0
    %823 = vmatprep.subr.mxu0 0.0
    %824 = vmatpush1.msra.mxu0 0.0
    %825 = vmatprep.subr.mxu0 0.0
    %826 = vmatpush1.msra.mxu0 0.0
    %827 = vmatprep.subr.mxu0 0.0
    %828 = vmatpush1.msra.mxu0 0.0
    %829 = vmatprep.subr.mxu0 0.0
    %830 = vmatpush1.msra.mxu0 0.0
    %831 = vmatprep.subr.mxu0 0.0
    %832 = vmatpush1.msra.mxu0 0.0
    %833 = vmatprep.subr.mxu0 0.0
    %834 = vmatpush1.msra.mxu0 0.0
    %835 = vmatprep.subr.mxu0 0.0
    %836 = vmatpush1.msra.mxu0 0.0
    %837 = vmatprep.subr.mxu0 0.0
    %838 = vmatpush1.msra.mxu0 0.0
    %839 = vmatprep.subr.mxu0 0.0
    %840 = vmatpush1.msra.mxu0 0.0
    %841 = vmatprep.subr.mxu0 0.0
    %842 = vmatpush1.msra.mxu0 %v810
    %843 = vmatprep.subr.mxu0 0.0
    %844 = vmatpush1.msra.mxu0 %v809
    %845 = vmatprep.subr.mxu0 0.0
    %846 = vmatpush1.msra.mxu0 %v808
    %847 = vmatprep.subr.mxu0 0.0
    %848 = vmatpush1.msra.mxu0 %v807
    %849 = vmatprep.subr.mxu0 0.0
    %850 = vmatpush2.msra.mxu0 0.0
    %851 = vmatprep.subr.mxu0 0.0
    %852 = vmatpush2.msra.mxu0 0.0
    %853 = vmatprep.subr.mxu0 0.0
    %854 = vmatpush2.msra.mxu0 0.0
    %855 = vmatprep.subr.mxu0 0.0
    %856 = vmatpush2.msra.mxu0 0.0
    %857 = vmatprep.subr.mxu0 0.0
    %858 = vmatpush2.msra.mxu0 0.0
    %859 = vmatprep.subr.mxu0 0.0
    %860 = vmatpush2.msra.mxu0 0.0
    %861 = vmatprep.subr.mxu0 0.0
    %862 = vmatpush2.msra.mxu0 0.0
    %863 = vmatprep.subr.mxu0 0.0
    %864 = vmatpush2.msra.mxu0 0.0
    %865 = vmatprep.subr.mxu0 0.0
    %866 = vmatpush2.msra.mxu0 0.0
    %867 = vmatprep.subr.mxu0 0.0
    %868 = vmatpush2.msra.mxu0 0.0
    %869 = vmatprep.subr.mxu0 0.0
    %870 = vmatpush2.msra.mxu0 0.0
    %871 = vmatprep.subr.mxu0 0.0
    %872 = vmatpush2.msra.mxu0 0.0
    %873 = vmatprep.subr.mxu0 0.0
    %874 = vmatpush2.msra.mxu0 0.0
    %875 = vmatprep.subr.mxu0 0.0
    %876 = vmatpush2.msra.mxu0 0.0
    %877 = vmatprep.subr.mxu0 0.0
    %878 = vmatpush2.msra.mxu0 0.0
    %879 = vmatprep.subr.mxu0 0.0
    %880 = vmatpush2.msra.mxu0 0.0
    %881 = vmatprep.mubr.f32.mxu0 0.0
    %882 = vmatmul.mubr.f32.gmra.mxu0 %v812
    %v883 = vpop.f32.mrf.mxu0
    %v884 = vadd.f32 0.0, %v883
    %v885 = vpop.f32.mrf.mxu0
    %886 = vmatprep.mubr.f32.mxu0 0.0
    %887 = vmatmul.mubr.f32.gmra.mxu0 %v815
    %v888 = vpop.f32.mrf.mxu0
    %v889 = vadd.f32 0.0, %v888
    %v890 = vpop.f32.mrf.mxu0
    %891 = vdwg.mxu0
    %v892 = vadd.f32 %v474, %v884
    %v893 = vadd.f32 %v474, %v889
    %894 = vrot.lane.b32.xlu0 %v465, 96
    %v895 = vpop.permute.xlu0 %894
    %896 = vrot.lane.b32.xlu0 %v382, 96
    %v897 = vpop.permute.xlu0 %896
    %v898 = vsel %vm485, %v895, 0
    %v900 = vsel %vm485, %v897, 0
    %902 = vmatprep.subr.mxu0 0.0
    %903 = vmatpush1.xpose.msra.mxu0 0.0
    %904 = vmatprep.subr.mxu0 0.0
    %905 = vmatpush1.xpose.msra.mxu0 0.0
    %906 = vmatprep.subr.mxu0 0.0
    %907 = vmatpush1.xpose.msra.mxu0 0.0
    %908 = vmatprep.subr.mxu0 0.0
    %909 = vmatpush1.xpose.msra.mxu0 0.0
    %910 = vmatprep.subr.mxu0 0.0
    %911 = vmatpush1.xpose.msra.mxu0 0.0
    %912 = vmatprep.subr.mxu0 0.0
    %913 = vmatpush1.xpose.msra.mxu0 0.0
    %914 = vmatprep.subr.mxu0 0.0
    %915 = vmatpush1.xpose.msra.mxu0 0.0
    %916 = vmatprep.subr.mxu0 0.0
    %917 = vmatpush1.xpose.msra.mxu0 0.0
    %918 = vmatprep.subr.mxu0 0.0
    %919 = vmatpush1.xpose.msra.mxu0 0.0
    %920 = vmatprep.subr.mxu0 0.0
    %921 = vmatpush1.xpose.msra.mxu0 0.0
    %922 = vmatprep.subr.mxu0 0.0
    %923 = vmatpush1.xpose.msra.mxu0 0.0
    %924 = vmatprep.subr.mxu0 0.0
    %925 = vmatpush1.xpose.msra.mxu0 0.0
    %926 = vmatprep.subr.mxu0 0.0
    %927 = vmatpush1.xpose.msra.mxu0 0.0
    %928 = vmatprep.subr.mxu0 0.0
    %929 = vmatpush1.xpose.msra.mxu0 0.0
    %930 = vmatprep.subr.mxu0 0.0
    %931 = vmatpush1.xpose.msra.mxu0 0.0
    %932 = vmatprep.subr.mxu0 0.0
    %933 = vmatpush1.xpose.msra.mxu0 %v900
    %934 = vmatprep.subr.mxu0 0.0
    %935 = vmatpush2.xpose.msra.mxu0 0.0
    %936 = vmatprep.subr.mxu0 0.0
    %937 = vmatpush2.xpose.msra.mxu0 0.0
    %938 = vmatprep.subr.mxu0 0.0
    %939 = vmatpush2.xpose.msra.mxu0 0.0
    %940 = vmatprep.subr.mxu0 0.0
    %941 = vmatpush2.xpose.msra.mxu0 0.0
    %942 = vmatprep.subr.mxu0 0.0
    %943 = vmatpush2.xpose.msra.mxu0 0.0
    %944 = vmatprep.subr.mxu0 0.0
    %945 = vmatpush2.xpose.msra.mxu0 0.0
    %946 = vmatprep.subr.mxu0 0.0
    %947 = vmatpush2.xpose.msra.mxu0 0.0
    %948 = vmatprep.subr.mxu0 0.0
    %949 = vmatpush2.xpose.msra.mxu0 0.0
    %950 = vmatprep.subr.mxu0 0.0
    %951 = vmatpush2.xpose.msra.mxu0 0.0
    %952 = vmatprep.subr.mxu0 0.0
    %953 = vmatpush2.xpose.msra.mxu0 0.0
    %954 = vmatprep.subr.mxu0 0.0
    %955 = vmatpush2.xpose.msra.mxu0 0.0
    %956 = vmatprep.subr.mxu0 0.0
    %957 = vmatpush2.xpose.msra.mxu0 0.0
    %958 = vmatprep.subr.mxu0 0.0
    %959 = vmatpush2.xpose.msra.mxu0 0.0
    %960 = vmatprep.subr.mxu0 0.0
    %961 = vmatpush2.xpose.msra.mxu0 0.0
    %962 = vmatprep.subr.mxu0 0.0
    %963 = vmatpush2.xpose.msra.mxu0 0.0
    %964 = vmatprep.subr.mxu0 0.0
    %965 = vmatpush2.xpose.msra.mxu0 0.0
    %966 = vmatprep.mubr.f32.mxu0 0.0
    %967 = vmatmul.mubr.f32.gmra.mxu0 %v898
    %v968 = vpop.f32.mrf.mxu0
    %v969 = vadd.f32 %v478, %v968
    %v970 = vpop.f32.mrf.mxu0
    %971 = vdwg.mxu0
    %972 = vrot.lane.b32.xlu0 %v466, 96
    %v973 = vpop.permute.xlu0 %972
    %974 = vrot.lane.b32.xlu0 %v388, 96
    %v975 = vpop.permute.xlu0 %974
    %v976 = vsel %vm485, %v973, 0
    %v978 = vsel %vm485, %v975, 0
    %980 = vmatprep.subr.mxu0 0.0
    %981 = vmatpush1.xpose.msra.mxu0 0.0
    %982 = vmatprep.subr.mxu0 0.0
    %983 = vmatpush1.xpose.msra.mxu0 0.0
    %984 = vmatprep.subr.mxu0 0.0
    %985 = vmatpush1.xpose.msra.mxu0 0.0
    %986 = vmatprep.subr.mxu0 0.0
    %987 = vmatpush1.xpose.msra.mxu0 0.0
    %988 = vmatprep.subr.mxu0 0.0
    %989 = vmatpush1.xpose.msra.mxu0 0.0
    %990 = vmatprep.subr.mxu0 0.0
    %991 = vmatpush1.xpose.msra.mxu0 0.0
    %992 = vmatprep.subr.mxu0 0.0
    %993 = vmatpush1.xpose.msra.mxu0 0.0
    %994 = vmatprep.subr.mxu0 0.0
    %995 = vmatpush1.xpose.msra.mxu0 0.0
    %996 = vmatprep.subr.mxu0 0.0
    %997 = vmatpush1.xpose.msra.mxu0 0.0
    %998 = vmatprep.subr.mxu0 0.0
    %999 = vmatpush1.xpose.msra.mxu0 0.0
    %1000 = vmatprep.subr.mxu0 0.0
    %1001 = vmatpush1.xpose.msra.mxu0 0.0
    %1002 = vmatprep.subr.mxu0 0.0
    %1003 = vmatpush1.xpose.msra.mxu0 0.0
    %1004 = vmatprep.subr.mxu0 0.0
    %1005 = vmatpush1.xpose.msra.mxu0 0.0
    %1006 = vmatprep.subr.mxu0 0.0
    %1007 = vmatpush1.xpose.msra.mxu0 0.0
    %1008 = vmatprep.subr.mxu0 0.0
    %1009 = vmatpush1.xpose.msra.mxu0 0.0
    %1010 = vmatprep.subr.mxu0 0.0
    %1011 = vmatpush1.xpose.msra.mxu0 %v978
    %1012 = vmatprep.subr.mxu0 0.0
    %1013 = vmatpush2.xpose.msra.mxu0 0.0
    %1014 = vmatprep.subr.mxu0 0.0
    %1015 = vmatpush2.xpose.msra.mxu0 0.0
    %1016 = vmatprep.subr.mxu0 0.0
    %1017 = vmatpush2.xpose.msra.mxu0 0.0
    %1018 = vmatprep.subr.mxu0 0.0
    %1019 = vmatpush2.xpose.msra.mxu0 0.0
    %1020 = vmatprep.subr.mxu0 0.0
    %1021 = vmatpush2.xpose.msra.mxu0 0.0
    %1022 = vmatprep.subr.mxu0 0.0
    %1023 = vmatpush2.xpose.msra.mxu0 0.0
    %1024 = vmatprep.subr.mxu0 0.0
    %1025 = vmatpush2.xpose.msra.mxu0 0.0
    %1026 = vmatprep.subr.mxu0 0.0
    %1027 = vmatpush2.xpose.msra.mxu0 0.0
    %1028 = vmatprep.subr.mxu0 0.0
    %1029 = vmatpush2.xpose.msra.mxu0 0.0
    %1030 = vmatprep.subr.mxu0 0.0
    %1031 = vmatpush2.xpose.msra.mxu0 0.0
    %1032 = vmatprep.subr.mxu0 0.0
    %1033 = vmatpush2.xpose.msra.mxu0 0.0
    %1034 = vmatprep.subr.mxu0 0.0
    %1035 = vmatpush2.xpose.msra.mxu0 0.0
    %1036 = vmatprep.subr.mxu0 0.0
    %1037 = vmatpush2.xpose.msra.mxu0 0.0
    %1038 = vmatprep.subr.mxu0 0.0
    %1039 = vmatpush2.xpose.msra.mxu0 0.0
    %1040 = vmatprep.subr.mxu0 0.0
    %1041 = vmatpush2.xpose.msra.mxu0 0.0
    %1042 = vmatprep.subr.mxu0 0.0
    %1043 = vmatpush2.xpose.msra.mxu0 0.0
    %1044 = vmatprep.mubr.f32.mxu0 0.0
    %1045 = vmatmul.mubr.f32.gmra.mxu0 %v976
    %v1046 = vpop.f32.mrf.mxu0
    %v1047 = vadd.f32 %v482, %v1046
    %v1048 = vpop.f32.mrf.mxu0
    %1049 = vdwg.mxu0
    %v1050 = vsel %vm638, %v969, -inf
    %1051 = vmax.xlane.f32.xlu0 %v1050
    %v1052 = vpop.xlane.xlu0 %1051
    %v1053 = vsel %vm638, %v1047, -inf
    %1054 = vmax.xlane.f32.xlu0 %v1053
    %v1055 = vpop.xlane.xlu0 %1054
    %v1056 = vsub.f32 %v969, %v1052
    %v1057 = vsub.f32 %v1047, %v1055
    %v1058 = vmul.f32 %v1056, 1.442695
    %v1059 = vpow.pop %v1058
    %v1060 = vmul.f32 %v1057, 1.442695
    %v1061 = vpow.pop %v1060
    %v1062 = vsel %vm638, %v1059, 0.0
    %1063 = vadd.xlane.f32.xlu0 %v1062
    %v1064 = vpop.xlane.xlu0 %1063
    %v1065 = vsel %vm638, %v1061, 0.0
    %1066 = vadd.xlane.f32.xlu0 %v1065
    %v1067 = vpop.xlane.xlu0 %1066
    %v1068 = vrcp.pop %v1064
    %v1069 = vmul.f32 %v1059, %v1068
    %v1070 = vrcp.pop %v1067
    %v1071 = vmul.f32 %v1061, %v1070
    %1073 = vrot.lane.b32.xlu0 %v457, 96
    %v1074 = vpop.permute.xlu0 %1073
    %v1077 = vsel %vm638, %v1069, 0
    %1079 = vmatprep.subr.mxu0 0.0
    %1080 = vmatpush1.msra.mxu0 0.0
    %1081 = vmatprep.subr.mxu0 0.0
    %1082 = vmatpush1.msra.mxu0 0.0
    %1083 = vmatprep.subr.mxu0 0.0
    %1084 = vmatpush1.msra.mxu0 0.0
    %1085 = vmatprep.subr.mxu0 0.0
    %1086 = vmatpush1.msra.mxu0 0.0
    %1087 = vmatprep.subr.mxu0 0.0
    %1088 = vmatpush1.msra.mxu0 0.0
    %1089 = vmatprep.subr.mxu0 0.0
    %1090 = vmatpush1.msra.mxu0 0.0
    %1091 = vmatprep.subr.mxu0 0.0
    %1092 = vmatpush1.msra.mxu0 0.0
    %1093 = vmatprep.subr.mxu0 0.0
    %1094 = vmatpush1.msra.mxu0 0.0
    %1095 = vmatprep.subr.mxu0 0.0
    %1096 = vmatpush1.msra.mxu0 0.0
    %1097 = vmatprep.subr.mxu0 0.0
    %1098 = vmatpush1.msra.mxu0 0.0
    %1099 = vmatprep.subr.mxu0 0.0
    %1100 = vmatpush1.msra.mxu0 0.0
    %1101 = vmatprep.subr.mxu0 0.0
    %1102 = vmatpush1.msra.mxu0 0.0
    %1103 = vmatprep.subr.mxu0 0.0
    %1104 = vmatpush1.msra.mxu0 0.0
    %1105 = vmatprep.subr.mxu0 0.0
    %1106 = vmatpush1.msra.mxu0 0.0
    %1107 = vmatprep.subr.mxu0 0.0
    %1108 = vmatpush1.msra.mxu0 0.0
    %1109 = vmatprep.subr.mxu0 0.0
    %1110 = vmatpush1.msra.mxu0 %v1074
    %1111 = vmatprep.subr.mxu0 0.0
    %1112 = vmatpush2.msra.mxu0 0.0
    %1113 = vmatprep.subr.mxu0 0.0
    %1114 = vmatpush2.msra.mxu0 0.0
    %1115 = vmatprep.subr.mxu0 0.0
    %1116 = vmatpush2.msra.mxu0 0.0
    %1117 = vmatprep.subr.mxu0 0.0
    %1118 = vmatpush2.msra.mxu0 0.0
    %1119 = vmatprep.subr.mxu0 0.0
    %1120 = vmatpush2.msra.mxu0 0.0
    %1121 = vmatprep.subr.mxu0 0.0
    %1122 = vmatpush2.msra.mxu0 0.0
    %1123 = vmatprep.subr.mxu0 0.0
    %1124 = vmatpush2.msra.mxu0 0.0
    %1125 = vmatprep.subr.mxu0 0.0
    %1126 = vmatpush2.msra.mxu0 0.0
    %1127 = vmatprep.subr.mxu0 0.0
    %1128 = vmatpush2.msra.mxu0 0.0
    %1129 = vmatprep.subr.mxu0 0.0
    %1130 = vmatpush2.msra.mxu0 0.0
    %1131 = vmatprep.subr.mxu0 0.0
    %1132 = vmatpush2.msra.mxu0 0.0
    %1133 = vmatprep.subr.mxu0 0.0
    %1134 = vmatpush2.msra.mxu0 0.0
    %1135 = vmatprep.subr.mxu0 0.0
    %1136 = vmatpush2.msra.mxu0 0.0
    %1137 = vmatprep.subr.mxu0 0.0
    %1138 = vmatpush2.msra.mxu0 0.0
    %1139 = vmatprep.subr.mxu0 0.0
    %1140 = vmatpush2.msra.mxu0 0.0
    %1141 = vmatprep.subr.mxu0 0.0
    %1142 = vmatpush2.msra.mxu0 0.0
    %1143 = vmatprep.mubr.f32.mxu0 0.0
    %1144 = vmatmul.mubr.f32.gmra.mxu0 %v1077
    %v1145 = vpop.f32.mrf.mxu0
    %v1146 = vadd.f32 0.0, %v1145
    %v1147 = vpop.f32.mrf.mxu0
    %1148 = vdwg.mxu0
    %1150 = vrot.lane.b32.xlu0 %v462, 96
    %v1151 = vpop.permute.xlu0 %1150
    %v1154 = vsel %vm638, %v1071, 0
    %1156 = vmatprep.subr.mxu0 0.0
    %1157 = vmatpush1.msra.mxu0 0.0
    %1158 = vmatprep.subr.mxu0 0.0
    %1159 = vmatpush1.msra.mxu0 0.0
    %1160 = vmatprep.subr.mxu0 0.0
    %1161 = vmatpush1.msra.mxu0 0.0
    %1162 = vmatprep.subr.mxu0 0.0
    %1163 = vmatpush1.msra.mxu0 0.0
    %1164 = vmatprep.subr.mxu0 0.0
    %1165 = vmatpush1.msra.mxu0 0.0
    %1166 = vmatprep.subr.mxu0 0.0
    %1167 = vmatpush1.msra.mxu0 0.0
    %1168 = vmatprep.subr.mxu0 0.0
    %1169 = vmatpush1.msra.mxu0 0.0
    %1170 = vmatprep.subr.mxu0 0.0
    %1171 = vmatpush1.msra.mxu0 0.0
    %1172 = vmatprep.subr.mxu0 0.0
    %1173 = vmatpush1.msra.mxu0 0.0
    %1174 = vmatprep.subr.mxu0 0.0
    %1175 = vmatpush1.msra.mxu0 0.0
    %1176 = vmatprep.subr.mxu0 0.0
    %1177 = vmatpush1.msra.mxu0 0.0
    %1178 = vmatprep.subr.mxu0 0.0
    %1179 = vmatpush1.msra.mxu0 0.0
    %1180 = vmatprep.subr.mxu0 0.0
    %1181 = vmatpush1.msra.mxu0 0.0
    %1182 = vmatprep.subr.mxu0 0.0
    %1183 = vmatpush1.msra.mxu0 0.0
    %1184 = vmatprep.subr.mxu0 0.0
    %1185 = vmatpush1.msra.mxu0 0.0
    %1186 = vmatprep.subr.mxu0 0.0
    %1187 = vmatpush1.msra.mxu0 %v1151
    %1188 = vmatprep.subr.mxu0 0.0
    %1189 = vmatpush2.msra.mxu0 0.0
    %1190 = vmatprep.subr.mxu0 0.0
    %1191 = vmatpush2.msra.mxu0 0.0
    %1192 = vmatprep.subr.mxu0 0.0
    %1193 = vmatpush2.msra.mxu0 0.0
    %1194 = vmatprep.subr.mxu0 0.0
    %1195 = vmatpush2.msra.mxu0 0.0
    %1196 = vmatprep.subr.mxu0 0.0
    %1197 = vmatpush2.msra.mxu0 0.0
    %1198 = vmatprep.subr.mxu0 0.0
    %1199 = vmatpush2.msra.mxu0 0.0
    %1200 = vmatprep.subr.mxu0 0.0
    %1201 = vmatpush2.msra.mxu0 0.0
    %1202 = vmatprep.subr.mxu0 0.0
    %1203 = vmatpush2.msra.mxu0 0.0
    %1204 = vmatprep.subr.mxu0 0.0
    %1205 = vmatpush2.msra.mxu0 0.0
    %1206 = vmatprep.subr.mxu0 0.0
    %1207 = vmatpush2.msra.mxu0 0.0
    %1208 = vmatprep.subr.mxu0 0.0
    %1209 = vmatpush2.msra.mxu0 0.0
    %1210 = vmatprep.subr.mxu0 0.0
    %1211 = vmatpush2.msra.mxu0 0.0
    %1212 = vmatprep.subr.mxu0 0.0
    %1213 = vmatpush2.msra.mxu0 0.0
    %1214 = vmatprep.subr.mxu0 0.0
    %1215 = vmatpush2.msra.mxu0 0.0
    %1216 = vmatprep.subr.mxu0 0.0
    %1217 = vmatpush2.msra.mxu0 0.0
    %1218 = vmatprep.subr.mxu0 0.0
    %1219 = vmatpush2.msra.mxu0 0.0
    %1220 = vmatprep.mubr.f32.mxu0 0.0
    %1221 = vmatmul.mubr.f32.gmra.mxu0 %v1154
    %v1222 = vpop.f32.mrf.mxu0
    %v1223 = vadd.f32 0.0, %v1222
    %v1224 = vpop.f32.mrf.mxu0
    %1225 = vdwg.mxu0
    %v1226 = vld [vmem:[#allocation8 + $0x20] sm:$0xff]
    %v1227 = vld [vmem:[#allocation8 + $0x28] sm:$0xff]
    %v1228 = vld [vmem:[#allocation8 + $0x30] sm:$0xff]
    %v1229 = vld [vmem:[#allocation8 + $0x38] sm:$0xff]
    %v1231 = vsel %vm485, %v1146, 0
    %v1234 = vsel %vm485, %v1223, 0
    %1236 = vmatprep.subr.mxu0 0.0
    %1237 = vmatpush1.msra.mxu0 0.0
    %1238 = vmatprep.subr.mxu0 0.0
    %1239 = vmatpush1.msra.mxu0 0.0
    %1240 = vmatprep.subr.mxu0 0.0
    %1241 = vmatpush1.msra.mxu0 0.0
    %1242 = vmatprep.subr.mxu0 0.0
    %1243 = vmatpush1.msra.mxu0 0.0
    %1244 = vmatprep.subr.mxu0 0.0
    %1245 = vmatpush1.msra.mxu0 0.0
    %1246 = vmatprep.subr.mxu0 0.0
    %1247 = vmatpush1.msra.mxu0 0.0
    %1248 = vmatprep.subr.mxu0 0.0
    %1249 = vmatpush1.msra.mxu0 0.0
    %1250 = vmatprep.subr.mxu0 0.0
    %1251 = vmatpush1.msra.mxu0 0.0
    %1252 = vmatprep.subr.mxu0 0.0
    %1253 = vmatpush1.msra.mxu0 0.0
    %1254 = vmatprep.subr.mxu0 0.0
    %1255 = vmatpush1.msra.mxu0 0.0
    %1256 = vmatprep.subr.mxu0 0.0
    %1257 = vmatpush1.msra.mxu0 0.0
    %1258 = vmatprep.subr.mxu0 0.0
    %1259 = vmatpush1.msra.mxu0 0.0
    %1260 = vmatprep.subr.mxu0 0.0
    %1261 = vmatpush1.msra.mxu0 %v1229
    %1262 = vmatprep.subr.mxu0 0.0
    %1263 = vmatpush1.msra.mxu0 %v1228
    %1264 = vmatprep.subr.mxu0 0.0
    %1265 = vmatpush1.msra.mxu0 %v1227
    %1266 = vmatprep.subr.mxu0 0.0
    %1267 = vmatpush1.msra.mxu0 %v1226
    %1268 = vmatprep.subr.mxu0 0.0
    %1269 = vmatpush2.msra.mxu0 0.0
    %1270 = vmatprep.subr.mxu0 0.0
    %1271 = vmatpush2.msra.mxu0 0.0
    %1272 = vmatprep.subr.mxu0 0.0
    %1273 = vmatpush2.msra.mxu0 0.0
    %1274 = vmatprep.subr.mxu0 0.0
    %1275 = vmatpush2.msra.mxu0 0.0
    %1276 = vmatprep.subr.mxu0 0.0
    %1277 = vmatpush2.msra.mxu0 0.0
    %1278 = vmatprep.subr.mxu0 0.0
    %1279 = vmatpush2.msra.mxu0 0.0
    %1280 = vmatprep.subr.mxu0 0.0
    %1281 = vmatpush2.msra.mxu0 0.0
    %1282 = vmatprep.subr.mxu0 0.0
    %1283 = vmatpush2.msra.mxu0 0.0
    %1284 = vmatprep.subr.mxu0 0.0
    %1285 = vmatpush2.msra.mxu0 0.0
    %1286 = vmatprep.subr.mxu0 0.0
    %1287 = vmatpush2.msra.mxu0 0.0
    %1288 = vmatprep.subr.mxu0 0.0
    %1289 = vmatpush2.msra.mxu0 0.0
    %1290 = vmatprep.subr.mxu0 0.0
    %1291 = vmatpush2.msra.mxu0 0.0
    %1292 = vmatprep.subr.mxu0 0.0
    %1293 = vmatpush2.msra.mxu0 0.0
    %1294 = vmatprep.subr.mxu0 0.0
    %1295 = vmatpush2.msra.mxu0 0.0
    %1296 = vmatprep.subr.mxu0 0.0
    %1297 = vmatpush2.msra.mxu0 0.0
    %1298 = vmatprep.subr.mxu0 0.0
    %1299 = vmatpush2.msra.mxu0 0.0
    %1300 = vmatprep.mubr.f32.mxu0 0.0
    %1301 = vmatmul.mubr.f32.gmra.mxu0 %v1231
    %v1302 = vpop.f32.mrf.mxu0
    %v1303 = vadd.f32 0.0, %v1302
    %v1304 = vpop.f32.mrf.mxu0
    %1305 = vmatprep.mubr.f32.mxu0 0.0
    %1306 = vmatmul.mubr.f32.gmra.mxu0 %v1234
    %v1307 = vpop.f32.mrf.mxu0
    %v1308 = vadd.f32 0.0, %v1307
    %v1309 = vpop.f32.mrf.mxu0
    %1310 = vdwg.mxu0
    %v1311 = vadd.f32 %v892, %v1303
    %v1312 = vadd.f32 %v893, %v1308
    %1313 = vrot.lane.b32.xlu0 %v465, 64
    %v1314 = vpop.permute.xlu0 %1313
    %1315 = vrot.lane.b32.xlu0 %v382, 64
    %v1316 = vpop.permute.xlu0 %1315
    %v1317 = vsel %vm485, %v1314, 0
    %v1319 = vsel %vm485, %v1316, 0
    %1321 = vmatprep.subr.mxu0 0.0
    %1322 = vmatpush1.xpose.msra.mxu0 0.0
    %1323 = vmatprep.subr.mxu0 0.0
    %1324 = vmatpush1.xpose.msra.mxu0 0.0
    %1325 = vmatprep.subr.mxu0 0.0
    %1326 = vmatpush1.xpose.msra.mxu0 0.0
    %1327 = vmatprep.subr.mxu0 0.0
    %1328 = vmatpush1.xpose.msra.mxu0 0.0
    %1329 = vmatprep.subr.mxu0 0.0
    %1330 = vmatpush1.xpose.msra.mxu0 0.0
    %1331 = vmatprep.subr.mxu0 0.0
    %1332 = vmatpush1.xpose.msra.mxu0 0.0
    %1333 = vmatprep.subr.mxu0 0.0
    %1334 = vmatpush1.xpose.msra.mxu0 0.0
    %1335 = vmatprep.subr.mxu0 0.0
    %1336 = vmatpush1.xpose.msra.mxu0 0.0
    %1337 = vmatprep.subr.mxu0 0.0
    %1338 = vmatpush1.xpose.msra.mxu0 0.0
    %1339 = vmatprep.subr.mxu0 0.0
    %1340 = vmatpush1.xpose.msra.mxu0 0.0
    %1341 = vmatprep.subr.mxu0 0.0
    %1342 = vmatpush1.xpose.msra.mxu0 0.0
    %1343 = vmatprep.subr.mxu0 0.0
    %1344 = vmatpush1.xpose.msra.mxu0 0.0
    %1345 = vmatprep.subr.mxu0 0.0
    %1346 = vmatpush1.xpose.msra.mxu0 0.0
    %1347 = vmatprep.subr.mxu0 0.0
    %1348 = vmatpush1.xpose.msra.mxu0 0.0
    %1349 = vmatprep.subr.mxu0 0.0
    %1350 = vmatpush1.xpose.msra.mxu0 0.0
    %1351 = vmatprep.subr.mxu0 0.0
    %1352 = vmatpush1.xpose.msra.mxu0 %v1319
    %1353 = vmatprep.subr.mxu0 0.0
    %1354 = vmatpush2.xpose.msra.mxu0 0.0
    %1355 = vmatprep.subr.mxu0 0.0
    %1356 = vmatpush2.xpose.msra.mxu0 0.0
    %1357 = vmatprep.subr.mxu0 0.0
    %1358 = vmatpush2.xpose.msra.mxu0 0.0
    %1359 = vmatprep.subr.mxu0 0.0
    %1360 = vmatpush2.xpose.msra.mxu0 0.0
    %1361 = vmatprep.subr.mxu0 0.0
    %1362 = vmatpush2.xpose.msra.mxu0 0.0
    %1363 = vmatprep.subr.mxu0 0.0
    %1364 = vmatpush2.xpose.msra.mxu0 0.0
    %1365 = vmatprep.subr.mxu0 0.0
    %1366 = vmatpush2.xpose.msra.mxu0 0.0
    %1367 = vmatprep.subr.mxu0 0.0
    %1368 = vmatpush2.xpose.msra.mxu0 0.0
    %1369 = vmatprep.subr.mxu0 0.0
    %1370 = vmatpush2.xpose.msra.mxu0 0.0
    %1371 = vmatprep.subr.mxu0 0.0
    %1372 = vmatpush2.xpose.msra.mxu0 0.0
    %1373 = vmatprep.subr.mxu0 0.0
    %1374 = vmatpush2.xpose.msra.mxu0 0.0
    %1375 = vmatprep.subr.mxu0 0.0
    %1376 = vmatpush2.xpose.msra.mxu0 0.0
    %1377 = vmatprep.subr.mxu0 0.0
    %1378 = vmatpush2.xpose.msra.mxu0 0.0
    %1379 = vmatprep.subr.mxu0 0.0
    %1380 = vmatpush2.xpose.msra.mxu0 0.0
    %1381 = vmatprep.subr.mxu0 0.0
    %1382 = vmatpush2.xpose.msra.mxu0 0.0
    %1383 = vmatprep.subr.mxu0 0.0
    %1384 = vmatpush2.xpose.msra.mxu0 0.0
    %1385 = vmatprep.mubr.f32.mxu0 0.0
    %1386 = vmatmul.mubr.f32.gmra.mxu0 %v1317
    %v1387 = vpop.f32.mrf.mxu0
    %v1388 = vadd.f32 %v478, %v1387
    %v1389 = vpop.f32.mrf.mxu0
    %1390 = vdwg.mxu0
    %1391 = vrot.lane.b32.xlu0 %v466, 64
    %v1392 = vpop.permute.xlu0 %1391
    %1393 = vrot.lane.b32.xlu0 %v388, 64
    %v1394 = vpop.permute.xlu0 %1393
    %v1395 = vsel %vm485, %v1392, 0
    %v1397 = vsel %vm485, %v1394, 0
    %1399 = vmatprep.subr.mxu0 0.0
    %1400 = vmatpush1.xpose.msra.mxu0 0.0
    %1401 = vmatprep.subr.mxu0 0.0
    %1402 = vmatpush1.xpose.msra.mxu0 0.0
    %1403 = vmatprep.subr.mxu0 0.0
    %1404 = vmatpush1.xpose.msra.mxu0 0.0
    %1405 = vmatprep.subr.mxu0 0.0
    %1406 = vmatpush1.xpose.msra.mxu0 0.0
    %1407 = vmatprep.subr.mxu0 0.0
    %1408 = vmatpush1.xpose.msra.mxu0 0.0
    %1409 = vmatprep.subr.mxu0 0.0
    %1410 = vmatpush1.xpose.msra.mxu0 0.0
    %1411 = vmatprep.subr.mxu0 0.0
    %1412 = vmatpush1.xpose.msra.mxu0 0.0
    %1413 = vmatprep.subr.mxu0 0.0
    %1414 = vmatpush1.xpose.msra.mxu0 0.0
    %1415 = vmatprep.subr.mxu0 0.0
    %1416 = vmatpush1.xpose.msra.mxu0 0.0
    %1417 = vmatprep.subr.mxu0 0.0
    %1418 = vmatpush1.xpose.msra.mxu0 0.0
    %1419 = vmatprep.subr.mxu0 0.0
    %1420 = vmatpush1.xpose.msra.mxu0 0.0
    %1421 = vmatprep.subr.mxu0 0.0
    %1422 = vmatpush1.xpose.msra.mxu0 0.0
    %1423 = vmatprep.subr.mxu0 0.0
    %1424 = vmatpush1.xpose.msra.mxu0 0.0
    %1425 = vmatprep.subr.mxu0 0.0
    %1426 = vmatpush1.xpose.msra.mxu0 0.0
    %1427 = vmatprep.subr.mxu0 0.0
    %1428 = vmatpush1.xpose.msra.mxu0 0.0
    %1429 = vmatprep.subr.mxu0 0.0
    %1430 = vmatpush1.xpose.msra.mxu0 %v1397
    %1431 = vmatprep.subr.mxu0 0.0
    %1432 = vmatpush2.xpose.msra.mxu0 0.0
    %1433 = vmatprep.subr.mxu0 0.0
    %1434 = vmatpush2.xpose.msra.mxu0 0.0
    %1435 = vmatprep.subr.mxu0 0.0
    %1436 = vmatpush2.xpose.msra.mxu0 0.0
    %1437 = vmatprep.subr.mxu0 0.0
    %1438 = vmatpush2.xpose.msra.mxu0 0.0
    %1439 = vmatprep.subr.mxu0 0.0
    %1440 = vmatpush2.xpose.msra.mxu0 0.0
    %1441 = vmatprep.subr.mxu0 0.0
    %1442 = vmatpush2.xpose.msra.mxu0 0.0
    %1443 = vmatprep.subr.mxu0 0.0
    %1444 = vmatpush2.xpose.msra.mxu0 0.0
    %1445 = vmatprep.subr.mxu0 0.0
    %1446 = vmatpush2.xpose.msra.mxu0 0.0
    %1447 = vmatprep.subr.mxu0 0.0
    %1448 = vmatpush2.xpose.msra.mxu0 0.0
    %1449 = vmatprep.subr.mxu0 0.0
    %1450 = vmatpush2.xpose.msra.mxu0 0.0
    %1451 = vmatprep.subr.mxu0 0.0
    %1452 = vmatpush2.xpose.msra.mxu0 0.0
    %1453 = vmatprep.subr.mxu0 0.0
    %1454 = vmatpush2.xpose.msra.mxu0 0.0
    %1455 = vmatprep.subr.mxu0 0.0
    %1456 = vmatpush2.xpose.msra.mxu0 0.0
    %1457 = vmatprep.subr.mxu0 0.0
    %1458 = vmatpush2.xpose.msra.mxu0 0.0
    %1459 = vmatprep.subr.mxu0 0.0
    %1460 = vmatpush2.xpose.msra.mxu0 0.0
    %1461 = vmatprep.subr.mxu0 0.0
    %1462 = vmatpush2.xpose.msra.mxu0 0.0
    %1463 = vmatprep.mubr.f32.mxu0 0.0
    %1464 = vmatmul.mubr.f32.gmra.mxu0 %v1395
    %v1465 = vpop.f32.mrf.mxu0
    %v1466 = vadd.f32 %v482, %v1465
    %v1467 = vpop.f32.mrf.mxu0
    %1468 = vdwg.mxu0
    %v1469 = vsel %vm638, %v1388, -inf
    %1470 = vmax.xlane.f32.xlu0 %v1469
    %v1471 = vpop.xlane.xlu0 %1470
    %v1472 = vsel %vm638, %v1466, -inf
    %1473 = vmax.xlane.f32.xlu0 %v1472
    %v1474 = vpop.xlane.xlu0 %1473
    %v1475 = vsub.f32 %v1388, %v1471
    %v1476 = vsub.f32 %v1466, %v1474
    %v1477 = vmul.f32 %v1475, 1.442695
    %v1478 = vpow.pop %v1477
    %v1479 = vmul.f32 %v1476, 1.442695
    %v1480 = vpow.pop %v1479
    %v1481 = vsel %vm638, %v1478, 0.0
    %1482 = vadd.xlane.f32.xlu0 %v1481
    %v1483 = vpop.xlane.xlu0 %1482
    %v1484 = vsel %vm638, %v1480, 0.0
    %1485 = vadd.xlane.f32.xlu0 %v1484
    %v1486 = vpop.xlane.xlu0 %1485
    %v1487 = vrcp.pop %v1483
    %v1488 = vmul.f32 %v1478, %v1487
    %v1489 = vrcp.pop %v1486
    %v1490 = vmul.f32 %v1480, %v1489
    %1491 = vrot.lane.b32.xlu0 %v457, 64
    %v1492 = vpop.permute.xlu0 %1491
    %v1495 = vsel %vm638, %v1488, 0
    %1497 = vmatprep.subr.mxu0 0.0
    %1498 = vmatpush1.msra.mxu0 0.0
    %1499 = vmatprep.subr.mxu0 0.0
    %1500 = vmatpush1.msra.mxu0 0.0
    %1501 = vmatprep.subr.mxu0 0.0
    %1502 = vmatpush1.msra.mxu0 0.0
    %1503 = vmatprep.subr.mxu0 0.0
    %1504 = vmatpush1.msra.mxu0 0.0
    %1505 = vmatprep.subr.mxu0 0.0
    %1506 = vmatpush1.msra.mxu0 0.0
    %1507 = vmatprep.subr.mxu0 0.0
    %1508 = vmatpush1.msra.mxu0 0.0
    %1509 = vmatprep.subr.mxu0 0.0
    %1510 = vmatpush1.msra.mxu0 0.0
    %1511 = vmatprep.subr.mxu0 0.0
    %1512 = vmatpush1.msra.mxu0 0.0
    %1513 = vmatprep.subr.mxu0 0.0
    %1514 = vmatpush1.msra.mxu0 0.0
    %1515 = vmatprep.subr.mxu0 0.0
    %1516 = vmatpush1.msra.mxu0 0.0
    %1517 = vmatprep.subr.mxu0 0.0
    %1518 = vmatpush1.msra.mxu0 0.0
    %1519 = vmatprep.subr.mxu0 0.0
    %1520 = vmatpush1.msra.mxu0 0.0
    %1521 = vmatprep.subr.mxu0 0.0
    %1522 = vmatpush1.msra.mxu0 0.0
    %1523 = vmatprep.subr.mxu0 0.0
    %1524 = vmatpush1.msra.mxu0 0.0
    %1525 = vmatprep.subr.mxu0 0.0
    %1526 = vmatpush1.msra.mxu0 0.0
    %1527 = vmatprep.subr.mxu0 0.0
    %1528 = vmatpush1.msra.mxu0 %v1492
    %1529 = vmatprep.subr.mxu0 0.0
    %1530 = vmatpush2.msra.mxu0 0.0
    %1531 = vmatprep.subr.mxu0 0.0
    %1532 = vmatpush2.msra.mxu0 0.0
    %1533 = vmatprep.subr.mxu0 0.0
    %1534 = vmatpush2.msra.mxu0 0.0
    %1535 = vmatprep.subr.mxu0 0.0
    %1536 = vmatpush2.msra.mxu0 0.0
    %1537 = vmatprep.subr.mxu0 0.0
    %1538 = vmatpush2.msra.mxu0 0.0
    %1539 = vmatprep.subr.mxu0 0.0
    %1540 = vmatpush2.msra.mxu0 0.0
    %1541 = vmatprep.subr.mxu0 0.0
    %1542 = vmatpush2.msra.mxu0 0.0
    %1543 = vmatprep.subr.mxu0 0.0
    %1544 = vmatpush2.msra.mxu0 0.0
    %1545 = vmatprep.subr.mxu0 0.0
    %1546 = vmatpush2.msra.mxu0 0.0
    %1547 = vmatprep.subr.mxu0 0.0
    %1548 = vmatpush2.msra.mxu0 0.0
    %1549 = vmatprep.subr.mxu0 0.0
    %1550 = vmatpush2.msra.mxu0 0.0
    %1551 = vmatprep.subr.mxu0 0.0
    %1552 = vmatpush2.msra.mxu0 0.0
    %1553 = vmatprep.subr.mxu0 0.0
    %1554 = vmatpush2.msra.mxu0 0.0
    %1555 = vmatprep.subr.mxu0 0.0
    %1556 = vmatpush2.msra.mxu0 0.0
    %1557 = vmatprep.subr.mxu0 0.0
    %1558 = vmatpush2.msra.mxu0 0.0
    %1559 = vmatprep.subr.mxu0 0.0
    %1560 = vmatpush2.msra.mxu0 0.0
    %1561 = vmatprep.mubr.f32.mxu0 0.0
    %1562 = vmatmul.mubr.f32.gmra.mxu0 %v1495
    %v1563 = vpop.f32.mrf.mxu0
    %v1564 = vadd.f32 0.0, %v1563
    %v1565 = vpop.f32.mrf.mxu0
    %1566 = vdwg.mxu0
    %1567 = vrot.lane.b32.xlu0 %v462, 64
    %v1568 = vpop.permute.xlu0 %1567
    %v1571 = vsel %vm638, %v1490, 0
    %1573 = vmatprep.subr.mxu0 0.0
    %1574 = vmatpush1.msra.mxu0 0.0
    %1575 = vmatprep.subr.mxu0 0.0
    %1576 = vmatpush1.msra.mxu0 0.0
    %1577 = vmatprep.subr.mxu0 0.0
    %1578 = vmatpush1.msra.mxu0 0.0
    %1579 = vmatprep.subr.mxu0 0.0
    %1580 = vmatpush1.msra.mxu0 0.0
    %1581 = vmatprep.subr.mxu0 0.0
    %1582 = vmatpush1.msra.mxu0 0.0
    %1583 = vmatprep.subr.mxu0 0.0
    %1584 = vmatpush1.msra.mxu0 0.0
    %1585 = vmatprep.subr.mxu0 0.0
    %1586 = vmatpush1.msra.mxu0 0.0
    %1587 = vmatprep.subr.mxu0 0.0
    %1588 = vmatpush1.msra.mxu0 0.0
    %1589 = vmatprep.subr.mxu0 0.0
    %1590 = vmatpush1.msra.mxu0 0.0
    %1591 = vmatprep.subr.mxu0 0.0
    %1592 = vmatpush1.msra.mxu0 0.0
    %1593 = vmatprep.subr.mxu0 0.0
    %1594 = vmatpush1.msra.mxu0 0.0
    %1595 = vmatprep.subr.mxu0 0.0
    %1596 = vmatpush1.msra.mxu0 0.0
    %1597 = vmatprep.subr.mxu0 0.0
    %1598 = vmatpush1.msra.mxu0 0.0
    %1599 = vmatprep.subr.mxu0 0.0
    %1600 = vmatpush1.msra.mxu0 0.0
    %1601 = vmatprep.subr.mxu0 0.0
    %1602 = vmatpush1.msra.mxu0 0.0
    %1603 = vmatprep.subr.mxu0 0.0
    %1604 = vmatpush1.msra.mxu0 %v1568
    %1605 = vmatprep.subr.mxu0 0.0
    %1606 = vmatpush2.msra.mxu0 0.0
    %1607 = vmatprep.subr.mxu0 0.0
    %1608 = vmatpush2.msra.mxu0 0.0
    %1609 = vmatprep.subr.mxu0 0.0
    %1610 = vmatpush2.msra.mxu0 0.0
    %1611 = vmatprep.subr.mxu0 0.0
    %1612 = vmatpush2.msra.mxu0 0.0
    %1613 = vmatprep.subr.mxu0 0.0
    %1614 = vmatpush2.msra.mxu0 0.0
    %1615 = vmatprep.subr.mxu0 0.0
    %1616 = vmatpush2.msra.mxu0 0.0
    %1617 = vmatprep.subr.mxu0 0.0
    %1618 = vmatpush2.msra.mxu0 0.0
    %1619 = vmatprep.subr.mxu0 0.0
    %1620 = vmatpush2.msra.mxu0 0.0
    %1621 = vmatprep.subr.mxu0 0.0
    %1622 = vmatpush2.msra.mxu0 0.0
    %1623 = vmatprep.subr.mxu0 0.0
    %1624 = vmatpush2.msra.mxu0 0.0
    %1625 = vmatprep.subr.mxu0 0.0
    %1626 = vmatpush2.msra.mxu0 0.0
    %1627 = vmatprep.subr.mxu0 0.0
    %1628 = vmatpush2.msra.mxu0 0.0
    %1629 = vmatprep.subr.mxu0 0.0
    %1630 = vmatpush2.msra.mxu0 0.0
    %1631 = vmatprep.subr.mxu0 0.0
    %1632 = vmatpush2.msra.mxu0 0.0
    %1633 = vmatprep.subr.mxu0 0.0
    %1634 = vmatpush2.msra.mxu0 0.0
    %1635 = vmatprep.subr.mxu0 0.0
    %1636 = vmatpush2.msra.mxu0 0.0
    %1637 = vmatprep.mubr.f32.mxu0 0.0
    %1638 = vmatmul.mubr.f32.gmra.mxu0 %v1571
    %v1639 = vpop.f32.mrf.mxu0
    %v1640 = vadd.f32 0.0, %v1639
    %v1641 = vpop.f32.mrf.mxu0
    %1642 = vdwg.mxu0
    %v1643 = vld [vmem:[#allocation8 + $0x40] sm:$0xff]
    %v1644 = vld [vmem:[#allocation8 + $0x48] sm:$0xff]
    %v1645 = vld [vmem:[#allocation8 + $0x50] sm:$0xff]
    %v1646 = vld [vmem:[#allocation8 + $0x58] sm:$0xff]
    %v1648 = vsel %vm485, %v1564, 0
    %v1651 = vsel %vm485, %v1640, 0
    %1653 = vmatprep.subr.mxu0 0.0
    %1654 = vmatpush1.msra.mxu0 0.0
    %1655 = vmatprep.subr.mxu0 0.0
    %1656 = vmatpush1.msra.mxu0 0.0
    %1657 = vmatprep.subr.mxu0 0.0
    %1658 = vmatpush1.msra.mxu0 0.0
    %1659 = vmatprep.subr.mxu0 0.0
    %1660 = vmatpush1.msra.mxu0 0.0
    %1661 = vmatprep.subr.mxu0 0.0
    %1662 = vmatpush1.msra.mxu0 0.0
    %1663 = vmatprep.subr.mxu0 0.0
    %1664 = vmatpush1.msra.mxu0 0.0
    %1665 = vmatprep.subr.mxu0 0.0
    %1666 = vmatpush1.msra.mxu0 0.0
    %1667 = vmatprep.subr.mxu0 0.0
    %1668 = vmatpush1.msra.mxu0 0.0
    %1669 = vmatprep.subr.mxu0 0.0
    %1670 = vmatpush1.msra.mxu0 0.0
    %1671 = vmatprep.subr.mxu0 0.0
    %1672 = vmatpush1.msra.mxu0 0.0
    %1673 = vmatprep.subr.mxu0 0.0
    %1674 = vmatpush1.msra.mxu0 0.0
    %1675 = vmatprep.subr.mxu0 0.0
    %1676 = vmatpush1.msra.mxu0 0.0
    %1677 = vmatprep.subr.mxu0 0.0
    %1678 = vmatpush1.msra.mxu0 %v1646
    %1679 = vmatprep.subr.mxu0 0.0
    %1680 = vmatpush1.msra.mxu0 %v1645
    %1681 = vmatprep.subr.mxu0 0.0
    %1682 = vmatpush1.msra.mxu0 %v1644
    %1683 = vmatprep.subr.mxu0 0.0
    %1684 = vmatpush1.msra.mxu0 %v1643
    %1685 = vmatprep.subr.mxu0 0.0
    %1686 = vmatpush2.msra.mxu0 0.0
    %1687 = vmatprep.subr.mxu0 0.0
    %1688 = vmatpush2.msra.mxu0 0.0
    %1689 = vmatprep.subr.mxu0 0.0
    %1690 = vmatpush2.msra.mxu0 0.0
    %1691 = vmatprep.subr.mxu0 0.0
    %1692 = vmatpush2.msra.mxu0 0.0
    %1693 = vmatprep.subr.mxu0 0.0
    %1694 = vmatpush2.msra.mxu0 0.0
    %1695 = vmatprep.subr.mxu0 0.0
    %1696 = vmatpush2.msra.mxu0 0.0
    %1697 = vmatprep.subr.mxu0 0.0
    %1698 = vmatpush2.msra.mxu0 0.0
    %1699 = vmatprep.subr.mxu0 0.0
    %1700 = vmatpush2.msra.mxu0 0.0
    %1701 = vmatprep.subr.mxu0 0.0
    %1702 = vmatpush2.msra.mxu0 0.0
    %1703 = vmatprep.subr.mxu0 0.0
    %1704 = vmatpush2.msra.mxu0 0.0
    %1705 = vmatprep.subr.mxu0 0.0
    %1706 = vmatpush2.msra.mxu0 0.0
    %1707 = vmatprep.subr.mxu0 0.0
    %1708 = vmatpush2.msra.mxu0 0.0
    %1709 = vmatprep.subr.mxu0 0.0
    %1710 = vmatpush2.msra.mxu0 0.0
    %1711 = vmatprep.subr.mxu0 0.0
    %1712 = vmatpush2.msra.mxu0 0.0
    %1713 = vmatprep.subr.mxu0 0.0
    %1714 = vmatpush2.msra.mxu0 0.0
    %1715 = vmatprep.subr.mxu0 0.0
    %1716 = vmatpush2.msra.mxu0 0.0
    %1717 = vmatprep.mubr.f32.mxu0 0.0
    %1718 = vmatmul.mubr.f32.gmra.mxu0 %v1648
    %v1719 = vpop.f32.mrf.mxu0
    %v1720 = vadd.f32 0.0, %v1719
    %v1721 = vpop.f32.mrf.mxu0
    %1722 = vmatprep.mubr.f32.mxu0 0.0
    %1723 = vmatmul.mubr.f32.gmra.mxu0 %v1651
    %v1724 = vpop.f32.mrf.mxu0
    %v1725 = vadd.f32 0.0, %v1724
    %v1726 = vpop.f32.mrf.mxu0
    %1727 = vdwg.mxu0
    %v1728 = vadd.f32 %v1311, %v1720
    %v1729 = vadd.f32 %v1312, %v1725
    %1730 = vrot.lane.b32.xlu0 %v465, 32
    %v1731 = vpop.permute.xlu0 %1730
    %1732 = vrot.lane.b32.xlu0 %v382, 32
    %v1733 = vpop.permute.xlu0 %1732
    %v1734 = vsel %vm485, %v1731, 0
    %v1736 = vsel %vm485, %v1733, 0
    %1738 = vmatprep.subr.mxu0 0.0
    %1739 = vmatpush1.xpose.msra.mxu0 0.0
    %1740 = vmatprep.subr.mxu0 0.0
    %1741 = vmatpush1.xpose.msra.mxu0 0.0
    %1742 = vmatprep.subr.mxu0 0.0
    %1743 = vmatpush1.xpose.msra.mxu0 0.0
    %1744 = vmatprep.subr.mxu0 0.0
    %1745 = vmatpush1.xpose.msra.mxu0 0.0
    %1746 = vmatprep.subr.mxu0 0.0
    %1747 = vmatpush1.xpose.msra.mxu0 0.0
    %1748 = vmatprep.subr.mxu0 0.0
    %1749 = vmatpush1.xpose.msra.mxu0 0.0
    %1750 = vmatprep.subr.mxu0 0.0
    %1751 = vmatpush1.xpose.msra.mxu0 0.0
    %1752 = vmatprep.subr.mxu0 0.0
    %1753 = vmatpush1.xpose.msra.mxu0 0.0
    %1754 = vmatprep.subr.mxu0 0.0
    %1755 = vmatpush1.xpose.msra.mxu0 0.0
    %1756 = vmatprep.subr.mxu0 0.0
    %1757 = vmatpush1.xpose.msra.mxu0 0.0
    %1758 = vmatprep.subr.mxu0 0.0
    %1759 = vmatpush1.xpose.msra.mxu0 0.0
    %1760 = vmatprep.subr.mxu0 0.0
    %1761 = vmatpush1.xpose.msra.mxu0 0.0
    %1762 = vmatprep.subr.mxu0 0.0
    %1763 = vmatpush1.xpose.msra.mxu0 0.0
    %1764 = vmatprep.subr.mxu0 0.0
    %1765 = vmatpush1.xpose.msra.mxu0 0.0
    %1766 = vmatprep.subr.mxu0 0.0
    %1767 = vmatpush1.xpose.msra.mxu0 0.0
    %1768 = vmatprep.subr.mxu0 0.0
    %1769 = vmatpush1.xpose.msra.mxu0 %v1736
    %1770 = vmatprep.subr.mxu0 0.0
    %1771 = vmatpush2.xpose.msra.mxu0 0.0
    %1772 = vmatprep.subr.mxu0 0.0
    %1773 = vmatpush2.xpose.msra.mxu0 0.0
    %1774 = vmatprep.subr.mxu0 0.0
    %1775 = vmatpush2.xpose.msra.mxu0 0.0
    %1776 = vmatprep.subr.mxu0 0.0
    %1777 = vmatpush2.xpose.msra.mxu0 0.0
    %1778 = vmatprep.subr.mxu0 0.0
    %1779 = vmatpush2.xpose.msra.mxu0 0.0
    %1780 = vmatprep.subr.mxu0 0.0
    %1781 = vmatpush2.xpose.msra.mxu0 0.0
    %1782 = vmatprep.subr.mxu0 0.0
    %1783 = vmatpush2.xpose.msra.mxu0 0.0
    %1784 = vmatprep.subr.mxu0 0.0
    %1785 = vmatpush2.xpose.msra.mxu0 0.0
    %1786 = vmatprep.subr.mxu0 0.0
    %1787 = vmatpush2.xpose.msra.mxu0 0.0
    %1788 = vmatprep.subr.mxu0 0.0
    %1789 = vmatpush2.xpose.msra.mxu0 0.0
    %1790 = vmatprep.subr.mxu0 0.0
    %1791 = vmatpush2.xpose.msra.mxu0 0.0
    %1792 = vmatprep.subr.mxu0 0.0
    %1793 = vmatpush2.xpose.msra.mxu0 0.0
    %1794 = vmatprep.subr.mxu0 0.0
    %1795 = vmatpush2.xpose.msra.mxu0 0.0
    %1796 = vmatprep.subr.mxu0 0.0
    %1797 = vmatpush2.xpose.msra.mxu0 0.0
    %1798 = vmatprep.subr.mxu0 0.0
    %1799 = vmatpush2.xpose.msra.mxu0 0.0
    %1800 = vmatprep.subr.mxu0 0.0
    %1801 = vmatpush2.xpose.msra.mxu0 0.0
    %1802 = vmatprep.mubr.f32.mxu0 0.0
    %1803 = vmatmul.mubr.f32.gmra.mxu0 %v1734
    %v1804 = vpop.f32.mrf.mxu0
    %v1805 = vadd.f32 %v478, %v1804
    %v1806 = vpop.f32.mrf.mxu0
    %1807 = vdwg.mxu0
    %1808 = vrot.lane.b32.xlu0 %v466, 32
    %v1809 = vpop.permute.xlu0 %1808
    %1810 = vrot.lane.b32.xlu0 %v388, 32
    %v1811 = vpop.permute.xlu0 %1810
    %v1812 = vsel %vm485, %v1809, 0
    %v1814 = vsel %vm485, %v1811, 0
    %1816 = vmatprep.subr.mxu0 0.0
    %1817 = vmatpush1.xpose.msra.mxu0 0.0
    %1818 = vmatprep.subr.mxu0 0.0
    %1819 = vmatpush1.xpose.msra.mxu0 0.0
    %1820 = vmatprep.subr.mxu0 0.0
    %1821 = vmatpush1.xpose.msra.mxu0 0.0
    %1822 = vmatprep.subr.mxu0 0.0
    %1823 = vmatpush1.xpose.msra.mxu0 0.0
    %1824 = vmatprep.subr.mxu0 0.0
    %1825 = vmatpush1.xpose.msra.mxu0 0.0
    %1826 = vmatprep.subr.mxu0 0.0
    %1827 = vmatpush1.xpose.msra.mxu0 0.0
    %1828 = vmatprep.subr.mxu0 0.0
    %1829 = vmatpush1.xpose.msra.mxu0 0.0
    %1830 = vmatprep.subr.mxu0 0.0
    %1831 = vmatpush1.xpose.msra.mxu0 0.0
    %1832 = vmatprep.subr.mxu0 0.0
    %1833 = vmatpush1.xpose.msra.mxu0 0.0
    %1834 = vmatprep.subr.mxu0 0.0
    %1835 = vmatpush1.xpose.msra.mxu0 0.0
    %1836 = vmatprep.subr.mxu0 0.0
    %1837 = vmatpush1.xpose.msra.mxu0 0.0
    %1838 = vmatprep.subr.mxu0 0.0
    %1839 = vmatpush1.xpose.msra.mxu0 0.0
    %1840 = vmatprep.subr.mxu0 0.0
    %1841 = vmatpush1.xpose.msra.mxu0 0.0
    %1842 = vmatprep.subr.mxu0 0.0
    %1843 = vmatpush1.xpose.msra.mxu0 0.0
    %1844 = vmatprep.subr.mxu0 0.0
    %1845 = vmatpush1.xpose.msra.mxu0 0.0
    %1846 = vmatprep.subr.mxu0 0.0
    %1847 = vmatpush1.xpose.msra.mxu0 %v1814
    %1848 = vmatprep.subr.mxu0 0.0
    %1849 = vmatpush2.xpose.msra.mxu0 0.0
    %1850 = vmatprep.subr.mxu0 0.0
    %1851 = vmatpush2.xpose.msra.mxu0 0.0
    %1852 = vmatprep.subr.mxu0 0.0
    %1853 = vmatpush2.xpose.msra.mxu0 0.0
    %1854 = vmatprep.subr.mxu0 0.0
    %1855 = vmatpush2.xpose.msra.mxu0 0.0
    %1856 = vmatprep.subr.mxu0 0.0
    %1857 = vmatpush2.xpose.msra.mxu0 0.0
    %1858 = vmatprep.subr.mxu0 0.0
    %1859 = vmatpush2.xpose.msra.mxu0 0.0
    %1860 = vmatprep.subr.mxu0 0.0
    %1861 = vmatpush2.xpose.msra.mxu0 0.0
    %1862 = vmatprep.subr.mxu0 0.0
    %1863 = vmatpush2.xpose.msra.mxu0 0.0
    %1864 = vmatprep.subr.mxu0 0.0
    %1865 = vmatpush2.xpose.msra.mxu0 0.0
    %1866 = vmatprep.subr.mxu0 0.0
    %1867 = vmatpush2.xpose.msra.mxu0 0.0
    %1868 = vmatprep.subr.mxu0 0.0
    %1869 = vmatpush2.xpose.msra.mxu0 0.0
    %1870 = vmatprep.subr.mxu0 0.0
    %1871 = vmatpush2.xpose.msra.mxu0 0.0
    %1872 = vmatprep.subr.mxu0 0.0
    %1873 = vmatpush2.xpose.msra.mxu0 0.0
    %1874 = vmatprep.subr.mxu0 0.0
    %1875 = vmatpush2.xpose.msra.mxu0 0.0
    %1876 = vmatprep.subr.mxu0 0.0
    %1877 = vmatpush2.xpose.msra.mxu0 0.0
    %1878 = vmatprep.subr.mxu0 0.0
    %1879 = vmatpush2.xpose.msra.mxu0 0.0
    %1880 = vmatprep.mubr.f32.mxu0 0.0
    %1881 = vmatmul.mubr.f32.gmra.mxu0 %v1812
    %v1882 = vpop.f32.mrf.mxu0
    %v1883 = vadd.f32 %v482, %v1882
    %v1884 = vpop.f32.mrf.mxu0
    %1885 = vdwg.mxu0
    %v1886 = vsel %vm638, %v1805, -inf
    %1887 = vmax.xlane.f32.xlu0 %v1886
    %v1888 = vpop.xlane.xlu0 %1887
    %v1889 = vsel %vm638, %v1883, -inf
    %1890 = vmax.xlane.f32.xlu0 %v1889
    %v1891 = vpop.xlane.xlu0 %1890
    %v1892 = vsub.f32 %v1805, %v1888
    %v1893 = vsub.f32 %v1883, %v1891
    %v1894 = vmul.f32 %v1892, 1.442695
    %v1895 = vpow.pop %v1894
    %v1896 = vmul.f32 %v1893, 1.442695
    %v1897 = vpow.pop %v1896
    %v1898 = vsel %vm638, %v1895, 0.0
    %1899 = vadd.xlane.f32.xlu0 %v1898
    %v1900 = vpop.xlane.xlu0 %1899
    %v1901 = vsel %vm638, %v1897, 0.0
    %1902 = vadd.xlane.f32.xlu0 %v1901
    %v1903 = vpop.xlane.xlu0 %1902
    %v1904 = vrcp.pop %v1900
    %v1905 = vmul.f32 %v1895, %v1904
    %v1906 = vrcp.pop %v1903
    %v1907 = vmul.f32 %v1897, %v1906
    %1908 = vrot.lane.b32.xlu0 %v457, 32
    %v1909 = vpop.permute.xlu0 %1908
    %v1912 = vsel %vm638, %v1905, 0
    %1914 = vmatprep.subr.mxu0 0.0
    %1915 = vmatpush1.msra.mxu0 0.0
    %1916 = vmatprep.subr.mxu0 0.0
    %1917 = vmatpush1.msra.mxu0 0.0
    %1918 = vmatprep.subr.mxu0 0.0
    %1919 = vmatpush1.msra.mxu0 0.0
    %1920 = vmatprep.subr.mxu0 0.0
    %1921 = vmatpush1.msra.mxu0 0.0
    %1922 = vmatprep.subr.mxu0 0.0
    %1923 = vmatpush1.msra.mxu0 0.0
    %1924 = vmatprep.subr.mxu0 0.0
    %1925 = vmatpush1.msra.mxu0 0.0
    %1926 = vmatprep.subr.mxu0 0.0
    %1927 = vmatpush1.msra.mxu0 0.0
    %1928 = vmatprep.subr.mxu0 0.0
    %1929 = vmatpush1.msra.mxu0 0.0
    %1930 = vmatprep.subr.mxu0 0.0
    %1931 = vmatpush1.msra.mxu0 0.0
    %1932 = vmatprep.subr.mxu0 0.0
    %1933 = vmatpush1.msra.mxu0 0.0
    %1934 = vmatprep.subr.mxu0 0.0
    %1935 = vmatpush1.msra.mxu0 0.0
    %1936 = vmatprep.subr.mxu0 0.0
    %1937 = vmatpush1.msra.mxu0 0.0
    %1938 = vmatprep.subr.mxu0 0.0
    %1939 = vmatpush1.msra.mxu0 0.0
    %1940 = vmatprep.subr.mxu0 0.0
    %1941 = vmatpush1.msra.mxu0 0.0
    %1942 = vmatprep.subr.mxu0 0.0
    %1943 = vmatpush1.msra.mxu0 0.0
    %1944 = vmatprep.subr.mxu0 0.0
    %1945 = vmatpush1.msra.mxu0 %v1909
    %1946 = vmatprep.subr.mxu0 0.0
    %1947 = vmatpush2.msra.mxu0 0.0
    %1948 = vmatprep.subr.mxu0 0.0
    %1949 = vmatpush2.msra.mxu0 0.0
    %1950 = vmatprep.subr.mxu0 0.0
    %1951 = vmatpush2.msra.mxu0 0.0
    %1952 = vmatprep.subr.mxu0 0.0
    %1953 = vmatpush2.msra.mxu0 0.0
    %1954 = vmatprep.subr.mxu0 0.0
    %1955 = vmatpush2.msra.mxu0 0.0
    %1956 = vmatprep.subr.mxu0 0.0
    %1957 = vmatpush2.msra.mxu0 0.0
    %1958 = vmatprep.subr.mxu0 0.0
    %1959 = vmatpush2.msra.mxu0 0.0
    %1960 = vmatprep.subr.mxu0 0.0
    %1961 = vmatpush2.msra.mxu0 0.0
    %1962 = vmatprep.subr.mxu0 0.0
    %1963 = vmatpush2.msra.mxu0 0.0
    %1964 = vmatprep.subr.mxu0 0.0
    %1965 = vmatpush2.msra.mxu0 0.0
    %1966 = vmatprep.subr.mxu0 0.0
    %1967 = vmatpush2.msra.mxu0 0.0
    %1968 = vmatprep.subr.mxu0 0.0
    %1969 = vmatpush2.msra.mxu0 0.0
    %1970 = vmatprep.subr.mxu0 0.0
    %1971 = vmatpush2.msra.mxu0 0.0
    %1972 = vmatprep.subr.mxu0 0.0
    %1973 = vmatpush2.msra.mxu0 0.0
    %1974 = vmatprep.subr.mxu0 0.0
    %1975 = vmatpush2.msra.mxu0 0.0
    %1976 = vmatprep.subr.mxu0 0.0
    %1977 = vmatpush2.msra.mxu0 0.0
    %1978 = vmatprep.mubr.f32.mxu0 0.0
    %1979 = vmatmul.mubr.f32.gmra.mxu0 %v1912
    %v1980 = vpop.f32.mrf.mxu0
    %v1981 = vadd.f32 0.0, %v1980
    %v1982 = vpop.f32.mrf.mxu0
    %1983 = vdwg.mxu0
    %1984 = vrot.lane.b32.xlu0 %v462, 32
    %v1985 = vpop.permute.xlu0 %1984
    %v1988 = vsel %vm638, %v1907, 0
    %1990 = vmatprep.subr.mxu0 0.0
    %1991 = vmatpush1.msra.mxu0 0.0
    %1992 = vmatprep.subr.mxu0 0.0
    %1993 = vmatpush1.msra.mxu0 0.0
    %1994 = vmatprep.subr.mxu0 0.0
    %1995 = vmatpush1.msra.mxu0 0.0
    %1996 = vmatprep.subr.mxu0 0.0
    %1997 = vmatpush1.msra.mxu0 0.0
    %1998 = vmatprep.subr.mxu0 0.0
    %1999 = vmatpush1.msra.mxu0 0.0
    %2000 = vmatprep.subr.mxu0 0.0
    %2001 = vmatpush1.msra.mxu0 0.0
    %2002 = vmatprep.subr.mxu0 0.0
    %2003 = vmatpush1.msra.mxu0 0.0
    %2004 = vmatprep.subr.mxu0 0.0
    %2005 = vmatpush1.msra.mxu0 0.0
    %2006 = vmatprep.subr.mxu0 0.0
    %2007 = vmatpush1.msra.mxu0 0.0
    %2008 = vmatprep.subr.mxu0 0.0
    %2009 = vmatpush1.msra.mxu0 0.0
    %2010 = vmatprep.subr.mxu0 0.0
    %2011 = vmatpush1.msra.mxu0 0.0
    %2012 = vmatprep.subr.mxu0 0.0
    %2013 = vmatpush1.msra.mxu0 0.0
    %2014 = vmatprep.subr.mxu0 0.0
    %2015 = vmatpush1.msra.mxu0 0.0
    %2016 = vmatprep.subr.mxu0 0.0
    %2017 = vmatpush1.msra.mxu0 0.0
    %2018 = vmatprep.subr.mxu0 0.0
    %2019 = vmatpush1.msra.mxu0 0.0
    %2020 = vmatprep.subr.mxu0 0.0
    %2021 = vmatpush1.msra.mxu0 %v1985
    %2022 = vmatprep.subr.mxu0 0.0
    %2023 = vmatpush2.msra.mxu0 0.0
    %2024 = vmatprep.subr.mxu0 0.0
    %2025 = vmatpush2.msra.mxu0 0.0
    %2026 = vmatprep.subr.mxu0 0.0
    %2027 = vmatpush2.msra.mxu0 0.0
    %2028 = vmatprep.subr.mxu0 0.0
    %2029 = vmatpush2.msra.mxu0 0.0
    %2030 = vmatprep.subr.mxu0 0.0
    %2031 = vmatpush2.msra.mxu0 0.0
    %2032 = vmatprep.subr.mxu0 0.0
    %2033 = vmatpush2.msra.mxu0 0.0
    %2034 = vmatprep.subr.mxu0 0.0
    %2035 = vmatpush2.msra.mxu0 0.0
    %2036 = vmatprep.subr.mxu0 0.0
    %2037 = vmatpush2.msra.mxu0 0.0
    %2038 = vmatprep.subr.mxu0 0.0
    %2039 = vmatpush2.msra.mxu0 0.0
    %2040 = vmatprep.subr.mxu0 0.0
    %2041 = vmatpush2.msra.mxu0 0.0
    %2042 = vmatprep.subr.mxu0 0.0
    %2043 = vmatpush2.msra.mxu0 0.0
    %2044 = vmatprep.subr.mxu0 0.0
    %2045 = vmatpush2.msra.mxu0 0.0
    %2046 = vmatprep.subr.mxu0 0.0
    %2047 = vmatpush2.msra.mxu0 0.0
    %2048 = vmatprep.subr.mxu0 0.0
    %2049 = vmatpush2.msra.mxu0 0.0
    %2050 = vmatprep.subr.mxu0 0.0
    %2051 = vmatpush2.msra.mxu0 0.0
    %2052 = vmatprep.subr.mxu0 0.0
    %2053 = vmatpush2.msra.mxu0 0.0
    %2054 = vmatprep.mubr.f32.mxu0 0.0
    %2055 = vmatmul.mubr.f32.gmra.mxu0 %v1988
    %v2056 = vpop.f32.mrf.mxu0
    %v2057 = vadd.f32 0.0, %v2056
    %v2058 = vpop.f32.mrf.mxu0
    %2059 = vdwg.mxu0
    %v2060 = vld [vmem:[#allocation8 + $0x60] sm:$0xff]
    %v2061 = vld [vmem:[#allocation8 + $0x68] sm:$0xff]
    %v2062 = vld [vmem:[#allocation8 + $0x70] sm:$0xff]
    %v2063 = vld [vmem:[#allocation8 + $0x78] sm:$0xff]
    %v2065 = vsel %vm485, %v1981, 0
    %v2068 = vsel %vm485, %v2057, 0
    %2070 = vmatprep.subr.mxu0 0.0
    %2071 = vmatpush1.msra.mxu0 0.0
    %2072 = vmatprep.subr.mxu0 0.0
    %2073 = vmatpush1.msra.mxu0 0.0
    %2074 = vmatprep.subr.mxu0 0.0
    %2075 = vmatpush1.msra.mxu0 0.0
    %2076 = vmatprep.subr.mxu0 0.0
    %2077 = vmatpush1.msra.mxu0 0.0
    %2078 = vmatprep.subr.mxu0 0.0
    %2079 = vmatpush1.msra.mxu0 0.0
    %2080 = vmatprep.subr.mxu0 0.0
    %2081 = vmatpush1.msra.mxu0 0.0
    %2082 = vmatprep.subr.mxu0 0.0
    %2083 = vmatpush1.msra.mxu0 0.0
    %2084 = vmatprep.subr.mxu0 0.0
    %2085 = vmatpush1.msra.mxu0 0.0
    %2086 = vmatprep.subr.mxu0 0.0
    %2087 = vmatpush1.msra.mxu0 0.0
    %2088 = vmatprep.subr.mxu0 0.0
    %2089 = vmatpush1.msra.mxu0 0.0
    %2090 = vmatprep.subr.mxu0 0.0
    %2091 = vmatpush1.msra.mxu0 0.0
    %2092 = vmatprep.subr.mxu0 0.0
    %2093 = vmatpush1.msra.mxu0 0.0
    %2094 = vmatprep.subr.mxu0 0.0
    %2095 = vmatpush1.msra.mxu0 %v2063
    %2096 = vmatprep.subr.mxu0 0.0
    %2097 = vmatpush1.msra.mxu0 %v2062
    %2098 = vmatprep.subr.mxu0 0.0
    %2099 = vmatpush1.msra.mxu0 %v2061
    %2100 = vmatprep.subr.mxu0 0.0
    %2101 = vmatpush1.msra.mxu0 %v2060
    %2102 = vmatprep.subr.mxu0 0.0
    %2103 = vmatpush2.msra.mxu0 0.0
    %2104 = vmatprep.subr.mxu0 0.0
    %2105 = vmatpush2.msra.mxu0 0.0
    %2106 = vmatprep.subr.mxu0 0.0
    %2107 = vmatpush2.msra.mxu0 0.0
    %2108 = vmatprep.subr.mxu0 0.0
    %2109 = vmatpush2.msra.mxu0 0.0
    %2110 = vmatprep.subr.mxu0 0.0
    %2111 = vmatpush2.msra.mxu0 0.0
    %2112 = vmatprep.subr.mxu0 0.0
    %2113 = vmatpush2.msra.mxu0 0.0
    %2114 = vmatprep.subr.mxu0 0.0
    %2115 = vmatpush2.msra.mxu0 0.0
    %2116 = vmatprep.subr.mxu0 0.0
    %2117 = vmatpush2.msra.mxu0 0.0
    %2118 = vmatprep.subr.mxu0 0.0
    %2119 = vmatpush2.msra.mxu0 0.0
    %2120 = vmatprep.subr.mxu0 0.0
    %2121 = vmatpush2.msra.mxu0 0.0
    %2122 = vmatprep.subr.mxu0 0.0
    %2123 = vmatpush2.msra.mxu0 0.0
    %2124 = vmatprep.subr.mxu0 0.0
    %2125 = vmatpush2.msra.mxu0 0.0
    %2126 = vmatprep.subr.mxu0 0.0
    %2127 = vmatpush2.msra.mxu0 0.0
    %2128 = vmatprep.subr.mxu0 0.0
    %2129 = vmatpush2.msra.mxu0 0.0
    %2130 = vmatprep.subr.mxu0 0.0
    %2131 = vmatpush2.msra.mxu0 0.0
    %2132 = vmatprep.subr.mxu0 0.0
    %2133 = vmatpush2.msra.mxu0 0.0
    %2134 = vmatprep.mubr.f32.mxu0 0.0
    %2135 = vmatmul.mubr.f32.gmra.mxu0 %v2065
    %v2136 = vpop.f32.mrf.mxu0
    %v2137 = vadd.f32 0.0, %v2136
    %v2138 = vpop.f32.mrf.mxu0
    %2139 = vmatprep.mubr.f32.mxu0 0.0
    %2140 = vmatmul.mubr.f32.gmra.mxu0 %v2068
    %v2141 = vpop.f32.mrf.mxu0
    %v2142 = vadd.f32 0.0, %v2141
    %v2143 = vpop.f32.mrf.mxu0
    %2144 = vdwg.mxu0
    %v2145 = vadd.f32 %v1728, %v2137
    %v2146 = vadd.f32 %v1729, %v2142
    %v2147 = vadd.f32 %v2145, %v221
    %v2148 = vadd.f32 %v2146, %v222
    %v2149 = vld [vmem:[#allocation11] sm:$0x1]
    %v2150 = vld [vmem:[#allocation12] sm:$0x1]
    %2151 = vadd.xlane.f32.xlu0 %v2147
    %v2152 = vpop.xlane.xlu0 %2151
    %2153 = vadd.xlane.f32.xlu0 %v2148
    %v2154 = vpop.xlane.xlu0 %2153
    %v2155 = vrcp.pop 128.0
    %v2156 = vmul.f32 %v2152, %v2155
    %v2157 = vmul.f32 %v2154, %v2155
    %v2158 = vsub.f32 %v2147, %v2156
    %v2159 = vsub.f32 %v2148, %v2157
    %v2160 = vmul.f32 %v2158, %v2158
    %v2161 = vmul.f32 %v2159, %v2159
    %2162 = vadd.xlane.f32.xlu0 %v2160
    %v2163 = vpop.xlane.xlu0 %2162
    %2164 = vadd.xlane.f32.xlu0 %v2161
    %v2165 = vpop.xlane.xlu0 %2164
    %v2166 = vmul.f32 %v2163, %v2155
    %v2167 = vmul.f32 %v2165, %v2155
    %v2168 = vadd.f32 %v2166, 1e-06
    %v2169 = vadd.f32 %v2167, 1e-06
    %v2170 = vrsqrt.pop %v2168
    %v2171 = vrsqrt.pop %v2169
    %v2172 = vmul.f32 %v2158, %v2170
    %v2173 = vmul.f32 %v2159, %v2171
    %v2175 = vlaneseq
    %v2176 = vshrl.u32 %v2175, 7
    %v2177 = vsub.s32 0, %v2176
    %v2178 = vrot.slane %v2149, %v2177
    %v2180 = vmul.f32 %v2172, %v2178
    %v2181 = vmul.f32 %v2173, %v2178
    %v2183 = vlaneseq
    %v2184 = vshrl.u32 %v2183, 7
    %v2185 = vsub.s32 0, %v2184
    %v2186 = vrot.slane %v2150, %v2185
    %v2188 = vadd.f32 %v2180, %v2186
    %v2189 = vadd.f32 %v2181, %v2186
    %v2190 = vld [vmem:[#allocation14] sm:$0xff]
    %v2191 = vld [vmem:[#allocation14 + $0x8] sm:$0xff]
    %v2192 = vld [vmem:[#allocation14 + $0x10] sm:$0xff]
    %v2193 = vld [vmem:[#allocation14 + $0x18] sm:$0xff]
    %v2194 = vld [vmem:[#allocation14 + $0x20] sm:$0xff]
    %v2195 = vld [vmem:[#allocation14 + $0x28] sm:$0xff]
    %v2196 = vld [vmem:[#allocation14 + $0x30] sm:$0xff]
    %v2197 = vld [vmem:[#allocation14 + $0x38] sm:$0xff]
    %v2198 = vld [vmem:[#allocation14 + $0x40] sm:$0xff]
    %v2199 = vld [vmem:[#allocation14 + $0x48] sm:$0xff]
    %v2200 = vld [vmem:[#allocation14 + $0x50] sm:$0xff]
    %v2201 = vld [vmem:[#allocation14 + $0x58] sm:$0xff]
    %v2202 = vld [vmem:[#allocation14 + $0x60] sm:$0xff]
    %v2203 = vld [vmem:[#allocation14 + $0x68] sm:$0xff]
    %v2204 = vld [vmem:[#allocation14 + $0x70] sm:$0xff]
    %v2205 = vld [vmem:[#allocation14 + $0x78] sm:$0xff]
    %v2206 = vld [vmem:[#allocation14 + $0x80] sm:$0xff]
    %v2207 = vld [vmem:[#allocation14 + $0x88] sm:$0xff]
    %v2208 = vld [vmem:[#allocation14 + $0x90] sm:$0xff]
    %v2209 = vld [vmem:[#allocation14 + $0x98] sm:$0xff]
    %v2210 = vld [vmem:[#allocation14 + $0xa0] sm:$0xff]
    %v2211 = vld [vmem:[#allocation14 + $0xa8] sm:$0xff]
    %v2212 = vld [vmem:[#allocation14 + $0xb0] sm:$0xff]
    %v2213 = vld [vmem:[#allocation14 + $0xb8] sm:$0xff]
    %v2214 = vld [vmem:[#allocation14 + $0xc0] sm:$0xff]
    %v2215 = vld [vmem:[#allocation14 + $0xc8] sm:$0xff]
    %v2216 = vld [vmem:[#allocation14 + $0xd0] sm:$0xff]
    %v2217 = vld [vmem:[#allocation14 + $0xd8] sm:$0xff]
    %v2218 = vld [vmem:[#allocation14 + $0xe0] sm:$0xff]
    %v2219 = vld [vmem:[#allocation14 + $0xe8] sm:$0xff]
    %v2220 = vld [vmem:[#allocation14 + $0xf0] sm:$0xff]
    %v2221 = vld [vmem:[#allocation14 + $0xf8] sm:$0xff]
    %v2222 = vld [vmem:[#allocation15] sm:$0x3]
    %v2224 = vlaneseq
    %v2225 = vshrl.u32 %v2224, 7
    %v2226 = vsub.s32 0, %v2225
    %v2227 = vrot.slane %v2222, %v2226
    %v2228 = vlaneseq
    %v2229 = vshrl.u32 %v2228, 7
    %v2230 = vsub.s32 1, %v2229
    %v2231 = vrot.slane %v2222, %v2230
    %2234 = vmatprep.subr.mxu0 %v2221
    %2235 = vmatpush1.msra.mxu0 %v2220
    %2236 = vmatprep.subr.mxu0 %v2219
    %2237 = vmatpush1.msra.mxu0 %v2218
    %2238 = vmatprep.subr.mxu0 %v2217
    %2239 = vmatpush1.msra.mxu0 %v2216
    %2240 = vmatprep.subr.mxu0 %v2215
    %2241 = vmatpush1.msra.mxu0 %v2214
    %2242 = vmatprep.subr.mxu0 %v2213
    %2243 = vmatpush1.msra.mxu0 %v2212
    %2244 = vmatprep.subr.mxu0 %v2211
    %2245 = vmatpush1.msra.mxu0 %v2210
    %2246 = vmatprep.subr.mxu0 %v2209
    %2247 = vmatpush1.msra.mxu0 %v2208
    %2248 = vmatprep.subr.mxu0 %v2207
    %2249 = vmatpush1.msra.mxu0 %v2206
    %2250 = vmatprep.subr.mxu0 %v2205
    %2251 = vmatpush1.msra.mxu0 %v2204
    %2252 = vmatprep.subr.mxu0 %v2203
    %2253 = vmatpush1.msra.mxu0 %v2202
    %2254 = vmatprep.subr.mxu0 %v2201
    %2255 = vmatpush1.msra.mxu0 %v2200
    %2256 = vmatprep.subr.mxu0 %v2199
    %2257 = vmatpush1.msra.mxu0 %v2198
    %2258 = vmatprep.subr.mxu0 %v2197
    %2259 = vmatpush1.msra.mxu0 %v2196
    %2260 = vmatprep.subr.mxu0 %v2195
    %2261 = vmatpush1.msra.mxu0 %v2194
    %2262 = vmatprep.subr.mxu0 %v2193
    %2263 = vmatpush1.msra.mxu0 %v2192
    %2264 = vmatprep.subr.mxu0 %v2191
    %2265 = vmatpush1.msra.mxu0 %v2190
    %2266 = vmatprep.subr.mxu0 0.0
    %2267 = vmatpush2.msra.mxu0 0.0
    %2268 = vmatprep.subr.mxu0 0.0
    %2269 = vmatpush2.msra.mxu0 0.0
    %2270 = vmatprep.subr.mxu0 0.0
    %2271 = vmatpush2.msra.mxu0 0.0
    %2272 = vmatprep.subr.mxu0 0.0
    %2273 = vmatpush2.msra.mxu0 0.0
    %2274 = vmatprep.subr.mxu0 0.0
    %2275 = vmatpush2.msra.mxu0 0.0
    %2276 = vmatprep.subr.mxu0 0.0
    %2277 = vmatpush2.msra.mxu0 0.0
    %2278 = vmatprep.subr.mxu0 0.0
    %2279 = vmatpush2.msra.mxu0 0.0
    %2280 = vmatprep.subr.mxu0 0.0
    %2281 = vmatpush2.msra.mxu0 0.0
    %2282 = vmatprep.subr.mxu0 0.0
    %2283 = vmatpush2.msra.mxu0 0.0
    %2284 = vmatprep.subr.mxu0 0.0
    %2285 = vmatpush2.msra.mxu0 0.0
    %2286 = vmatprep.subr.mxu0 0.0
    %2287 = vmatpush2.msra.mxu0 0.0
    %2288 = vmatprep.subr.mxu0 0.0
    %2289 = vmatpush2.msra.mxu0 0.0
    %2290 = vmatprep.subr.mxu0 0.0
    %2291 = vmatpush2.msra.mxu0 0.0
    %2292 = vmatprep.subr.mxu0 0.0
    %2293 = vmatpush2.msra.mxu0 0.0
    %2294 = vmatprep.subr.mxu0 0.0
    %2295 = vmatpush2.msra.mxu0 0.0
    %2296 = vmatprep.subr.mxu0 0.0
    %2297 = vmatpush2.msra.mxu0 0.0
    %2298 = vmatprep.mubr.f32.mxu0 0.0
    %2299 = vmatmul.mubr.f32.gmra.mxu0 %v2188
    %v2300 = vpop.f32.mrf.mxu0
    %v2301 = vadd.f32 %v2227, %v2300
    %v2302 = vpop.f32.mrf.mxu0
    %v2303 = vadd.f32 %v2231, %v2302
    %2304 = vmatprep.mubr.f32.mxu0 0.0
    %2305 = vmatmul.mubr.f32.gmra.mxu0 %v2189
    %v2306 = vpop.f32.mrf.mxu0
    %v2307 = vadd.f32 %v2227, %v2306
    %v2308 = vpop.f32.mrf.mxu0
    %v2309 = vadd.f32 %v2231, %v2308
    %2310 = vdwg.mxu0
    %v2311 = vmul.f32 %v2301, 0.5
    %v2312 = vmul.f32 %v2303, 0.5
    %v2313 = vmul.f32 %v2307, 0.5
    %v2314 = vmul.f32 %v2309, 0.5
    %v2315 = vmul.f32 %v2301, 0.044715
    %v2316 = vmul.f32 %v2303, 0.044715
    %v2317 = vmul.f32 %v2307, 0.044715
    %v2318 = vmul.f32 %v2309, 0.044715
    %v2319 = vmul.f32 %v2315, %v2301
    %v2320 = vmul.f32 %v2316, %v2303
    %v2321 = vmul.f32 %v2317, %v2307
    %v2322 = vmul.f32 %v2318, %v2309
    %v2323 = vmul.f32 %v2319, %v2301
    %v2324 = vmul.f32 %v2320, %v2303
    %v2325 = vmul.f32 %v2321, %v2307
    %v2326 = vmul.f32 %v2322, %v2309
    %v2327 = vadd.f32 %v2301, %v2323
    %v2328 = vadd.f32 %v2303, %v2324
    %v2329 = vadd.f32 %v2307, %v2325
    %v2330 = vadd.f32 %v2309, %v2326
    %v2331 = vmul.f32 %v2327, 0.7978846
    %v2332 = vmul.f32 %v2328, 0.7978846
    %v2333 = vmul.f32 %v2329, 0.7978846
    %v2334 = vmul.f32 %v2330, 0.7978846
    %v2335 = vtanh.pop %v2331
    %v2336 = vtanh.pop %v2332
    %v2337 = vtanh.pop %v2333
    %v2338 = vtanh.pop %v2334
    %v2339 = vadd.f32 %v2335, 1.0
    %v2340 = vadd.f32 %v2336, 1.0
    %v2341 = vadd.f32 %v2337, 1.0
    %v2342 = vadd.f32 %v2338, 1.0
    %v2343 = vmul.f32 %v2311, %v2339
    %v2344 = vmul.f32 %v2312, %v2340
    %v2345 = vmul.f32 %v2313, %v2341
    %v2346 = vmul.f32 %v2314, %v2342
    %v2347 = vld [vmem:[#allocation17] sm:$0xff]
    %v2348 = vld [vmem:[#allocation17 + $0x8] sm:$0xff]
    %v2349 = vld [vmem:[#allocation17 + $0x10] sm:$0xff]
    %v2350 = vld [vmem:[#allocation17 + $0x18] sm:$0xff]
    %v2351 = vld [vmem:[#allocation17 + $0x20] sm:$0xff]
    %v2352 = vld [vmem:[#allocation17 + $0x28] sm:$0xff]
    %v2353 = vld [vmem:[#allocation17 + $0x30] sm:$0xff]
    %v2354 = vld [vmem:[#allocation17 + $0x38] sm:$0xff]
    %v2355 = vld [vmem:[#allocation17 + $0x40] sm:$0xff]
    %v2356 = vld [vmem:[#allocation17 + $0x48] sm:$0xff]
    %v2357 = vld [vmem:[#allocation17 + $0x50] sm:$0xff]
    %v2358 = vld [vmem:[#allocation17 + $0x58] sm:$0xff]
    %v2359 = vld [vmem:[#allocation17 + $0x60] sm:$0xff]
    %v2360 = vld [vmem:[#allocation17 + $0x68] sm:$0xff]
    %v2361 = vld [vmem:[#allocation17 + $0x70] sm:$0xff]
    %v2362 = vld [vmem:[#allocation17 + $0x78] sm:$0xff]
    %v2363 = vld [vmem:[#allocation17 + $0x80] sm:$0xff]
    %v2364 = vld [vmem:[#allocation17 + $0x88] sm:$0xff]
    %v2365 = vld [vmem:[#allocation17 + $0x90] sm:$0xff]
    %v2366 = vld [vmem:[#allocation17 + $0x98] sm:$0xff]
    %v2367 = vld [vmem:[#allocation17 + $0xa0] sm:$0xff]
    %v2368 = vld [vmem:[#allocation17 + $0xa8] sm:$0xff]
    %v2369 = vld [vmem:[#allocation17 + $0xb0] sm:$0xff]
    %v2370 = vld [vmem:[#allocation17 + $0xb8] sm:$0xff]
    %v2371 = vld [vmem:[#allocation17 + $0xc0] sm:$0xff]
    %v2372 = vld [vmem:[#allocation17 + $0xc8] sm:$0xff]
    %v2373 = vld [vmem:[#allocation17 + $0xd0] sm:$0xff]
    %v2374 = vld [vmem:[#allocation17 + $0xd8] sm:$0xff]
    %v2375 = vld [vmem:[#allocation17 + $0xe0] sm:$0xff]
    %v2376 = vld [vmem:[#allocation17 + $0xe8] sm:$0xff]
    %v2377 = vld [vmem:[#allocation17 + $0xf0] sm:$0xff]
    %v2378 = vld [vmem:[#allocation17 + $0xf8] sm:$0xff]
    %v2379 = vld [vmem:[#allocation18] sm:$0x1]
    %v2381 = vlaneseq
    %v2382 = vshrl.u32 %v2381, 7
    %v2383 = vsub.s32 0, %v2382
    %v2384 = vrot.slane %v2379, %v2383
    %2386 = vmatprep.subr.mxu0 0.0
    %2387 = vmatpush1.msra.mxu0 %v2362
    %2388 = vmatprep.subr.mxu0 0.0
    %2389 = vmatpush1.msra.mxu0 %v2361
    %2390 = vmatprep.subr.mxu0 0.0
    %2391 = vmatpush1.msra.mxu0 %v2360
    %2392 = vmatprep.subr.mxu0 0.0
    %2393 = vmatpush1.msra.mxu0 %v2359
    %2394 = vmatprep.subr.mxu0 0.0
    %2395 = vmatpush1.msra.mxu0 %v2358
    %2396 = vmatprep.subr.mxu0 0.0
    %2397 = vmatpush1.msra.mxu0 %v2357
    %2398 = vmatprep.subr.mxu0 0.0
    %2399 = vmatpush1.msra.mxu0 %v2356
    %2400 = vmatprep.subr.mxu0 0.0
    %2401 = vmatpush1.msra.mxu0 %v2355
    %2402 = vmatprep.subr.mxu0 0.0
    %2403 = vmatpush1.msra.mxu0 %v2354
    %2404 = vmatprep.subr.mxu0 0.0
    %2405 = vmatpush1.msra.mxu0 %v2353
    %2406 = vmatprep.subr.mxu0 0.0
    %2407 = vmatpush1.msra.mxu0 %v2352
    %2408 = vmatprep.subr.mxu0 0.0
    %2409 = vmatpush1.msra.mxu0 %v2351
    %2410 = vmatprep.subr.mxu0 0.0
    %2411 = vmatpush1.msra.mxu0 %v2350
    %2412 = vmatprep.subr.mxu0 0.0
    %2413 = vmatpush1.msra.mxu0 %v2349
    %2414 = vmatprep.subr.mxu0 0.0
    %2415 = vmatpush1.msra.mxu0 %v2348
    %2416 = vmatprep.subr.mxu0 0.0
    %2417 = vmatpush1.msra.mxu0 %v2347
    %2418 = vmatprep.subr.mxu0 0.0
    %2419 = vmatpush2.msra.mxu0 %v2378
    %2420 = vmatprep.subr.mxu0 0.0
    %2421 = vmatpush2.msra.mxu0 %v2377
    %2422 = vmatprep.subr.mxu0 0.0
    %2423 = vmatpush2.msra.mxu0 %v2376
    %2424 = vmatprep.subr.mxu0 0.0
    %2425 = vmatpush2.msra.mxu0 %v2375
    %2426 = vmatprep.subr.mxu0 0.0
    %2427 = vmatpush2.msra.mxu0 %v2374
    %2428 = vmatprep.subr.mxu0 0.0
    %2429 = vmatpush2.msra.mxu0 %v2373
    %2430 = vmatprep.subr.mxu0 0.0
    %2431 = vmatpush2.msra.mxu0 %v2372
    %2432 = vmatprep.subr.mxu0 0.0
    %2433 = vmatpush2.msra.mxu0 %v2371
    %2434 = vmatprep.subr.mxu0 0.0
    %2435 = vmatpush2.msra.mxu0 %v2370
    %2436 = vmatprep.subr.mxu0 0.0
    %2437 = vmatpush2.msra.mxu0 %v2369
    %2438 = vmatprep.subr.mxu0 0.0
    %2439 = vmatpush2.msra.mxu0 %v2368
    %2440 = vmatprep.subr.mxu0 0.0
    %2441 = vmatpush2.msra.mxu0 %v2367
    %2442 = vmatprep.subr.mxu0 0.0
    %2443 = vmatpush2.msra.mxu0 %v2366
    %2444 = vmatprep.subr.mxu0 0.0
    %2445 = vmatpush2.msra.mxu0 %v2365
    %2446 = vmatprep.subr.mxu0 0.0
    %2447 = vmatpush2.msra.mxu0 %v2364
    %2448 = vmatprep.subr.mxu0 0.0
    %2449 = vmatpush2.msra.mxu0 %v2363
    %2450 = vmatprep.mubr.f32.mxu0 %v2344
    %2451 = vmatmul.mubr.f32.gmra.mxu0 %v2343
    %v2452 = vpop.f32.mrf.mxu0
    %v2453 = vadd.f32 %v2384, %v2452
    %v2454 = vpop.f32.mrf.mxu0
    %2455 = vmatprep.mubr.f32.mxu0 %v2346
    %2456 = vmatmul.mubr.f32.gmra.mxu0 %v2345
    %v2457 = vpop.f32.mrf.mxu0
    %v2458 = vadd.f32 %v2384, %v2457
    %v2459 = vpop.f32.mrf.mxu0
    %2460 = vdwg.mxu0
    %v2461 = vadd.f32 %v2453, %v2147
    %v2462 = vadd.f32 %v2458, %v2148
    %s2463 = scalar_lea.vmem %s3, 1
    %v2464 = vld [vmem:[%s2463] sm:$0x1]
    %s2465 = scalar_lea.vmem [#allocation3], 1
    %v2466 = vld [vmem:[%s2465] sm:$0x1]
    %2467 = vadd.xlane.f32.xlu0 %v2461
    %v2468 = vpop.xlane.xlu0 %2467
    %2469 = vadd.xlane.f32.xlu0 %v2462
    %v2470 = vpop.xlane.xlu0 %2469
    %v2471 = vmul.f32 %v2468, %v2155
    %v2472 = vmul.f32 %v2470, %v2155
    %v2473 = vsub.f32 %v2461, %v2471
    %v2474 = vsub.f32 %v2462, %v2472
    %v2475 = vmul.f32 %v2473, %v2473
    %v2476 = vmul.f32 %v2474, %v2474
    %2477 = vadd.xlane.f32.xlu0 %v2475
    %v2478 = vpop.xlane.xlu0 %2477
    %2479 = vadd.xlane.f32.xlu0 %v2476
    %v2480 = vpop.xlane.xlu0 %2479
    %v2481 = vmul.f32 %v2478, %v2155
    %v2482 = vmul.f32 %v2480, %v2155
    %v2483 = vadd.f32 %v2481, 1e-06
    %v2484 = vadd.f32 %v2482, 1e-06
    %v2485 = vrsqrt.pop %v2483
    %v2486 = vrsqrt.pop %v2484
    %v2487 = vmul.f32 %v2473, %v2485
    %v2488 = vmul.f32 %v2474, %v2486
    %v2490 = vlaneseq
    %v2491 = vshrl.u32 %v2490, 7
    %v2492 = vsub.s32 0, %v2491
    %v2493 = vrot.slane %v2464, %v2492
    %v2495 = vmul.f32 %v2487, %v2493
    %v2496 = vmul.f32 %v2488, %v2493
    %v2498 = vlaneseq
    %v2499 = vshrl.u32 %v2498, 7
    %v2500 = vsub.s32 0, %v2499
    %v2501 = vrot.slane %v2466, %v2500
    %v2503 = vadd.f32 %v2495, %v2501
    %v2504 = vadd.f32 %v2496, %v2501
    %s2505 = scalar_lea.vmem [#allocation6], 384
    %v2506 = vld [vmem:[%s2505] sm:$0xff]
    %v2507 = vld [vmem:[%s2505 + $0x8] sm:$0xff]
    %v2508 = vld [vmem:[%s2505 + $0x10] sm:$0xff]
    %v2509 = vld [vmem:[%s2505 + $0x18] sm:$0xff]
    %v2510 = vld [vmem:[%s2505 + $0x20] sm:$0xff]
    %v2511 = vld [vmem:[%s2505 + $0x28] sm:$0xff]
    %v2512 = vld [vmem:[%s2505 + $0x30] sm:$0xff]
    %v2513 = vld [vmem:[%s2505 + $0x38] sm:$0xff]
    %v2514 = vld [vmem:[%s2505 + $0x40] sm:$0xff]
    %v2515 = vld [vmem:[%s2505 + $0x48] sm:$0xff]
    %v2516 = vld [vmem:[%s2505 + $0x50] sm:$0xff]
    %v2517 = vld [vmem:[%s2505 + $0x58] sm:$0xff]
    %v2518 = vld [vmem:[%s2505 + $0x60] sm:$0xff]
    %v2519 = vld [vmem:[%s2505 + $0x68] sm:$0xff]
    %v2520 = vld [vmem:[%s2505 + $0x70] sm:$0xff]
    %v2521 = vld [vmem:[%s2505 + $0x78] sm:$0xff]
    %v2522 = vld [vmem:[%s2505 + $0x80] sm:$0xff]
    %v2523 = vld [vmem:[%s2505 + $0x88] sm:$0xff]
    %v2524 = vld [vmem:[%s2505 + $0x90] sm:$0xff]
    %v2525 = vld [vmem:[%s2505 + $0x98] sm:$0xff]
    %v2526 = vld [vmem:[%s2505 + $0xa0] sm:$0xff]
    %v2527 = vld [vmem:[%s2505 + $0xa8] sm:$0xff]
    %v2528 = vld [vmem:[%s2505 + $0xb0] sm:$0xff]
    %v2529 = vld [vmem:[%s2505 + $0xb8] sm:$0xff]
    %v2530 = vld [vmem:[%s2505 + $0xc0] sm:$0xff]
    %v2531 = vld [vmem:[%s2505 + $0xc8] sm:$0xff]
    %v2532 = vld [vmem:[%s2505 + $0xd0] sm:$0xff]
    %v2533 = vld [vmem:[%s2505 + $0xd8] sm:$0xff]
    %v2534 = vld [vmem:[%s2505 + $0xe0] sm:$0xff]
    %v2535 = vld [vmem:[%s2505 + $0xe8] sm:$0xff]
    %v2536 = vld [vmem:[%s2505 + $0xf0] sm:$0xff]
    %v2537 = vld [vmem:[%s2505 + $0xf8] sm:$0xff]
    %v2538 = vld [vmem:[%s2505 + $0x100] sm:$0xff]
    %v2539 = vld [vmem:[%s2505 + $0x108] sm:$0xff]
    %v2540 = vld [vmem:[%s2505 + $0x110] sm:$0xff]
    %v2541 = vld [vmem:[%s2505 + $0x118] sm:$0xff]
    %v2542 = vld [vmem:[%s2505 + $0x120] sm:$0xff]
    %v2543 = vld [vmem:[%s2505 + $0x128] sm:$0xff]
    %v2544 = vld [vmem:[%s2505 + $0x130] sm:$0xff]
    %v2545 = vld [vmem:[%s2505 + $0x138] sm:$0xff]
    %v2546 = vld [vmem:[%s2505 + $0x140] sm:$0xff]
    %v2547 = vld [vmem:[%s2505 + $0x148] sm:$0xff]
    %v2548 = vld [vmem:[%s2505 + $0x150] sm:$0xff]
    %v2549 = vld [vmem:[%s2505 + $0x158] sm:$0xff]
    %v2550 = vld [vmem:[%s2505 + $0x160] sm:$0xff]
    %v2551 = vld [vmem:[%s2505 + $0x168] sm:$0xff]
    %v2552 = vld [vmem:[%s2505 + $0x170] sm:$0xff]
    %v2553 = vld [vmem:[%s2505 + $0x178] sm:$0xff]
    %s2554 = scalar_lea.vmem %s6, 3
    %v2555 = vld [vmem:[%s2554] sm:$0x7]
    %v2557 = vlaneseq
    %v2558 = vshrl.u32 %v2557, 7
    %v2559 = vsub.s32 0, %v2558
    %v2560 = vrot.slane %v2555, %v2559
    %v2561 = vlaneseq
    %v2562 = vshrl.u32 %v2561, 7
    %v2563 = vsub.s32 1, %v2562
    %v2564 = vrot.slane %v2555, %v2563
    %v2565 = vlaneseq
    %v2566 = vshrl.u32 %v2565, 7
    %v2567 = vsub.s32 2, %v2566
    %v2568 = vrot.slane %v2555, %v2567
    %2572 = vmatprep.subr.mxu0 %v2552
    %2573 = vmatpush1.msra.mxu0 %v2551
    %2574 = vmatprep.subr.mxu0 %v2549
    %2575 = vmatpush1.msra.mxu0 %v2548
    %2576 = vmatprep.subr.mxu0 %v2546
    %2577 = vmatpush1.msra.mxu0 %v2545
    %2578 = vmatprep.subr.mxu0 %v2543
    %2579 = vmatpush1.msra.mxu0 %v2542
    %2580 = vmatprep.subr.mxu0 %v2540
    %2581 = vmatpush1.msra.mxu0 %v2539
    %2582 = vmatprep.subr.mxu0 %v2537
    %2583 = vmatpush1.msra.mxu0 %v2536
    %2584 = vmatprep.subr.mxu0 %v2534
    %2585 = vmatpush1.msra.mxu0 %v2533
    %2586 = vmatprep.subr.mxu0 %v2531
    %2587 = vmatpush1.msra.mxu0 %v2530
    %2588 = vmatprep.subr.mxu0 %v2528
    %2589 = vmatpush1.msra.mxu0 %v2527
    %2590 = vmatprep.subr.mxu0 %v2525
    %2591 = vmatpush1.msra.mxu0 %v2524
    %2592 = vmatprep.subr.mxu0 %v2522
    %2593 = vmatpush1.msra.mxu0 %v2521
    %2594 = vmatprep.subr.mxu0 %v2519
    %2595 = vmatpush1.msra.mxu0 %v2518
    %2596 = vmatprep.subr.mxu0 %v2516
    %2597 = vmatpush1.msra.mxu0 %v2515
    %2598 = vmatprep.subr.mxu0 %v2513
    %2599 = vmatpush1.msra.mxu0 %v2512
    %2600 = vmatprep.subr.mxu0 %v2510
    %2601 = vmatpush1.msra.mxu0 %v2509
    %2602 = vmatprep.subr.mxu0 %v2507
    %2603 = vmatpush1.msra.mxu0 %v2506
    %2604 = vmatprep.subr.mxu0 0.0
    %2605 = vmatpush2.msra.mxu0 0.0
    %2606 = vmatprep.subr.mxu0 0.0
    %2607 = vmatpush2.msra.mxu0 0.0
    %2608 = vmatprep.subr.mxu0 0.0
    %2609 = vmatpush2.msra.mxu0 0.0
    %2610 = vmatprep.subr.mxu0 0.0
    %2611 = vmatpush2.msra.mxu0 0.0
    %2612 = vmatprep.subr.mxu0 0.0
    %2613 = vmatpush2.msra.mxu0 0.0
    %2614 = vmatprep.subr.mxu0 0.0
    %2615 = vmatpush2.msra.mxu0 0.0
    %2616 = vmatprep.subr.mxu0 0.0
    %2617 = vmatpush2.msra.mxu0 0.0
    %2618 = vmatprep.subr.mxu0 0.0
    %2619 = vmatpush2.msra.mxu0 0.0
    %2620 = vmatprep.subr.mxu0 0.0
    %2621 = vmatpush2.msra.mxu0 0.0
    %2622 = vmatprep.subr.mxu0 0.0
    %2623 = vmatpush2.msra.mxu0 0.0
    %2624 = vmatprep.subr.mxu0 0.0
    %2625 = vmatpush2.msra.mxu0 0.0
    %2626 = vmatprep.subr.mxu0 0.0
    %2627 = vmatpush2.msra.mxu0 0.0
    %2628 = vmatprep.subr.mxu0 0.0
    %2629 = vmatpush2.msra.mxu0 0.0
    %2630 = vmatprep.subr.mxu0 0.0
    %2631 = vmatpush2.msra.mxu0 0.0
    %2632 = vmatprep.subr.mxu0 0.0
    %2633 = vmatpush2.msra.mxu0 0.0
    %2634 = vmatprep.subr.mxu0 0.0
    %2635 = vmatpush2.msra.mxu0 0.0
    %2636 = vmatprep.mubr.f32.mxu0 0.0
    %2637 = vmatmul.mubr.f32.gmra.mxu0 %v2503
    %v2638 = vpop.f32.mrf.mxu0
    %v2639 = vadd.f32 %v2560, %v2638
    %v2640 = vpop.f32.mrf.mxu0
    %v2641 = vadd.f32 %v2564, %v2640
    %2642 = vmatprep.mubr.f32.mxu0 0.0
    %2643 = vmatmul.mubr.f32.gmra.mxu0 %v2504
    %v2644 = vpop.f32.mrf.mxu0
    %v2645 = vadd.f32 %v2560, %v2644
    %v2646 = vpop.f32.mrf.mxu0
    %v2647 = vadd.f32 %v2564, %v2646
    %2648 = vdwg.mxu0
    %2649 = vmatprep.subr.mxu0 0.0
    %2650 = vmatpush1.msra.mxu0 %v2553
    %2651 = vmatprep.subr.mxu0 0.0
    %2652 = vmatpush1.msra.mxu0 %v2550
    %2653 = vmatprep.subr.mxu0 0.0
    %2654 = vmatpush1.msra.mxu0 %v2547
    %2655 = vmatprep.subr.mxu0 0.0
    %2656 = vmatpush1.msra.mxu0 %v2544
    %2657 = vmatprep.subr.mxu0 0.0
    %2658 = vmatpush1.msra.mxu0 %v2541
    %2659 = vmatprep.subr.mxu0 0.0
    %2660 = vmatpush1.msra.mxu0 %v2538
    %2661 = vmatprep.subr.mxu0 0.0
    %2662 = vmatpush1.msra.mxu0 %v2535
    %2663 = vmatprep.subr.mxu0 0.0
    %2664 = vmatpush1.msra.mxu0 %v2532
    %2665 = vmatprep.subr.mxu0 0.0
    %2666 = vmatpush1.msra.mxu0 %v2529
    %2667 = vmatprep.subr.mxu0 0.0
    %2668 = vmatpush1.msra.mxu0 %v2526
    %2669 = vmatprep.subr.mxu0 0.0
    %2670 = vmatpush1.msra.mxu0 %v2523
    %2671 = vmatprep.subr.mxu0 0.0
    %2672 = vmatpush1.msra.mxu0 %v2520
    %2673 = vmatprep.subr.mxu0 0.0
    %2674 = vmatpush1.msra.mxu0 %v2517
    %2675 = vmatprep.subr.mxu0 0.0
    %2676 = vmatpush1.msra.mxu0 %v2514
    %2677 = vmatprep.subr.mxu0 0.0
    %2678 = vmatpush1.msra.mxu0 %v2511
    %2679 = vmatprep.subr.mxu0 0.0
    %2680 = vmatpush1.msra.mxu0 %v2508
    %2681 = vmatprep.subr.mxu0 0.0
    %2682 = vmatpush2.msra.mxu0 0.0
    %2683 = vmatprep.subr.mxu0 0.0
    %2684 = vmatpush2.msra.mxu0 0.0
    %2685 = vmatprep.subr.mxu0 0.0
    %2686 = vmatpush2.msra.mxu0 0.0
    %2687 = vmatprep.subr.mxu0 0.0
    %2688 = vmatpush2.msra.mxu0 0.0
    %2689 = vmatprep.subr.mxu0 0.0
    %2690 = vmatpush2.msra.mxu0 0.0
    %2691 = vmatprep.subr.mxu0 0.0
    %2692 = vmatpush2.msra.mxu0 0.0
    %2693 = vmatprep.subr.mxu0 0.0
    %2694 = vmatpush2.msra.mxu0 0.0
    %2695 = vmatprep.subr.mxu0 0.0
    %2696 = vmatpush2.msra.mxu0 0.0
    %2697 = vmatprep.subr.mxu0 0.0
    %2698 = vmatpush2.msra.mxu0 0.0
    %2699 = vmatprep.subr.mxu0 0.0
    %2700 = vmatpush2.msra.mxu0 0.0
    %2701 = vmatprep.subr.mxu0 0.0
    %2702 = vmatpush2.msra.mxu0 0.0
    %2703 = vmatprep.subr.mxu0 0.0
    %2704 = vmatpush2.msra.mxu0 0.0
    %2705 = vmatprep.subr.mxu0 0.0
    %2706 = vmatpush2.msra.mxu0 0.0
    %2707 = vmatprep.subr.mxu0 0.0
    %2708 = vmatpush2.msra.mxu0 0.0
    %2709 = vmatprep.subr.mxu0 0.0
    %2710 = vmatpush2.msra.mxu0 0.0
    %2711 = vmatprep.subr.mxu0 0.0
    %2712 = vmatpush2.msra.mxu0 0.0
    %2713 = vmatprep.mubr.f32.mxu0 0.0
    %2714 = vmatmul.mubr.f32.gmra.mxu0 %v2503
    %v2715 = vpop.f32.mrf.mxu0
    %v2716 = vadd.f32 %v2568, %v2715
    %v2717 = vpop.f32.mrf.mxu0
    %2718 = vmatprep.mubr.f32.mxu0 0.0
    %2719 = vmatmul.mubr.f32.gmra.mxu0 %v2504
    %v2720 = vpop.f32.mrf.mxu0
    %v2721 = vadd.f32 %v2568, %v2720
    %v2722 = vpop.f32.mrf.mxu0
    %2723 = vdwg.mxu0
    %v2724 = vmul.f32 %v2639, 0.17677669
    %v2725 = vmul.f32 %v2645, 0.17677669
    %s2726 = scalar_lea.vmem [#allocation9], 1
    %v2727 = vld [vmem:[%s2726] sm:$0x1]
    %v2729 = vlaneseq
    %v2730 = vshrl.u32 %v2729, 7
    %v2731 = vsub.s32 0, %v2730
    %v2732 = vrot.slane %v2727, %v2731
    %v2734 = vadd.f32 %v2732, 0.0
    %v2736 = vsel %vm485, %v2724, 0
    %v2739 = vsel %vm485, %v2641, 0
    %2741 = vmatprep.subr.mxu0 0.0
    %2742 = vmatpush1.xpose.msra.mxu0 0.0
    %2743 = vmatprep.subr.mxu0 0.0
    %2744 = vmatpush1.xpose.msra.mxu0 0.0
    %2745 = vmatprep.subr.mxu0 0.0
    %2746 = vmatpush1.xpose.msra.mxu0 0.0
    %2747 = vmatprep.subr.mxu0 0.0
    %2748 = vmatpush1.xpose.msra.mxu0 0.0
    %2749 = vmatprep.subr.mxu0 0.0
    %2750 = vmatpush1.xpose.msra.mxu0 0.0
    %2751 = vmatprep.subr.mxu0 0.0
    %2752 = vmatpush1.xpose.msra.mxu0 0.0
    %2753 = vmatprep.subr.mxu0 0.0
    %2754 = vmatpush1.xpose.msra.mxu0 0.0
    %2755 = vmatprep.subr.mxu0 0.0
    %2756 = vmatpush1.xpose.msra.mxu0 0.0
    %2757 = vmatprep.subr.mxu0 0.0
    %2758 = vmatpush1.xpose.msra.mxu0 0.0
    %2759 = vmatprep.subr.mxu0 0.0
    %2760 = vmatpush1.xpose.msra.mxu0 0.0
    %2761 = vmatprep.subr.mxu0 0.0
    %2762 = vmatpush1.xpose.msra.mxu0 0.0
    %2763 = vmatprep.subr.mxu0 0.0
    %2764 = vmatpush1.xpose.msra.mxu0 0.0
    %2765 = vmatprep.subr.mxu0 0.0
    %2766 = vmatpush1.xpose.msra.mxu0 0.0
    %2767 = vmatprep.subr.mxu0 0.0
    %2768 = vmatpush1.xpose.msra.mxu0 0.0
    %2769 = vmatprep.subr.mxu0 0.0
    %2770 = vmatpush1.xpose.msra.mxu0 0.0
    %2771 = vmatprep.subr.mxu0 0.0
    %2772 = vmatpush1.xpose.msra.mxu0 %v2739
    %2773 = vmatprep.subr.mxu0 0.0
    %2774 = vmatpush2.xpose.msra.mxu0 0.0
    %2775 = vmatprep.subr.mxu0 0.0
    %2776 = vmatpush2.xpose.msra.mxu0 0.0
    %2777 = vmatprep.subr.mxu0 0.0
    %2778 = vmatpush2.xpose.msra.mxu0 0.0
    %2779 = vmatprep.subr.mxu0 0.0
    %2780 = vmatpush2.xpose.msra.mxu0 0.0
    %2781 = vmatprep.subr.mxu0 0.0
    %2782 = vmatpush2.xpose.msra.mxu0 0.0
    %2783 = vmatprep.subr.mxu0 0.0
    %2784 = vmatpush2.xpose.msra.mxu0 0.0
    %2785 = vmatprep.subr.mxu0 0.0
    %2786 = vmatpush2.xpose.msra.mxu0 0.0
    %2787 = vmatprep.subr.mxu0 0.0
    %2788 = vmatpush2.xpose.msra.mxu0 0.0
    %2789 = vmatprep.subr.mxu0 0.0
    %2790 = vmatpush2.xpose.msra.mxu0 0.0
    %2791 = vmatprep.subr.mxu0 0.0
    %2792 = vmatpush2.xpose.msra.mxu0 0.0
    %2793 = vmatprep.subr.mxu0 0.0
    %2794 = vmatpush2.xpose.msra.mxu0 0.0
    %2795 = vmatprep.subr.mxu0 0.0
    %2796 = vmatpush2.xpose.msra.mxu0 0.0
    %2797 = vmatprep.subr.mxu0 0.0
    %2798 = vmatpush2.xpose.msra.mxu0 0.0
    %2799 = vmatprep.subr.mxu0 0.0
    %2800 = vmatpush2.xpose.msra.mxu0 0.0
    %2801 = vmatprep.subr.mxu0 0.0
    %2802 = vmatpush2.xpose.msra.mxu0 0.0
    %2803 = vmatprep.subr.mxu0 0.0
    %2804 = vmatpush2.xpose.msra.mxu0 0.0
    %2805 = vmatprep.mubr.f32.mxu0 0.0
    %2806 = vmatmul.mubr.f32.gmra.mxu0 %v2736
    %v2807 = vpop.f32.mrf.mxu0
    %v2808 = vadd.f32 %v478, %v2807
    %v2809 = vpop.f32.mrf.mxu0
    %2810 = vdwg.mxu0
    %v2812 = vsel %vm485, %v2725, 0
    %v2815 = vsel %vm485, %v2647, 0
    %2817 = vmatprep.subr.mxu0 0.0
    %2818 = vmatpush1.xpose.msra.mxu0 0.0
    %2819 = vmatprep.subr.mxu0 0.0
    %2820 = vmatpush1.xpose.msra.mxu0 0.0
    %2821 = vmatprep.subr.mxu0 0.0
    %2822 = vmatpush1.xpose.msra.mxu0 0.0
    %2823 = vmatprep.subr.mxu0 0.0
    %2824 = vmatpush1.xpose.msra.mxu0 0.0
    %2825 = vmatprep.subr.mxu0 0.0
    %2826 = vmatpush1.xpose.msra.mxu0 0.0
    %2827 = vmatprep.subr.mxu0 0.0
    %2828 = vmatpush1.xpose.msra.mxu0 0.0
    %2829 = vmatprep.subr.mxu0 0.0
    %2830 = vmatpush1.xpose.msra.mxu0 0.0
    %2831 = vmatprep.subr.mxu0 0.0
    %2832 = vmatpush1.xpose.msra.mxu0 0.0
    %2833 = vmatprep.subr.mxu0 0.0
    %2834 = vmatpush1.xpose.msra.mxu0 0.0
    %2835 = vmatprep.subr.mxu0 0.0
    %2836 = vmatpush1.xpose.msra.mxu0 0.0
    %2837 = vmatprep.subr.mxu0 0.0
    %2838 = vmatpush1.xpose.msra.mxu0 0.0
    %2839 = vmatprep.subr.mxu0 0.0
    %2840 = vmatpush1.xpose.msra.mxu0 0.0
    %2841 = vmatprep.subr.mxu0 0.0
    %2842 = vmatpush1.xpose.msra.mxu0 0.0
    %2843 = vmatprep.subr.mxu0 0.0
    %2844 = vmatpush1.xpose.msra.mxu0 0.0
    %2845 = vmatprep.subr.mxu0 0.0
    %2846 = vmatpush1.xpose.msra.mxu0 0.0
    %2847 = vmatprep.subr.mxu0 0.0
    %2848 = vmatpush1.xpose.msra.mxu0 %v2815
    %2849 = vmatprep.subr.mxu0 0.0
    %2850 = vmatpush2.xpose.msra.mxu0 0.0
    %2851 = vmatprep.subr.mxu0 0.0
    %2852 = vmatpush2.xpose.msra.mxu0 0.0
    %2853 = vmatprep.subr.mxu0 0.0
    %2854 = vmatpush2.xpose.msra.mxu0 0.0
    %2855 = vmatprep.subr.mxu0 0.0
    %2856 = vmatpush2.xpose.msra.mxu0 0.0
    %2857 = vmatprep.subr.mxu0 0.0
    %2858 = vmatpush2.xpose.msra.mxu0 0.0
    %2859 = vmatprep.subr.mxu0 0.0
    %2860 = vmatpush2.xpose.msra.mxu0 0.0
    %2861 = vmatprep.subr.mxu0 0.0
    %2862 = vmatpush2.xpose.msra.mxu0 0.0
    %2863 = vmatprep.subr.mxu0 0.0
    %2864 = vmatpush2.xpose.msra.mxu0 0.0
    %2865 = vmatprep.subr.mxu0 0.0
    %2866 = vmatpush2.xpose.msra.mxu0 0.0
    %2867 = vmatprep.subr.mxu0 0.0
    %2868 = vmatpush2.xpose.msra.mxu0 0.0
    %2869 = vmatprep.subr.mxu0 0.0
    %2870 = vmatpush2.xpose.msra.mxu0 0.0
    %2871 = vmatprep.subr.mxu0 0.0
    %2872 = vmatpush2.xpose.msra.mxu0 0.0
    %2873 = vmatprep.subr.mxu0 0.0
    %2874 = vmatpush2.xpose.msra.mxu0 0.0
    %2875 = vmatprep.subr.mxu0 0.0
    %2876 = vmatpush2.xpose.msra.mxu0 0.0
    %2877 = vmatprep.subr.mxu0 0.0
    %2878 = vmatpush2.xpose.msra.mxu0 0.0
    %2879 = vmatprep.subr.mxu0 0.0
    %2880 = vmatpush2.xpose.msra.mxu0 0.0
    %2881 = vmatprep.mubr.f32.mxu0 0.0
    %2882 = vmatmul.mubr.f32.gmra.mxu0 %v2812
    %v2883 = vpop.f32.mrf.mxu0
    %v2884 = vadd.f32 %v482, %v2883
    %v2885 = vpop.f32.mrf.mxu0
    %2886 = vdwg.mxu0
    %v2887 = vsel %vm638, %v2808, -inf
    %2888 = vmax.xlane.f32.xlu0 %v2887
    %v2889 = vpop.xlane.xlu0 %2888
    %v2890 = vsel %vm638, %v2884, -inf
    %2891 = vmax.xlane.f32.xlu0 %v2890
    %v2892 = vpop.xlane.xlu0 %2891
    %v2893 = vsub.f32 %v2808, %v2889
    %v2894 = vsub.f32 %v2884, %v2892
    %v2895 = vmul.f32 %v2893, 1.442695
    %v2896 = vpow.pop %v2895
    %v2897 = vmul.f32 %v2894, 1.442695
    %v2898 = vpow.pop %v2897
    %v2899 = vsel %vm638, %v2896, 0.0
    %2900 = vadd.xlane.f32.xlu0 %v2899
    %v2901 = vpop.xlane.xlu0 %2900
    %v2902 = vsel %vm638, %v2898, 0.0
    %2903 = vadd.xlane.f32.xlu0 %v2902
    %v2904 = vpop.xlane.xlu0 %2903
    %v2905 = vrcp.pop %v2901
    %v2906 = vmul.f32 %v2896, %v2905
    %v2907 = vrcp.pop %v2904
    %v2908 = vmul.f32 %v2898, %v2907
    %v2910 = vsel %vm638, %v2906, 0
    %2912 = vmatprep.subr.mxu0 0.0
    %2913 = vmatpush1.msra.mxu0 0.0
    %2914 = vmatprep.subr.mxu0 0.0
    %2915 = vmatpush1.msra.mxu0 0.0
    %2916 = vmatprep.subr.mxu0 0.0
    %2917 = vmatpush1.msra.mxu0 0.0
    %2918 = vmatprep.subr.mxu0 0.0
    %2919 = vmatpush1.msra.mxu0 0.0
    %2920 = vmatprep.subr.mxu0 0.0
    %2921 = vmatpush1.msra.mxu0 0.0
    %2922 = vmatprep.subr.mxu0 0.0
    %2923 = vmatpush1.msra.mxu0 0.0
    %2924 = vmatprep.subr.mxu0 0.0
    %2925 = vmatpush1.msra.mxu0 0.0
    %2926 = vmatprep.subr.mxu0 0.0
    %2927 = vmatpush1.msra.mxu0 0.0
    %2928 = vmatprep.subr.mxu0 0.0
    %2929 = vmatpush1.msra.mxu0 0.0
    %2930 = vmatprep.subr.mxu0 0.0
    %2931 = vmatpush1.msra.mxu0 0.0
    %2932 = vmatprep.subr.mxu0 0.0
    %2933 = vmatpush1.msra.mxu0 0.0
    %2934 = vmatprep.subr.mxu0 0.0
    %2935 = vmatpush1.msra.mxu0 0.0
    %2936 = vmatprep.subr.mxu0 0.0
    %2937 = vmatpush1.msra.mxu0 0.0
    %2938 = vmatprep.subr.mxu0 0.0
    %2939 = vmatpush1.msra.mxu0 0.0
    %2940 = vmatprep.subr.mxu0 0.0
    %2941 = vmatpush1.msra.mxu0 0.0
    %2942 = vmatprep.subr.mxu0 0.0
    %2943 = vmatpush1.msra.mxu0 %v2716
    %2944 = vmatprep.subr.mxu0 0.0
    %2945 = vmatpush2.msra.mxu0 0.0
    %2946 = vmatprep.subr.mxu0 0.0
    %2947 = vmatpush2.msra.mxu0 0.0
    %2948 = vmatprep.subr.mxu0 0.0
    %2949 = vmatpush2.msra.mxu0 0.0
    %2950 = vmatprep.subr.mxu0 0.0
    %2951 = vmatpush2.msra.mxu0 0.0
    %2952 = vmatprep.subr.mxu0 0.0
    %2953 = vmatpush2.msra.mxu0 0.0
    %2954 = vmatprep.subr.mxu0 0.0
    %2955 = vmatpush2.msra.mxu0 0.0
    %2956 = vmatprep.subr.mxu0 0.0
    %2957 = vmatpush2.msra.mxu0 0.0
    %2958 = vmatprep.subr.mxu0 0.0
    %2959 = vmatpush2.msra.mxu0 0.0
    %2960 = vmatprep.subr.mxu0 0.0
    %2961 = vmatpush2.msra.mxu0 0.0
    %2962 = vmatprep.subr.mxu0 0.0
    %2963 = vmatpush2.msra.mxu0 0.0
    %2964 = vmatprep.subr.mxu0 0.0
    %2965 = vmatpush2.msra.mxu0 0.0
    %2966 = vmatprep.subr.mxu0 0.0
    %2967 = vmatpush2.msra.mxu0 0.0
    %2968 = vmatprep.subr.mxu0 0.0
    %2969 = vmatpush2.msra.mxu0 0.0
    %2970 = vmatprep.subr.mxu0 0.0
    %2971 = vmatpush2.msra.mxu0 0.0
    %2972 = vmatprep.subr.mxu0 0.0
    %2973 = vmatpush2.msra.mxu0 0.0
    %2974 = vmatprep.subr.mxu0 0.0
    %2975 = vmatpush2.msra.mxu0 0.0
    %2976 = vmatprep.mubr.f32.mxu0 0.0
    %2977 = vmatmul.mubr.f32.gmra.mxu0 %v2910
    %v2978 = vpop.f32.mrf.mxu0
    %v2979 = vadd.f32 0.0, %v2978
    %v2980 = vpop.f32.mrf.mxu0
    %2981 = vdwg.mxu0
    %v2983 = vsel %vm638, %v2908, 0
    %2985 = vmatprep.subr.mxu0 0.0
    %2986 = vmatpush1.msra.mxu0 0.0
    %2987 = vmatprep.subr.mxu0 0.0
    %2988 = vmatpush1.msra.mxu0 0.0
    %2989 = vmatprep.subr.mxu0 0.0
    %2990 = vmatpush1.msra.mxu0 0.0
    %2991 = vmatprep.subr.mxu0 0.0
    %2992 = vmatpush1.msra.mxu0 0.0
    %2993 = vmatprep.subr.mxu0 0.0
    %2994 = vmatpush1.msra.mxu0 0.0
    %2995 = vmatprep.subr.mxu0 0.0
    %2996 = vmatpush1.msra.mxu0 0.0
    %2997 = vmatprep.subr.mxu0 0.0
    %2998 = vmatpush1.msra.mxu0 0.0
    %2999 = vmatprep.subr.mxu0 0.0
    %3000 = vmatpush1.msra.mxu0 0.0
    %3001 = vmatprep.subr.mxu0 0.0
    %3002 = vmatpush1.msra.mxu0 0.0
    %3003 = vmatprep.subr.mxu0 0.0
    %3004 = vmatpush1.msra.mxu0 0.0
    %3005 = vmatprep.subr.mxu0 0.0
    %3006 = vmatpush1.msra.mxu0 0.0
    %3007 = vmatprep.subr.mxu0 0.0
    %3008 = vmatpush1.msra.mxu0 0.0
    %3009 = vmatprep.subr.mxu0 0.0
    %3010 = vmatpush1.msra.mxu0 0.0
    %3011 = vmatprep.subr.mxu0 0.0
    %3012 = vmatpush1.msra.mxu0 0.0
    %3013 = vmatprep.subr.mxu0 0.0
    %3014 = vmatpush1.msra.mxu0 0.0
    %3015 = vmatprep.subr.mxu0 0.0
    %3016 = vmatpush1.msra.mxu0 %v2721
    %3017 = vmatprep.subr.mxu0 0.0
    %3018 = vmatpush2.msra.mxu0 0.0
    %3019 = vmatprep.subr.mxu0 0.0
    %3020 = vmatpush2.msra.mxu0 0.0
    %3021 = vmatprep.subr.mxu0 0.0
    %3022 = vmatpush2.msra.mxu0 0.0
    %3023 = vmatprep.subr.mxu0 0.0
    %3024 = vmatpush2.msra.mxu0 0.0
    %3025 = vmatprep.subr.mxu0 0.0
    %3026 = vmatpush2.msra.mxu0 0.0
    %3027 = vmatprep.subr.mxu0 0.0
    %3028 = vmatpush2.msra.mxu0 0.0
    %3029 = vmatprep.subr.mxu0 0.0
    %3030 = vmatpush2.msra.mxu0 0.0
    %3031 = vmatprep.subr.mxu0 0.0
    %3032 = vmatpush2.msra.mxu0 0.0
    %3033 = vmatprep.subr.mxu0 0.0
    %3034 = vmatpush2.msra.mxu0 0.0
    %3035 = vmatprep.subr.mxu0 0.0
    %3036 = vmatpush2.msra.mxu0 0.0
    %3037 = vmatprep.subr.mxu0 0.0
    %3038 = vmatpush2.msra.mxu0 0.0
    %3039 = vmatprep.subr.mxu0 0.0
    %3040 = vmatpush2.msra.mxu0 0.0
    %3041 = vmatprep.subr.mxu0 0.0
    %3042 = vmatpush2.msra.mxu0 0.0
    %3043 = vmatprep.subr.mxu0 0.0
    %3044 = vmatpush2.msra.mxu0 0.0
    %3045 = vmatprep.subr.mxu0 0.0
    %3046 = vmatpush2.msra.mxu0 0.0
    %3047 = vmatprep.subr.mxu0 0.0
    %3048 = vmatpush2.msra.mxu0 0.0
    %3049 = vmatprep.mubr.f32.mxu0 0.0
    %3050 = vmatmul.mubr.f32.gmra.mxu0 %v2983
    %v3051 = vpop.f32.mrf.mxu0
    %v3052 = vadd.f32 0.0, %v3051
    %v3053 = vpop.f32.mrf.mxu0
    %3054 = vdwg.mxu0
    %s3055 = scalar_lea.vmem [#allocation8], 128
    %v3056 = vld [vmem:[%s3055] sm:$0xff]
    %v3057 = vld [vmem:[%s3055 + $0x8] sm:$0xff]
    %v3058 = vld [vmem:[%s3055 + $0x10] sm:$0xff]
    %v3059 = vld [vmem:[%s3055 + $0x18] sm:$0xff]
    %v3061 = vsel %vm485, %v2979, 0
    %v3064 = vsel %vm485, %v3052, 0
    %3066 = vmatprep.subr.mxu0 0.0
    %3067 = vmatpush1.msra.mxu0 0.0
    %3068 = vmatprep.subr.mxu0 0.0
    %3069 = vmatpush1.msra.mxu0 0.0
    %3070 = vmatprep.subr.mxu0 0.0
    %3071 = vmatpush1.msra.mxu0 0.0
    %3072 = vmatprep.subr.mxu0 0.0
    %3073 = vmatpush1.msra.mxu0 0.0
    %3074 = vmatprep.subr.mxu0 0.0
    %3075 = vmatpush1.msra.mxu0 0.0
    %3076 = vmatprep.subr.mxu0 0.0
    %3077 = vmatpush1.msra.mxu0 0.0
    %3078 = vmatprep.subr.mxu0 0.0
    %3079 = vmatpush1.msra.mxu0 0.0
    %3080 = vmatprep.subr.mxu0 0.0
    %3081 = vmatpush1.msra.mxu0 0.0
    %3082 = vmatprep.subr.mxu0 0.0
    %3083 = vmatpush1.msra.mxu0 0.0
    %3084 = vmatprep.subr.mxu0 0.0
    %3085 = vmatpush1.msra.mxu0 0.0
    %3086 = vmatprep.subr.mxu0 0.0
    %3087 = vmatpush1.msra.mxu0 0.0
    %3088 = vmatprep.subr.mxu0 0.0
    %3089 = vmatpush1.msra.mxu0 0.0
    %3090 = vmatprep.subr.mxu0 0.0
    %3091 = vmatpush1.msra.mxu0 %v3059
    %3092 = vmatprep.subr.mxu0 0.0
    %3093 = vmatpush1.msra.mxu0 %v3058
    %3094 = vmatprep.subr.mxu0 0.0
    %3095 = vmatpush1.msra.mxu0 %v3057
    %3096 = vmatprep.subr.mxu0 0.0
    %3097 = vmatpush1.msra.mxu0 %v3056
    %3098 = vmatprep.subr.mxu0 0.0
    %3099 = vmatpush2.msra.mxu0 0.0
    %3100 = vmatprep.subr.mxu0 0.0
    %3101 = vmatpush2.msra.mxu0 0.0
    %3102 = vmatprep.subr.mxu0 0.0
    %3103 = vmatpush2.msra.mxu0 0.0
    %3104 = vmatprep.subr.mxu0 0.0
    %3105 = vmatpush2.msra.mxu0 0.0
    %3106 = vmatprep.subr.mxu0 0.0
    %3107 = vmatpush2.msra.mxu0 0.0
    %3108 = vmatprep.subr.mxu0 0.0
    %3109 = vmatpush2.msra.mxu0 0.0
    %3110 = vmatprep.subr.mxu0 0.0
    %3111 = vmatpush2.msra.mxu0 0.0
    %3112 = vmatprep.subr.mxu0 0.0
    %3113 = vmatpush2.msra.mxu0 0.0
    %3114 = vmatprep.subr.mxu0 0.0
    %3115 = vmatpush2.msra.mxu0 0.0
    %3116 = vmatprep.subr.mxu0 0.0
    %3117 = vmatpush2.msra.mxu0 0.0
    %3118 = vmatprep.subr.mxu0 0.0
    %3119 = vmatpush2.msra.mxu0 0.0
    %3120 = vmatprep.subr.mxu0 0.0
    %3121 = vmatpush2.msra.mxu0 0.0
    %3122 = vmatprep.subr.mxu0 0.0
    %3123 = vmatpush2.msra.mxu0 0.0
    %3124 = vmatprep.subr.mxu0 0.0
    %3125 = vmatpush2.msra.mxu0 0.0
    %3126 = vmatprep.subr.mxu0 0.0
    %3127 = vmatpush2.msra.mxu0 0.0
    %3128 = vmatprep.subr.mxu0 0.0
    %3129 = vmatpush2.msra.mxu0 0.0
    %3130 = vmatprep.mubr.f32.mxu0 0.0
    %3131 = vmatmul.mubr.f32.gmra.mxu0 %v3061
    %v3132 = vpop.f32.mrf.mxu0
    %v3133 = vadd.f32 0.0, %v3132
    %v3134 = vpop.f32.mrf.mxu0
    %3135 = vmatprep.mubr.f32.mxu0 0.0
    %3136 = vmatmul.mubr.f32.gmra.mxu0 %v3064
    %v3137 = vpop.f32.mrf.mxu0
    %v3138 = vadd.f32 0.0, %v3137
    %v3139 = vpop.f32.mrf.mxu0
    %3140 = vdwg.mxu0
    %v3141 = vadd.f32 %v2734, %v3133
    %v3142 = vadd.f32 %v2734, %v3138
    %3143 = vrot.lane.b32.xlu0 %v2724, 96
    %v3144 = vpop.permute.xlu0 %3143
    %3145 = vrot.lane.b32.xlu0 %v2641, 96
    %v3146 = vpop.permute.xlu0 %3145
    %v3147 = vsel %vm485, %v3144, 0
    %v3149 = vsel %vm485, %v3146, 0
    %3151 = vmatprep.subr.mxu0 0.0
    %3152 = vmatpush1.xpose.msra.mxu0 0.0
    %3153 = vmatprep.subr.mxu0 0.0
    %3154 = vmatpush1.xpose.msra.mxu0 0.0
    %3155 = vmatprep.subr.mxu0 0.0
    %3156 = vmatpush1.xpose.msra.mxu0 0.0
    %3157 = vmatprep.subr.mxu0 0.0
    %3158 = vmatpush1.xpose.msra.mxu0 0.0
    %3159 = vmatprep.subr.mxu0 0.0
    %3160 = vmatpush1.xpose.msra.mxu0 0.0
    %3161 = vmatprep.subr.mxu0 0.0
    %3162 = vmatpush1.xpose.msra.mxu0 0.0
    %3163 = vmatprep.subr.mxu0 0.0
    %3164 = vmatpush1.xpose.msra.mxu0 0.0
    %3165 = vmatprep.subr.mxu0 0.0
    %3166 = vmatpush1.xpose.msra.mxu0 0.0
    %3167 = vmatprep.subr.mxu0 0.0
    %3168 = vmatpush1.xpose.msra.mxu0 0.0
    %3169 = vmatprep.subr.mxu0 0.0
    %3170 = vmatpush1.xpose.msra.mxu0 0.0
    %3171 = vmatprep.subr.mxu0 0.0
    %3172 = vmatpush1.xpose.msra.mxu0 0.0
    %3173 = vmatprep.subr.mxu0 0.0
    %3174 = vmatpush1.xpose.msra.mxu0 0.0
    %3175 = vmatprep.subr.mxu0 0.0
    %3176 = vmatpush1.xpose.msra.mxu0 0.0
    %3177 = vmatprep.subr.mxu0 0.0
    %3178 = vmatpush1.xpose.msra.mxu0 0.0
    %3179 = vmatprep.subr.mxu0 0.0
    %3180 = vmatpush1.xpose.msra.mxu0 0.0
    %3181 = vmatprep.subr.mxu0 0.0
    %3182 = vmatpush1.xpose.msra.mxu0 %v3149
    %3183 = vmatprep.subr.mxu0 0.0
    %3184 = vmatpush2.xpose.msra.mxu0 0.0
    %3185 = vmatprep.subr.mxu0 0.0
    %3186 = vmatpush2.xpose.msra.mxu0 0.0
    %3187 = vmatprep.subr.mxu0 0.0
    %3188 = vmatpush2.xpose.msra.mxu0 0.0
    %3189 = vmatprep.subr.mxu0 0.0
    %3190 = vmatpush2.xpose.msra.mxu0 0.0
    %3191 = vmatprep.subr.mxu0 0.0
    %3192 = vmatpush2.xpose.msra.mxu0 0.0
    %3193 = vmatprep.subr.mxu0 0.0
    %3194 = vmatpush2.xpose.msra.mxu0 0.0
    %3195 = vmatprep.subr.mxu0 0.0
    %3196 = vmatpush2.xpose.msra.mxu0 0.0
    %3197 = vmatprep.subr.mxu0 0.0
    %3198 = vmatpush2.xpose.msra.mxu0 0.0
    %3199 = vmatprep.subr.mxu0 0.0
    %3200 = vmatpush2.xpose.msra.mxu0 0.0
    %3201 = vmatprep.subr.mxu0 0.0
    %3202 = vmatpush2.xpose.msra.mxu0 0.0
    %3203 = vmatprep.subr.mxu0 0.0
    %3204 = vmatpush2.xpose.msra.mxu0 0.0
    %3205 = vmatprep.subr.mxu0 0.0
    %3206 = vmatpush2.xpose.msra.mxu0 0.0
    %3207 = vmatprep.subr.mxu0 0.0
    %3208 = vmatpush2.xpose.msra.mxu0 0.0
    %3209 = vmatprep.subr.mxu0 0.0
    %3210 = vmatpush2.xpose.msra.mxu0 0.0
    %3211 = vmatprep.subr.mxu0 0.0
    %3212 = vmatpush2.xpose.msra.mxu0 0.0
    %3213 = vmatprep.subr.mxu0 0.0
    %3214 = vmatpush2.xpose.msra.mxu0 0.0
    %3215 = vmatprep.mubr.f32.mxu0 0.0
    %3216 = vmatmul.mubr.f32.gmra.mxu0 %v3147
    %v3217 = vpop.f32.mrf.mxu0
    %v3218 = vadd.f32 %v478, %v3217
    %v3219 = vpop.f32.mrf.mxu0
    %3220 = vdwg.mxu0
    %3221 = vrot.lane.b32.xlu0 %v2725, 96
    %v3222 = vpop.permute.xlu0 %3221
    %3223 = vrot.lane.b32.xlu0 %v2647, 96
    %v3224 = vpop.permute.xlu0 %3223
    %v3225 = vsel %vm485, %v3222, 0
    %v3227 = vsel %vm485, %v3224, 0
    %3229 = vmatprep.subr.mxu0 0.0
    %3230 = vmatpush1.xpose.msra.mxu0 0.0
    %3231 = vmatprep.subr.mxu0 0.0
    %3232 = vmatpush1.xpose.msra.mxu0 0.0
    %3233 = vmatprep.subr.mxu0 0.0
    %3234 = vmatpush1.xpose.msra.mxu0 0.0
    %3235 = vmatprep.subr.mxu0 0.0
    %3236 = vmatpush1.xpose.msra.mxu0 0.0
    %3237 = vmatprep.subr.mxu0 0.0
    %3238 = vmatpush1.xpose.msra.mxu0 0.0
    %3239 = vmatprep.subr.mxu0 0.0
    %3240 = vmatpush1.xpose.msra.mxu0 0.0
    %3241 = vmatprep.subr.mxu0 0.0
    %3242 = vmatpush1.xpose.msra.mxu0 0.0
    %3243 = vmatprep.subr.mxu0 0.0
    %3244 = vmatpush1.xpose.msra.mxu0 0.0
    %3245 = vmatprep.subr.mxu0 0.0
    %3246 = vmatpush1.xpose.msra.mxu0 0.0
    %3247 = vmatprep.subr.mxu0 0.0
    %3248 = vmatpush1.xpose.msra.mxu0 0.0
    %3249 = vmatprep.subr.mxu0 0.0
    %3250 = vmatpush1.xpose.msra.mxu0 0.0
    %3251 = vmatprep.subr.mxu0 0.0
    %3252 = vmatpush1.xpose.msra.mxu0 0.0
    %3253 = vmatprep.subr.mxu0 0.0
    %3254 = vmatpush1.xpose.msra.mxu0 0.0
    %3255 = vmatprep.subr.mxu0 0.0
    %3256 = vmatpush1.xpose.msra.mxu0 0.0
    %3257 = vmatprep.subr.mxu0 0.0
    %3258 = vmatpush1.xpose.msra.mxu0 0.0
    %3259 = vmatprep.subr.mxu0 0.0
    %3260 = vmatpush1.xpose.msra.mxu0 %v3227
    %3261 = vmatprep.subr.mxu0 0.0
    %3262 = vmatpush2.xpose.msra.mxu0 0.0
    %3263 = vmatprep.subr.mxu0 0.0
    %3264 = vmatpush2.xpose.msra.mxu0 0.0
    %3265 = vmatprep.subr.mxu0 0.0
    %3266 = vmatpush2.xpose.msra.mxu0 0.0
    %3267 = vmatprep.subr.mxu0 0.0
    %3268 = vmatpush2.xpose.msra.mxu0 0.0
    %3269 = vmatprep.subr.mxu0 0.0
    %3270 = vmatpush2.xpose.msra.mxu0 0.0
    %3271 = vmatprep.subr.mxu0 0.0
    %3272 = vmatpush2.xpose.msra.mxu0 0.0
    %3273 = vmatprep.subr.mxu0 0.0
    %3274 = vmatpush2.xpose.msra.mxu0 0.0
    %3275 = vmatprep.subr.mxu0 0.0
    %3276 = vmatpush2.xpose.msra.mxu0 0.0
    %3277 = vmatprep.subr.mxu0 0.0
    %3278 = vmatpush2.xpose.msra.mxu0 0.0
    %3279 = vmatprep.subr.mxu0 0.0
    %3280 = vmatpush2.xpose.msra.mxu0 0.0
    %3281 = vmatprep.subr.mxu0 0.0
    %3282 = vmatpush2.xpose.msra.mxu0 0.0
    %3283 = vmatprep.subr.mxu0 0.0
    %3284 = vmatpush2.xpose.msra.mxu0 0.0
    %3285 = vmatprep.subr.mxu0 0.0
    %3286 = vmatpush2.xpose.msra.mxu0 0.0
    %3287 = vmatprep.subr.mxu0 0.0
    %3288 = vmatpush2.xpose.msra.mxu0 0.0
    %3289 = vmatprep.subr.mxu0 0.0
    %3290 = vmatpush2.xpose.msra.mxu0 0.0
    %3291 = vmatprep.subr.mxu0 0.0
    %3292 = vmatpush2.xpose.msra.mxu0 0.0
    %3293 = vmatprep.mubr.f32.mxu0 0.0
    %3294 = vmatmul.mubr.f32.gmra.mxu0 %v3225
    %v3295 = vpop.f32.mrf.mxu0
    %v3296 = vadd.f32 %v482, %v3295
    %v3297 = vpop.f32.mrf.mxu0
    %3298 = vdwg.mxu0
    %v3299 = vsel %vm638, %v3218, -inf
    %3300 = vmax.xlane.f32.xlu0 %v3299
    %v3301 = vpop.xlane.xlu0 %3300
    %v3302 = vsel %vm638, %v3296, -inf
    %3303 = vmax.xlane.f32.xlu0 %v3302
    %v3304 = vpop.xlane.xlu0 %3303
    %v3305 = vsub.f32 %v3218, %v3301
    %v3306 = vsub.f32 %v3296, %v3304
    %v3307 = vmul.f32 %v3305, 1.442695
    %v3308 = vpow.pop %v3307
    %v3309 = vmul.f32 %v3306, 1.442695
    %v3310 = vpow.pop %v3309
    %v3311 = vsel %vm638, %v3308, 0.0
    %3312 = vadd.xlane.f32.xlu0 %v3311
    %v3313 = vpop.xlane.xlu0 %3312
    %v3314 = vsel %vm638, %v3310, 0.0
    %3315 = vadd.xlane.f32.xlu0 %v3314
    %v3316 = vpop.xlane.xlu0 %3315
    %v3317 = vrcp.pop %v3313
    %v3318 = vmul.f32 %v3308, %v3317
    %v3319 = vrcp.pop %v3316
    %v3320 = vmul.f32 %v3310, %v3319
    %3322 = vrot.lane.b32.xlu0 %v2716, 96
    %v3323 = vpop.permute.xlu0 %3322
    %v3326 = vsel %vm638, %v3318, 0
    %3328 = vmatprep.subr.mxu0 0.0
    %3329 = vmatpush1.msra.mxu0 0.0
    %3330 = vmatprep.subr.mxu0 0.0
    %3331 = vmatpush1.msra.mxu0 0.0
    %3332 = vmatprep.subr.mxu0 0.0
    %3333 = vmatpush1.msra.mxu0 0.0
    %3334 = vmatprep.subr.mxu0 0.0
    %3335 = vmatpush1.msra.mxu0 0.0
    %3336 = vmatprep.subr.mxu0 0.0
    %3337 = vmatpush1.msra.mxu0 0.0
    %3338 = vmatprep.subr.mxu0 0.0
    %3339 = vmatpush1.msra.mxu0 0.0
    %3340 = vmatprep.subr.mxu0 0.0
    %3341 = vmatpush1.msra.mxu0 0.0
    %3342 = vmatprep.subr.mxu0 0.0
    %3343 = vmatpush1.msra.mxu0 0.0
    %3344 = vmatprep.subr.mxu0 0.0
    %3345 = vmatpush1.msra.mxu0 0.0
    %3346 = vmatprep.subr.mxu0 0.0
    %3347 = vmatpush1.msra.mxu0 0.0
    %3348 = vmatprep.subr.mxu0 0.0
    %3349 = vmatpush1.msra.mxu0 0.0
    %3350 = vmatprep.subr.mxu0 0.0
    %3351 = vmatpush1.msra.mxu0 0.0
    %3352 = vmatprep.subr.mxu0 0.0
    %3353 = vmatpush1.msra.mxu0 0.0
    %3354 = vmatprep.subr.mxu0 0.0
    %3355 = vmatpush1.msra.mxu0 0.0
    %3356 = vmatprep.subr.mxu0 0.0
    %3357 = vmatpush1.msra.mxu0 0.0
    %3358 = vmatprep.subr.mxu0 0.0
    %3359 = vmatpush1.msra.mxu0 %v3323
    %3360 = vmatprep.subr.mxu0 0.0
    %3361 = vmatpush2.msra.mxu0 0.0
    %3362 = vmatprep.subr.mxu0 0.0
    %3363 = vmatpush2.msra.mxu0 0.0
    %3364 = vmatprep.subr.mxu0 0.0
    %3365 = vmatpush2.msra.mxu0 0.0
    %3366 = vmatprep.subr.mxu0 0.0
    %3367 = vmatpush2.msra.mxu0 0.0
    %3368 = vmatprep.subr.mxu0 0.0
    %3369 = vmatpush2.msra.mxu0 0.0
    %3370 = vmatprep.subr.mxu0 0.0
    %3371 = vmatpush2.msra.mxu0 0.0
    %3372 = vmatprep.subr.mxu0 0.0
    %3373 = vmatpush2.msra.mxu0 0.0
    %3374 = vmatprep.subr.mxu0 0.0
    %3375 = vmatpush2.msra.mxu0 0.0
    %3376 = vmatprep.subr.mxu0 0.0
    %3377 = vmatpush2.msra.mxu0 0.0
    %3378 = vmatprep.subr.mxu0 0.0
    %3379 = vmatpush2.msra.mxu0 0.0
    %3380 = vmatprep.subr.mxu0 0.0
    %3381 = vmatpush2.msra.mxu0 0.0
    %3382 = vmatprep.subr.mxu0 0.0
    %3383 = vmatpush2.msra.mxu0 0.0
    %3384 = vmatprep.subr.mxu0 0.0
    %3385 = vmatpush2.msra.mxu0 0.0
    %3386 = vmatprep.subr.mxu0 0.0
    %3387 = vmatpush2.msra.mxu0 0.0
    %3388 = vmatprep.subr.mxu0 0.0
    %3389 = vmatpush2.msra.mxu0 0.0
    %3390 = vmatprep.subr.mxu0 0.0
    %3391 = vmatpush2.msra.mxu0 0.0
    %3392 = vmatprep.mubr.f32.mxu0 0.0
    %3393 = vmatmul.mubr.f32.gmra.mxu0 %v3326
    %v3394 = vpop.f32.mrf.mxu0
    %v3395 = vadd.f32 0.0, %v3394
    %v3396 = vpop.f32.mrf.mxu0
    %3397 = vdwg.mxu0
    %3399 = vrot.lane.b32.xlu0 %v2721, 96
    %v3400 = vpop.permute.xlu0 %3399
    %v3403 = vsel %vm638, %v3320, 0
    %3405 = vmatprep.subr.mxu0 0.0
    %3406 = vmatpush1.msra.mxu0 0.0
    %3407 = vmatprep.subr.mxu0 0.0
    %3408 = vmatpush1.msra.mxu0 0.0
    %3409 = vmatprep.subr.mxu0 0.0
    %3410 = vmatpush1.msra.mxu0 0.0
    %3411 = vmatprep.subr.mxu0 0.0
    %3412 = vmatpush1.msra.mxu0 0.0
    %3413 = vmatprep.subr.mxu0 0.0
    %3414 = vmatpush1.msra.mxu0 0.0
    %3415 = vmatprep.subr.mxu0 0.0
    %3416 = vmatpush1.msra.mxu0 0.0
    %3417 = vmatprep.subr.mxu0 0.0
    %3418 = vmatpush1.msra.mxu0 0.0
    %3419 = vmatprep.subr.mxu0 0.0
    %3420 = vmatpush1.msra.mxu0 0.0
    %3421 = vmatprep.subr.mxu0 0.0
    %3422 = vmatpush1.msra.mxu0 0.0
    %3423 = vmatprep.subr.mxu0 0.0
    %3424 = vmatpush1.msra.mxu0 0.0
    %3425 = vmatprep.subr.mxu0 0.0
    %3426 = vmatpush1.msra.mxu0 0.0
    %3427 = vmatprep.subr.mxu0 0.0
    %3428 = vmatpush1.msra.mxu0 0.0
    %3429 = vmatprep.subr.mxu0 0.0
    %3430 = vmatpush1.msra.mxu0 0.0
    %3431 = vmatprep.subr.mxu0 0.0
    %3432 = vmatpush1.msra.mxu0 0.0
    %3433 = vmatprep.subr.mxu0 0.0
    %3434 = vmatpush1.msra.mxu0 0.0
    %3435 = vmatprep.subr.mxu0 0.0
    %3436 = vmatpush1.msra.mxu0 %v3400
    %3437 = vmatprep.subr.mxu0 0.0
    %3438 = vmatpush2.msra.mxu0 0.0
    %3439 = vmatprep.subr.mxu0 0.0
    %3440 = vmatpush2.msra.mxu0 0.0
    %3441 = vmatprep.subr.mxu0 0.0
    %3442 = vmatpush2.msra.mxu0 0.0
    %3443 = vmatprep.subr.mxu0 0.0
    %3444 = vmatpush2.msra.mxu0 0.0
    %3445 = vmatprep.subr.mxu0 0.0
    %3446 = vmatpush2.msra.mxu0 0.0
    %3447 = vmatprep.subr.mxu0 0.0
    %3448 = vmatpush2.msra.mxu0 0.0
    %3449 = vmatprep.subr.mxu0 0.0
    %3450 = vmatpush2.msra.mxu0 0.0
    %3451 = vmatprep.subr.mxu0 0.0
    %3452 = vmatpush2.msra.mxu0 0.0
    %3453 = vmatprep.subr.mxu0 0.0
    %3454 = vmatpush2.msra.mxu0 0.0
    %3455 = vmatprep.subr.mxu0 0.0
    %3456 = vmatpush2.msra.mxu0 0.0
    %3457 = vmatprep.subr.mxu0 0.0
    %3458 = vmatpush2.msra.mxu0 0.0
    %3459 = vmatprep.subr.mxu0 0.0
    %3460 = vmatpush2.msra.mxu0 0.0
    %3461 = vmatprep.subr.mxu0 0.0
    %3462 = vmatpush2.msra.mxu0 0.0
    %3463 = vmatprep.subr.mxu0 0.0
    %3464 = vmatpush2.msra.mxu0 0.0
    %3465 = vmatprep.subr.mxu0 0.0
    %3466 = vmatpush2.msra.mxu0 0.0
    %3467 = vmatprep.subr.mxu0 0.0
    %3468 = vmatpush2.msra.mxu0 0.0
    %3469 = vmatprep.mubr.f32.mxu0 0.0
    %3470 = vmatmul.mubr.f32.gmra.mxu0 %v3403
    %v3471 = vpop.f32.mrf.mxu0
    %v3472 = vadd.f32 0.0, %v3471
    %v3473 = vpop.f32.mrf.mxu0
    %3474 = vdwg.mxu0
    %v3475 = vld [vmem:[%s3055 + $0x20] sm:$0xff]
    %v3476 = vld [vmem:[%s3055 + $0x28] sm:$0xff]
    %v3477 = vld [vmem:[%s3055 + $0x30] sm:$0xff]
    %v3478 = vld [vmem:[%s3055 + $0x38] sm:$0xff]
    %v3480 = vsel %vm485, %v3395, 0
    %v3483 = vsel %vm485, %v3472, 0
    %3485 = vmatprep.subr.mxu0 0.0
    %3486 = vmatpush1.msra.mxu0 0.0
    %3487 = vmatprep.subr.mxu0 0.0
    %3488 = vmatpush1.msra.mxu0 0.0
    %3489 = vmatprep.subr.mxu0 0.0
    %3490 = vmatpush1.msra.mxu0 0.0
    %3491 = vmatprep.subr.mxu0 0.0
    %3492 = vmatpush1.msra.mxu0 0.0
    %3493 = vmatprep.subr.mxu0 0.0
    %3494 = vmatpush1.msra.mxu0 0.0
    %3495 = vmatprep.subr.mxu0 0.0
    %3496 = vmatpush1.msra.mxu0 0.0
    %3497 = vmatprep.subr.mxu0 0.0
    %3498 = vmatpush1.msra.mxu0 0.0
    %3499 = vmatprep.subr.mxu0 0.0
    %3500 = vmatpush1.msra.mxu0 0.0
    %3501 = vmatprep.subr.mxu0 0.0
    %3502 = vmatpush1.msra.mxu0 0.0
    %3503 = vmatprep.subr.mxu0 0.0
    %3504 = vmatpush1.msra.mxu0 0.0
    %3505 = vmatprep.subr.mxu0 0.0
    %3506 = vmatpush1.msra.mxu0 0.0
    %3507 = vmatprep.subr.mxu0 0.0
    %3508 = vmatpush1.msra.mxu0 0.0
    %3509 = vmatprep.subr.mxu0 0.0
    %3510 = vmatpush1.msra.mxu0 %v3478
    %3511 = vmatprep.subr.mxu0 0.0
    %3512 = vmatpush1.msra.mxu0 %v3477
    %3513 = vmatprep.subr.mxu0 0.0
    %3514 = vmatpush1.msra.mxu0 %v3476
    %3515 = vmatprep.subr.mxu0 0.0
    %3516 = vmatpush1.msra.mxu0 %v3475
    %3517 = vmatprep.subr.mxu0 0.0
    %3518 = vmatpush2.msra.mxu0 0.0
    %3519 = vmatprep.subr.mxu0 0.0
    %3520 = vmatpush2.msra.mxu0 0.0
    %3521 = vmatprep.subr.mxu0 0.0
    %3522 = vmatpush2.msra.mxu0 0.0
    %3523 = vmatprep.subr.mxu0 0.0
    %3524 = vmatpush2.msra.mxu0 0.0
    %3525 = vmatprep.subr.mxu0 0.0
    %3526 = vmatpush2.msra.mxu0 0.0
    %3527 = vmatprep.subr.mxu0 0.0
    %3528 = vmatpush2.msra.mxu0 0.0
    %3529 = vmatprep.subr.mxu0 0.0
    %3530 = vmatpush2.msra.mxu0 0.0
    %3531 = vmatprep.subr.mxu0 0.0
    %3532 = vmatpush2.msra.mxu0 0.0
    %3533 = vmatprep.subr.mxu0 0.0
    %3534 = vmatpush2.msra.mxu0 0.0
    %3535 = vmatprep.subr.mxu0 0.0
    %3536 = vmatpush2.msra.mxu0 0.0
    %3537 = vmatprep.subr.mxu0 0.0
    %3538 = vmatpush2.msra.mxu0 0.0
    %3539 = vmatprep.subr.mxu0 0.0
    %3540 = vmatpush2.msra.mxu0 0.0
    %3541 = vmatprep.subr.mxu0 0.0
    %3542 = vmatpush2.msra.mxu0 0.0
    %3543 = vmatprep.subr.mxu0 0.0
    %3544 = vmatpush2.msra.mxu0 0.0
    %3545 = vmatprep.subr.mxu0 0.0
    %3546 = vmatpush2.msra.mxu0 0.0
    %3547 = vmatprep.subr.mxu0 0.0
    %3548 = vmatpush2.msra.mxu0 0.0
    %3549 = vmatprep.mubr.f32.mxu0 0.0
    %3550 = vmatmul.mubr.f32.gmra.mxu0 %v3480
    %v3551 = vpop.f32.mrf.mxu0
    %v3552 = vadd.f32 0.0, %v3551
    %v3553 = vpop.f32.mrf.mxu0
    %3554 = vmatprep.mubr.f32.mxu0 0.0
    %3555 = vmatmul.mubr.f32.gmra.mxu0 %v3483
    %v3556 = vpop.f32.mrf.mxu0
    %v3557 = vadd.f32 0.0, %v3556
    %v3558 = vpop.f32.mrf.mxu0
    %3559 = vdwg.mxu0
    %v3560 = vadd.f32 %v3141, %v3552
    %v3561 = vadd.f32 %v3142, %v3557
    %3562 = vrot.lane.b32.xlu0 %v2724, 64
    %v3563 = vpop.permute.xlu0 %3562
    %3564 = vrot.lane.b32.xlu0 %v2641, 64
    %v3565 = vpop.permute.xlu0 %3564
    %v3566 = vsel %vm485, %v3563, 0
    %v3568 = vsel %vm485, %v3565, 0
    %3570 = vmatprep.subr.mxu0 0.0
    %3571 = vmatpush1.xpose.msra.mxu0 0.0
    %3572 = vmatprep.subr.mxu0 0.0
    %3573 = vmatpush1.xpose.msra.mxu0 0.0
    %3574 = vmatprep.subr.mxu0 0.0
    %3575 = vmatpush1.xpose.msra.mxu0 0.0
    %3576 = vmatprep.subr.mxu0 0.0
    %3577 = vmatpush1.xpose.msra.mxu0 0.0
    %3578 = vmatprep.subr.mxu0 0.0
    %3579 = vmatpush1.xpose.msra.mxu0 0.0
    %3580 = vmatprep.subr.mxu0 0.0
    %3581 = vmatpush1.xpose.msra.mxu0 0.0
    %3582 = vmatprep.subr.mxu0 0.0
    %3583 = vmatpush1.xpose.msra.mxu0 0.0
    %3584 = vmatprep.subr.mxu0 0.0
    %3585 = vmatpush1.xpose.msra.mxu0 0.0
    %3586 = vmatprep.subr.mxu0 0.0
    %3587 = vmatpush1.xpose.msra.mxu0 0.0
    %3588 = vmatprep.subr.mxu0 0.0
    %3589 = vmatpush1.xpose.msra.mxu0 0.0
    %3590 = vmatprep.subr.mxu0 0.0
    %3591 = vmatpush1.xpose.msra.mxu0 0.0
    %3592 = vmatprep.subr.mxu0 0.0
    %3593 = vmatpush1.xpose.msra.mxu0 0.0
    %3594 = vmatprep.subr.mxu0 0.0
    %3595 = vmatpush1.xpose.msra.mxu0 0.0
    %3596 = vmatprep.subr.mxu0 0.0
    %3597 = vmatpush1.xpose.msra.mxu0 0.0
    %3598 = vmatprep.subr.mxu0 0.0
    %3599 = vmatpush1.xpose.msra.mxu0 0.0
    %3600 = vmatprep.subr.mxu0 0.0
    %3601 = vmatpush1.xpose.msra.mxu0 %v3568
    %3602 = vmatprep.subr.mxu0 0.0
    %3603 = vmatpush2.xpose.msra.mxu0 0.0
    %3604 = vmatprep.subr.mxu0 0.0
    %3605 = vmatpush2.xpose.msra.mxu0 0.0
    %3606 = vmatprep.subr.mxu0 0.0
    %3607 = vmatpush2.xpose.msra.mxu0 0.0
    %3608 = vmatprep.subr.mxu0 0.0
    %3609 = vmatpush2.xpose.msra.mxu0 0.0
    %3610 = vmatprep.subr.mxu0 0.0
    %3611 = vmatpush2.xpose.msra.mxu0 0.0
    %3612 = vmatprep.subr.mxu0 0.0
    %3613 = vmatpush2.xpose.msra.mxu0 0.0
    %3614 = vmatprep.subr.mxu0 0.0
    %3615 = vmatpush2.xpose.msra.mxu0 0.0
    %3616 = vmatprep.subr.mxu0 0.0
    %3617 = vmatpush2.xpose.msra.mxu0 0.0
    %3618 = vmatprep.subr.mxu0 0.0
    %3619 = vmatpush2.xpose.msra.mxu0 0.0
    %3620 = vmatprep.subr.mxu0 0.0
    %3621 = vmatpush2.xpose.msra.mxu0 0.0
    %3622 = vmatprep.subr.mxu0 0.0
    %3623 = vmatpush2.xpose.msra.mxu0 0.0
    %3624 = vmatprep.subr.mxu0 0.0
    %3625 = vmatpush2.xpose.msra.mxu0 0.0
    %3626 = vmatprep.subr.mxu0 0.0
    %3627 = vmatpush2.xpose.msra.mxu0 0.0
    %3628 = vmatprep.subr.mxu0 0.0
    %3629 = vmatpush2.xpose.msra.mxu0 0.0
    %3630 = vmatprep.subr.mxu0 0.0
    %3631 = vmatpush2.xpose.msra.mxu0 0.0
    %3632 = vmatprep.subr.mxu0 0.0
    %3633 = vmatpush2.xpose.msra.mxu0 0.0
    %3634 = vmatprep.mubr.f32.mxu0 0.0
    %3635 = vmatmul.mubr.f32.gmra.mxu0 %v3566
    %v3636 = vpop.f32.mrf.mxu0
    %v3637 = vadd.f32 %v478, %v3636
    %v3638 = vpop.f32.mrf.mxu0
    %3639 = vdwg.mxu0
    %3640 = vrot.lane.b32.xlu0 %v2725, 64
    %v3641 = vpop.permute.xlu0 %3640
    %3642 = vrot.lane.b32.xlu0 %v2647, 64
    %v3643 = vpop.permute.xlu0 %3642
    %v3644 = vsel %vm485, %v3641, 0
    %v3646 = vsel %vm485, %v3643, 0
    %3648 = vmatprep.subr.mxu0 0.0
    %3649 = vmatpush1.xpose.msra.mxu0 0.0
    %3650 = vmatprep.subr.mxu0 0.0
    %3651 = vmatpush1.xpose.msra.mxu0 0.0
    %3652 = vmatprep.subr.mxu0 0.0
    %3653 = vmatpush1.xpose.msra.mxu0 0.0
    %3654 = vmatprep.subr.mxu0 0.0
    %3655 = vmatpush1.xpose.msra.mxu0 0.0
    %3656 = vmatprep.subr.mxu0 0.0
    %3657 = vmatpush1.xpose.msra.mxu0 0.0
    %3658 = vmatprep.subr.mxu0 0.0
    %3659 = vmatpush1.xpose.msra.mxu0 0.0
    %3660 = vmatprep.subr.mxu0 0.0
    %3661 = vmatpush1.xpose.msra.mxu0 0.0
    %3662 = vmatprep.subr.mxu0 0.0
    %3663 = vmatpush1.xpose.msra.mxu0 0.0
    %3664 = vmatprep.subr.mxu0 0.0
    %3665 = vmatpush1.xpose.msra.mxu0 0.0
    %3666 = vmatprep.subr.mxu0 0.0
    %3667 = vmatpush1.xpose.msra.mxu0 0.0
    %3668 = vmatprep.subr.mxu0 0.0
    %3669 = vmatpush1.xpose.msra.mxu0 0.0
    %3670 = vmatprep.subr.mxu0 0.0
    %3671 = vmatpush1.xpose.msra.mxu0 0.0
    %3672 = vmatprep.subr.mxu0 0.0
    %3673 = vmatpush1.xpose.msra.mxu0 0.0
    %3674 = vmatprep.subr.mxu0 0.0
    %3675 = vmatpush1.xpose.msra.mxu0 0.0
    %3676 = vmatprep.subr.mxu0 0.0
    %3677 = vmatpush1.xpose.msra.mxu0 0.0
    %3678 = vmatprep.subr.mxu0 0.0
    %3679 = vmatpush1.xpose.msra.mxu0 %v3646
    %3680 = vmatprep.subr.mxu0 0.0
    %3681 = vmatpush2.xpose.msra.mxu0 0.0
    %3682 = vmatprep.subr.mxu0 0.0
    %3683 = vmatpush2.xpose.msra.mxu0 0.0
    %3684 = vmatprep.subr.mxu0 0.0
    %3685 = vmatpush2.xpose.msra.mxu0 0.0
    %3686 = vmatprep.subr.mxu0 0.0
    %3687 = vmatpush2.xpose.msra.mxu0 0.0
    %3688 = vmatprep.subr.mxu0 0.0
    %3689 = vmatpush2.xpose.msra.mxu0 0.0
    %3690 = vmatprep.subr.mxu0 0.0
    %3691 = vmatpush2.xpose.msra.mxu0 0.0
    %3692 = vmatprep.subr.mxu0 0.0
    %3693 = vmatpush2.xpose.msra.mxu0 0.0
    %3694 = vmatprep.subr.mxu0 0.0
    %3695 = vmatpush2.xpose.msra.mxu0 0.0
    %3696 = vmatprep.subr.mxu0 0.0
    %3697 = vmatpush2.xpose.msra.mxu0 0.0
    %3698 = vmatprep.subr.mxu0 0.0
    %3699 = vmatpush2.xpose.msra.mxu0 0.0
    %3700 = vmatprep.subr.mxu0 0.0
    %3701 = vmatpush2.xpose.msra.mxu0 0.0
    %3702 = vmatprep.subr.mxu0 0.0
    %3703 = vmatpush2.xpose.msra.mxu0 0.0
    %3704 = vmatprep.subr.mxu0 0.0
    %3705 = vmatpush2.xpose.msra.mxu0 0.0
    %3706 = vmatprep.subr.mxu0 0.0
    %3707 = vmatpush2.xpose.msra.mxu0 0.0
    %3708 = vmatprep.subr.mxu0 0.0
    %3709 = vmatpush2.xpose.msra.mxu0 0.0
    %3710 = vmatprep.subr.mxu0 0.0
    %3711 = vmatpush2.xpose.msra.mxu0 0.0
    %3712 = vmatprep.mubr.f32.mxu0 0.0
    %3713 = vmatmul.mubr.f32.gmra.mxu0 %v3644
    %v3714 = vpop.f32.mrf.mxu0
    %v3715 = vadd.f32 %v482, %v3714
    %v3716 = vpop.f32.mrf.mxu0
    %3717 = vdwg.mxu0
    %v3718 = vsel %vm638, %v3637, -inf
    %3719 = vmax.xlane.f32.xlu0 %v3718
    %v3720 = vpop.xlane.xlu0 %3719
    %v3721 = vsel %vm638, %v3715, -inf
    %3722 = vmax.xlane.f32.xlu0 %v3721
    %v3723 = vpop.xlane.xlu0 %3722
    %v3724 = vsub.f32 %v3637, %v3720
    %v3725 = vsub.f32 %v3715, %v3723
    %v3726 = vmul.f32 %v3724, 1.442695
    %v3727 = vpow.pop %v3726
    %v3728 = vmul.f32 %v3725, 1.442695
    %v3729 = vpow.pop %v3728
    %v3730 = vsel %vm638, %v3727, 0.0
    %3731 = vadd.xlane.f32.xlu0 %v3730
    %v3732 = vpop.xlane.xlu0 %3731
    %v3733 = vsel %vm638, %v3729, 0.0
    %3734 = vadd.xlane.f32.xlu0 %v3733
    %v3735 = vpop.xlane.xlu0 %3734
    %v3736 = vrcp.pop %v3732
    %v3737 = vmul.f32 %v3727, %v3736
    %v3738 = vrcp.pop %v3735
    %v3739 = vmul.f32 %v3729, %v3738
    %3740 = vrot.lane.b32.xlu0 %v2716, 64
    %v3741 = vpop.permute.xlu0 %3740
    %v3744 = vsel %vm638, %v3737, 0
    %3746 = vmatprep.subr.mxu0 0.0
    %3747 = vmatpush1.msra.mxu0 0.0
    %3748 = vmatprep.subr.mxu0 0.0
    %3749 = vmatpush1.msra.mxu0 0.0
    %3750 = vmatprep.subr.mxu0 0.0
    %3751 = vmatpush1.msra.mxu0 0.0
    %3752 = vmatprep.subr.mxu0 0.0
    %3753 = vmatpush1.msra.mxu0 0.0
    %3754 = vmatprep.subr.mxu0 0.0
    %3755 = vmatpush1.msra.mxu0 0.0
    %3756 = vmatprep.subr.mxu0 0.0
    %3757 = vmatpush1.msra.mxu0 0.0
    %3758 = vmatprep.subr.mxu0 0.0
    %3759 = vmatpush1.msra.mxu0 0.0
    %3760 = vmatprep.subr.mxu0 0.0
    %3761 = vmatpush1.msra.mxu0 0.0
    %3762 = vmatprep.subr.mxu0 0.0
    %3763 = vmatpush1.msra.mxu0 0.0
    %3764 = vmatprep.subr.mxu0 0.0
    %3765 = vmatpush1.msra.mxu0 0.0
    %3766 = vmatprep.subr.mxu0 0.0
    %3767 = vmatpush1.msra.mxu0 0.0
    %3768 = vmatprep.subr.mxu0 0.0
    %3769 = vmatpush1.msra.mxu0 0.0
    %3770 = vmatprep.subr.mxu0 0.0
    %3771 = vmatpush1.msra.mxu0 0.0
    %3772 = vmatprep.subr.mxu0 0.0
    %3773 = vmatpush1.msra.mxu0 0.0
    %3774 = vmatprep.subr.mxu0 0.0
    %3775 = vmatpush1.msra.mxu0 0.0
    %3776 = vmatprep.subr.mxu0 0.0
    %3777 = vmatpush1.msra.mxu0 %v3741
    %3778 = vmatprep.subr.mxu0 0.0
    %3779 = vmatpush2.msra.mxu0 0.0
    %3780 = vmatprep.subr.mxu0 0.0
    %3781 = vmatpush2.msra.mxu0 0.0
    %3782 = vmatprep.subr.mxu0 0.0
    %3783 = vmatpush2.msra.mxu0 0.0
    %3784 = vmatprep.subr.mxu0 0.0
    %3785 = vmatpush2.msra.mxu0 0.0
    %3786 = vmatprep.subr.mxu0 0.0
    %3787 = vmatpush2.msra.mxu0 0.0
    %3788 = vmatprep.subr.mxu0 0.0
    %3789 = vmatpush2.msra.mxu0 0.0
    %3790 = vmatprep.subr.mxu0 0.0
    %3791 = vmatpush2.msra.mxu0 0.0
    %3792 = vmatprep.subr.mxu0 0.0
    %3793 = vmatpush2.msra.mxu0 0.0
    %3794 = vmatprep.subr.mxu0 0.0
    %3795 = vmatpush2.msra.mxu0 0.0
    %3796 = vmatprep.subr.mxu0 0.0
    %3797 = vmatpush2.msra.mxu0 0.0
    %3798 = vmatprep.subr.mxu0 0.0
    %3799 = vmatpush2.msra.mxu0 0.0
    %3800 = vmatprep.subr.mxu0 0.0
    %3801 = vmatpush2.msra.mxu0 0.0
    %3802 = vmatprep.subr.mxu0 0.0
    %3803 = vmatpush2.msra.mxu0 0.0
    %3804 = vmatprep.subr.mxu0 0.0
    %3805 = vmatpush2.msra.mxu0 0.0
    %3806 = vmatprep.subr.mxu0 0.0
    %3807 = vmatpush2.msra.mxu0 0.0
    %3808 = vmatprep.subr.mxu0 0.0
    %3809 = vmatpush2.msra.mxu0 0.0
    %3810 = vmatprep.mubr.f32.mxu0 0.0
    %3811 = vmatmul.mubr.f32.gmra.mxu0 %v3744
    %v3812 = vpop.f32.mrf.mxu0
    %v3813 = vadd.f32 0.0, %v3812
    %v3814 = vpop.f32.mrf.mxu0
    %3815 = vdwg.mxu0
    %3816 = vrot.lane.b32.xlu0 %v2721, 64
    %v3817 = vpop.permute.xlu0 %3816
    %v3820 = vsel %vm638, %v3739, 0
    %3822 = vmatprep.subr.mxu0 0.0
    %3823 = vmatpush1.msra.mxu0 0.0
    %3824 = vmatprep.subr.mxu0 0.0
    %3825 = vmatpush1.msra.mxu0 0.0
    %3826 = vmatprep.subr.mxu0 0.0
    %3827 = vmatpush1.msra.mxu0 0.0
    %3828 = vmatprep.subr.mxu0 0.0
    %3829 = vmatpush1.msra.mxu0 0.0
    %3830 = vmatprep.subr.mxu0 0.0
    %3831 = vmatpush1.msra.mxu0 0.0
    %3832 = vmatprep.subr.mxu0 0.0
    %3833 = vmatpush1.msra.mxu0 0.0
    %3834 = vmatprep.subr.mxu0 0.0
    %3835 = vmatpush1.msra.mxu0 0.0
    %3836 = vmatprep.subr.mxu0 0.0
    %3837 = vmatpush1.msra.mxu0 0.0
    %3838 = vmatprep.subr.mxu0 0.0
    %3839 = vmatpush1.msra.mxu0 0.0
    %3840 = vmatprep.subr.mxu0 0.0
    %3841 = vmatpush1.msra.mxu0 0.0
    %3842 = vmatprep.subr.mxu0 0.0
    %3843 = vmatpush1.msra.mxu0 0.0
    %3844 = vmatprep.subr.mxu0 0.0
    %3845 = vmatpush1.msra.mxu0 0.0
    %3846 = vmatprep.subr.mxu0 0.0
    %3847 = vmatpush1.msra.mxu0 0.0
    %3848 = vmatprep.subr.mxu0 0.0
    %3849 = vmatpush1.msra.mxu0 0.0
    %3850 = vmatprep.subr.mxu0 0.0
    %3851 = vmatpush1.msra.mxu0 0.0
    %3852 = vmatprep.subr.mxu0 0.0
    %3853 = vmatpush1.msra.mxu0 %v3817
    %3854 = vmatprep.subr.mxu0 0.0
    %3855 = vmatpush2.msra.mxu0 0.0
    %3856 = vmatprep.subr.mxu0 0.0
    %3857 = vmatpush2.msra.mxu0 0.0
    %3858 = vmatprep.subr.mxu0 0.0
    %3859 = vmatpush2.msra.mxu0 0.0
    %3860 = vmatprep.subr.mxu0 0.0
    %3861 = vmatpush2.msra.mxu0 0.0
    %3862 = vmatprep.subr.mxu0 0.0
    %3863 = vmatpush2.msra.mxu0 0.0
    %3864 = vmatprep.subr.mxu0 0.0
    %3865 = vmatpush2.msra.mxu0 0.0
    %3866 = vmatprep.subr.mxu0 0.0
    %3867 = vmatpush2.msra.mxu0 0.0
    %3868 = vmatprep.subr.mxu0 0.0
    %3869 = vmatpush2.msra.mxu0 0.0
    %3870 = vmatprep.subr.mxu0 0.0
    %3871 = vmatpush2.msra.mxu0 0.0
    %3872 = vmatprep.subr.mxu0 0.0
    %3873 = vmatpush2.msra.mxu0 0.0
    %3874 = vmatprep.subr.mxu0 0.0
    %3875 = vmatpush2.msra.mxu0 0.0
    %3876 = vmatprep.subr.mxu0 0.0
    %3877 = vmatpush2.msra.mxu0 0.0
    %3878 = vmatprep.subr.mxu0 0.0
    %3879 = vmatpush2.msra.mxu0 0.0
    %3880 = vmatprep.subr.mxu0 0.0
    %3881 = vmatpush2.msra.mxu0 0.0
    %3882 = vmatprep.subr.mxu0 0.0
    %3883 = vmatpush2.msra.mxu0 0.0
    %3884 = vmatprep.subr.mxu0 0.0
    %3885 = vmatpush2.msra.mxu0 0.0
    %3886 = vmatprep.mubr.f32.mxu0 0.0
    %3887 = vmatmul.mubr.f32.gmra.mxu0 %v3820
    %v3888 = vpop.f32.mrf.mxu0
    %v3889 = vadd.f32 0.0, %v3888
    %v3890 = vpop.f32.mrf.mxu0
    %3891 = vdwg.mxu0
    %v3892 = vld [vmem:[%s3055 + $0x40] sm:$0xff]
    %v3893 = vld [vmem:[%s3055 + $0x48] sm:$0xff]
    %v3894 = vld [vmem:[%s3055 + $0x50] sm:$0xff]
    %v3895 = vld [vmem:[%s3055 + $0x58] sm:$0xff]
    %v3897 = vsel %vm485, %v3813, 0
    %v3900 = vsel %vm485, %v3889, 0
    %3902 = vmatprep.subr.mxu0 0.0
    %3903 = vmatpush1.msra.mxu0 0.0
    %3904 = vmatprep.subr.mxu0 0.0
    %3905 = vmatpush1.msra.mxu0 0.0
    %3906 = vmatprep.subr.mxu0 0.0
    %3907 = vmatpush1.msra.mxu0 0.0
    %3908 = vmatprep.subr.mxu0 0.0
    %3909 = vmatpush1.msra.mxu0 0.0
    %3910 = vmatprep.subr.mxu0 0.0
    %3911 = vmatpush1.msra.mxu0 0.0
    %3912 = vmatprep.subr.mxu0 0.0
    %3913 = vmatpush1.msra.mxu0 0.0
    %3914 = vmatprep.subr.mxu0 0.0
    %3915 = vmatpush1.msra.mxu0 0.0
    %3916 = vmatprep.subr.mxu0 0.0
    %3917 = vmatpush1.msra.mxu0 0.0
    %3918 = vmatprep.subr.mxu0 0.0
    %3919 = vmatpush1.msra.mxu0 0.0
    %3920 = vmatprep.subr.mxu0 0.0
    %3921 = vmatpush1.msra.mxu0 0.0
    %3922 = vmatprep.subr.mxu0 0.0
    %3923 = vmatpush1.msra.mxu0 0.0
    %3924 = vmatprep.subr.mxu0 0.0
    %3925 = vmatpush1.msra.mxu0 0.0
    %3926 = vmatprep.subr.mxu0 0.0
    %3927 = vmatpush1.msra.mxu0 %v3895
    %3928 = vmatprep.subr.mxu0 0.0
    %3929 = vmatpush1.msra.mxu0 %v3894
    %3930 = vmatprep.subr.mxu0 0.0
    %3931 = vmatpush1.msra.mxu0 %v3893
    %3932 = vmatprep.subr.mxu0 0.0
    %3933 = vmatpush1.msra.mxu0 %v3892
    %3934 = vmatprep.subr.mxu0 0.0
    %3935 = vmatpush2.msra.mxu0 0.0
    %3936 = vmatprep.subr.mxu0 0.0
    %3937 = vmatpush2.msra.mxu0 0.0
    %3938 = vmatprep.subr.mxu0 0.0
    %3939 = vmatpush2.msra.mxu0 0.0
    %3940 = vmatprep.subr.mxu0 0.0
    %3941 = vmatpush2.msra.mxu0 0.0
    %3942 = vmatprep.subr.mxu0 0.0
    %3943 = vmatpush2.msra.mxu0 0.0
    %3944 = vmatprep.subr.mxu0 0.0
    %3945 = vmatpush2.msra.mxu0 0.0
    %3946 = vmatprep.subr.mxu0 0.0
    %3947 = vmatpush2.msra.mxu0 0.0
    %3948 = vmatprep.subr.mxu0 0.0
    %3949 = vmatpush2.msra.mxu0 0.0
    %3950 = vmatprep.subr.mxu0 0.0
    %3951 = vmatpush2.msra.mxu0 0.0
    %3952 = vmatprep.subr.mxu0 0.0
    %3953 = vmatpush2.msra.mxu0 0.0
    %3954 = vmatprep.subr.mxu0 0.0
    %3955 = vmatpush2.msra.mxu0 0.0
    %3956 = vmatprep.subr.mxu0 0.0
    %3957 = vmatpush2.msra.mxu0 0.0
    %3958 = vmatprep.subr.mxu0 0.0
    %3959 = vmatpush2.msra.mxu0 0.0
    %3960 = vmatprep.subr.mxu0 0.0
    %3961 = vmatpush2.msra.mxu0 0.0
    %3962 = vmatprep.subr.mxu0 0.0
    %3963 = vmatpush2.msra.mxu0 0.0
    %3964 = vmatprep.subr.mxu0 0.0
    %3965 = vmatpush2.msra.mxu0 0.0
    %3966 = vmatprep.mubr.f32.mxu0 0.0
    %3967 = vmatmul.mubr.f32.gmra.mxu0 %v3897
    %v3968 = vpop.f32.mrf.mxu0
    %v3969 = vadd.f32 0.0, %v3968
    %v3970 = vpop.f32.mrf.mxu0
    %3971 = vmatprep.mubr.f32.mxu0 0.0
    %3972 = vmatmul.mubr.f32.gmra.mxu0 %v3900
    %v3973 = vpop.f32.mrf.mxu0
    %v3974 = vadd.f32 0.0, %v3973
    %v3975 = vpop.f32.mrf.mxu0
    %3976 = vdwg.mxu0
    %v3977 = vadd.f32 %v3560, %v3969
    %v3978 = vadd.f32 %v3561, %v3974
    %3979 = vrot.lane.b32.xlu0 %v2724, 32
    %v3980 = vpop.permute.xlu0 %3979
    %3981 = vrot.lane.b32.xlu0 %v2641, 32
    %v3982 = vpop.permute.xlu0 %3981
    %v3983 = vsel %vm485, %v3980, 0
    %v3985 = vsel %vm485, %v3982, 0
    %3987 = vmatprep.subr.mxu0 0.0
    %3988 = vmatpush1.xpose.msra.mxu0 0.0
    %3989 = vmatprep.subr.mxu0 0.0
    %3990 = vmatpush1.xpose.msra.mxu0 0.0
    %3991 = vmatprep.subr.mxu0 0.0
    %3992 = vmatpush1.xpose.msra.mxu0 0.0
    %3993 = vmatprep.subr.mxu0 0.0
    %3994 = vmatpush1.xpose.msra.mxu0 0.0
    %3995 = vmatprep.subr.mxu0 0.0
    %3996 = vmatpush1.xpose.msra.mxu0 0.0
    %3997 = vmatprep.subr.mxu0 0.0
    %3998 = vmatpush1.xpose.msra.mxu0 0.0
    %3999 = vmatprep.subr.mxu0 0.0
    %4000 = vmatpush1.xpose.msra.mxu0 0.0
    %4001 = vmatprep.subr.mxu0 0.0
    %4002 = vmatpush1.xpose.msra.mxu0 0.0
    %4003 = vmatprep.subr.mxu0 0.0
    %4004 = vmatpush1.xpose.msra.mxu0 0.0
    %4005 = vmatprep.subr.mxu0 0.0
    %4006 = vmatpush1.xpose.msra.mxu0 0.0
    %4007 = vmatprep.subr.mxu0 0.0
    %4008 = vmatpush1.xpose.msra.mxu0 0.0
    %4009 = vmatprep.subr.mxu0 0.0
    %4010 = vmatpush1.xpose.msra.mxu0 0.0
    %4011 = vmatprep.subr.mxu0 0.0
    %4012 = vmatpush1.xpose.msra.mxu0 0.0
    %4013 = vmatprep.subr.mxu0 0.0
    %4014 = vmatpush1.xpose.msra.mxu0 0.0
    %4015 = vmatprep.subr.mxu0 0.0
    %4016 = vmatpush1.xpose.msra.mxu0 0.0
    %4017 = vmatprep.subr.mxu0 0.0
    %4018 = vmatpush1.xpose.msra.mxu0 %v3985
    %4019 = vmatprep.subr.mxu0 0.0
    %4020 = vmatpush2.xpose.msra.mxu0 0.0
    %4021 = vmatprep.subr.mxu0 0.0
    %4022 = vmatpush2.xpose.msra.mxu0 0.0
    %4023 = vmatprep.subr.mxu0 0.0
    %4024 = vmatpush2.xpose.msra.mxu0 0.0
    %4025 = vmatprep.subr.mxu0 0.0
    %4026 = vmatpush2.xpose.msra.mxu0 0.0
    %4027 = vmatprep.subr.mxu0 0.0
    %4028 = vmatpush2.xpose.msra.mxu0 0.0
    %4029 = vmatprep.subr.mxu0 0.0
    %4030 = vmatpush2.xpose.msra.mxu0 0.0
    %4031 = vmatprep.subr.mxu0 0.0
    %4032 = vmatpush2.xpose.msra.mxu0 0.0
    %4033 = vmatprep.subr.mxu0 0.0
    %4034 = vmatpush2.xpose.msra.mxu0 0.0
    %4035 = vmatprep.subr.mxu0 0.0
    %4036 = vmatpush2.xpose.msra.mxu0 0.0
    %4037 = vmatprep.subr.mxu0 0.0
    %4038 = vmatpush2.xpose.msra.mxu0 0.0
    %4039 = vmatprep.subr.mxu0 0.0
    %4040 = vmatpush2.xpose.msra.mxu0 0.0
    %4041 = vmatprep.subr.mxu0 0.0
    %4042 = vmatpush2.xpose.msra.mxu0 0.0
    %4043 = vmatprep.subr.mxu0 0.0
    %4044 = vmatpush2.xpose.msra.mxu0 0.0
    %4045 = vmatprep.subr.mxu0 0.0
    %4046 = vmatpush2.xpose.msra.mxu0 0.0
    %4047 = vmatprep.subr.mxu0 0.0
    %4048 = vmatpush2.xpose.msra.mxu0 0.0
    %4049 = vmatprep.subr.mxu0 0.0
    %4050 = vmatpush2.xpose.msra.mxu0 0.0
    %4051 = vmatprep.mubr.f32.mxu0 0.0
    %4052 = vmatmul.mubr.f32.gmra.mxu0 %v3983
    %v4053 = vpop.f32.mrf.mxu0
    %v4054 = vadd.f32 %v478, %v4053
    %v4055 = vpop.f32.mrf.mxu0
    %4056 = vdwg.mxu0
    %4057 = vrot.lane.b32.xlu0 %v2725, 32
    %v4058 = vpop.permute.xlu0 %4057
    %4059 = vrot.lane.b32.xlu0 %v2647, 32
    %v4060 = vpop.permute.xlu0 %4059
    %v4061 = vsel %vm485, %v4058, 0
    %v4063 = vsel %vm485, %v4060, 0
    %4065 = vmatprep.subr.mxu0 0.0
    %4066 = vmatpush1.xpose.msra.mxu0 0.0
    %4067 = vmatprep.subr.mxu0 0.0
    %4068 = vmatpush1.xpose.msra.mxu0 0.0
    %4069 = vmatprep.subr.mxu0 0.0
    %4070 = vmatpush1.xpose.msra.mxu0 0.0
    %4071 = vmatprep.subr.mxu0 0.0
    %4072 = vmatpush1.xpose.msra.mxu0 0.0
    %4073 = vmatprep.subr.mxu0 0.0
    %4074 = vmatpush1.xpose.msra.mxu0 0.0
    %4075 = vmatprep.subr.mxu0 0.0
    %4076 = vmatpush1.xpose.msra.mxu0 0.0
    %4077 = vmatprep.subr.mxu0 0.0
    %4078 = vmatpush1.xpose.msra.mxu0 0.0
    %4079 = vmatprep.subr.mxu0 0.0
    %4080 = vmatpush1.xpose.msra.mxu0 0.0
    %4081 = vmatprep.subr.mxu0 0.0
    %4082 = vmatpush1.xpose.msra.mxu0 0.0
    %4083 = vmatprep.subr.mxu0 0.0
    %4084 = vmatpush1.xpose.msra.mxu0 0.0
    %4085 = vmatprep.subr.mxu0 0.0
    %4086 = vmatpush1.xpose.msra.mxu0 0.0
    %4087 = vmatprep.subr.mxu0 0.0
    %4088 = vmatpush1.xpose.msra.mxu0 0.0
    %4089 = vmatprep.subr.mxu0 0.0
    %4090 = vmatpush1.xpose.msra.mxu0 0.0
    %4091 = vmatprep.subr.mxu0 0.0
    %4092 = vmatpush1.xpose.msra.mxu0 0.0
    %4093 = vmatprep.subr.mxu0 0.0
    %4094 = vmatpush1.xpose.msra.mxu0 0.0
    %4095 = vmatprep.subr.mxu0 0.0
    %4096 = vmatpush1.xpose.msra.mxu0 %v4063
    %4097 = vmatprep.subr.mxu0 0.0
    %4098 = vmatpush2.xpose.msra.mxu0 0.0
    %4099 = vmatprep.subr.mxu0 0.0
    %4100 = vmatpush2.xpose.msra.mxu0 0.0
    %4101 = vmatprep.subr.mxu0 0.0
    %4102 = vmatpush2.xpose.msra.mxu0 0.0
    %4103 = vmatprep.subr.mxu0 0.0
    %4104 = vmatpush2.xpose.msra.mxu0 0.0
    %4105 = vmatprep.subr.mxu0 0.0
    %4106 = vmatpush2.xpose.msra.mxu0 0.0
    %4107 = vmatprep.subr.mxu0 0.0
    %4108 = vmatpush2.xpose.msra.mxu0 0.0
    %4109 = vmatprep.subr.mxu0 0.0
    %4110 = vmatpush2.xpose.msra.mxu0 0.0
    %4111 = vmatprep.subr.mxu0 0.0
    %4112 = vmatpush2.xpose.msra.mxu0 0.0
    %4113 = vmatprep.subr.mxu0 0.0
    %4114 = vmatpush2.xpose.msra.mxu0 0.0
    %4115 = vmatprep.subr.mxu0 0.0
    %4116 = vmatpush2.xpose.msra.mxu0 0.0
    %4117 = vmatprep.subr.mxu0 0.0
    %4118 = vmatpush2.xpose.msra.mxu0 0.0
    %4119 = vmatprep.subr.mxu0 0.0
    %4120 = vmatpush2.xpose.msra.mxu0 0.0
    %4121 = vmatprep.subr.mxu0 0.0
    %4122 = vmatpush2.xpose.msra.mxu0 0.0
    %4123 = vmatprep.subr.mxu0 0.0
    %4124 = vmatpush2.xpose.msra.mxu0 0.0
    %4125 = vmatprep.subr.mxu0 0.0
    %4126 = vmatpush2.xpose.msra.mxu0 0.0
    %4127 = vmatprep.subr.mxu0 0.0
    %4128 = vmatpush2.xpose.msra.mxu0 0.0
    %4129 = vmatprep.mubr.f32.mxu0 0.0
    %4130 = vmatmul.mubr.f32.gmra.mxu0 %v4061
    %v4131 = vpop.f32.mrf.mxu0
    %v4132 = vadd.f32 %v482, %v4131
    %v4133 = vpop.f32.mrf.mxu0
    %4134 = vdwg.mxu0
    %v4135 = vsel %vm638, %v4054, -inf
    %4136 = vmax.xlane.f32.xlu0 %v4135
    %v4137 = vpop.xlane.xlu0 %4136
    %v4138 = vsel %vm638, %v4132, -inf
    %4139 = vmax.xlane.f32.xlu0 %v4138
    %v4140 = vpop.xlane.xlu0 %4139
    %v4141 = vsub.f32 %v4054, %v4137
    %v4142 = vsub.f32 %v4132, %v4140
    %v4143 = vmul.f32 %v4141, 1.442695
    %v4144 = vpow.pop %v4143
    %v4145 = vmul.f32 %v4142, 1.442695
    %v4146 = vpow.pop %v4145
    %v4147 = vsel %vm638, %v4144, 0.0
    %4148 = vadd.xlane.f32.xlu0 %v4147
    %v4149 = vpop.xlane.xlu0 %4148
    %v4150 = vsel %vm638, %v4146, 0.0
    %4151 = vadd.xlane.f32.xlu0 %v4150
    %v4152 = vpop.xlane.xlu0 %4151
    %v4153 = vrcp.pop %v4149
    %v4154 = vmul.f32 %v4144, %v4153
    %v4155 = vrcp.pop %v4152
    %v4156 = vmul.f32 %v4146, %v4155
    %4157 = vrot.lane.b32.xlu0 %v2716, 32
    %v4158 = vpop.permute.xlu0 %4157
    %v4161 = vsel %vm638, %v4154, 0
    %4163 = vmatprep.subr.mxu0 0.0
    %4164 = vmatpush1.msra.mxu0 0.0
    %4165 = vmatprep.subr.mxu0 0.0
    %4166 = vmatpush1.msra.mxu0 0.0
    %4167 = vmatprep.subr.mxu0 0.0
    %4168 = vmatpush1.msra.mxu0 0.0
    %4169 = vmatprep.subr.mxu0 0.0
    %4170 = vmatpush1.msra.mxu0 0.0
    %4171 = vmatprep.subr.mxu0 0.0
    %4172 = vmatpush1.msra.mxu0 0.0
    %4173 = vmatprep.subr.mxu0 0.0
    %4174 = vmatpush1.msra.mxu0 0.0
    %4175 = vmatprep.subr.mxu0 0.0
    %4176 = vmatpush1.msra.mxu0 0.0
    %4177 = vmatprep.subr.mxu0 0.0
    %4178 = vmatpush1.msra.mxu0 0.0
    %4179 = vmatprep.subr.mxu0 0.0
    %4180 = vmatpush1.msra.mxu0 0.0
    %4181 = vmatprep.subr.mxu0 0.0
    %4182 = vmatpush1.msra.mxu0 0.0
    %4183 = vmatprep.subr.mxu0 0.0
    %4184 = vmatpush1.msra.mxu0 0.0
    %4185 = vmatprep.subr.mxu0 0.0
    %4186 = vmatpush1.msra.mxu0 0.0
    %4187 = vmatprep.subr.mxu0 0.0
    %4188 = vmatpush1.msra.mxu0 0.0
    %4189 = vmatprep.subr.mxu0 0.0
    %4190 = vmatpush1.msra.mxu0 0.0
    %4191 = vmatprep.subr.mxu0 0.0
    %4192 = vmatpush1.msra.mxu0 0.0
    %4193 = vmatprep.subr.mxu0 0.0
    %4194 = vmatpush1.msra.mxu0 %v4158
    %4195 = vmatprep.subr.mxu0 0.0
    %4196 = vmatpush2.msra.mxu0 0.0
    %4197 = vmatprep.subr.mxu0 0.0
    %4198 = vmatpush2.msra.mxu0 0.0
    %4199 = vmatprep.subr.mxu0 0.0
    %4200 = vmatpush2.msra.mxu0 0.0
    %4201 = vmatprep.subr.mxu0 0.0
    %4202 = vmatpush2.msra.mxu0 0.0
    %4203 = vmatprep.subr.mxu0 0.0
    %4204 = vmatpush2.msra.mxu0 0.0
    %4205 = vmatprep.subr.mxu0 0.0
    %4206 = vmatpush2.msra.mxu0 0.0
    %4207 = vmatprep.subr.mxu0 0.0
    %4208 = vmatpush2.msra.mxu0 0.0
    %4209 = vmatprep.subr.mxu0 0.0
    %4210 = vmatpush2.msra.mxu0 0.0
    %4211 = vmatprep.subr.mxu0 0.0
    %4212 = vmatpush2.msra.mxu0 0.0
    %4213 = vmatprep.subr.mxu0 0.0
    %4214 = vmatpush2.msra.mxu0 0.0
    %4215 = vmatprep.subr.mxu0 0.0
    %4216 = vmatpush2.msra.mxu0 0.0
    %4217 = vmatprep.subr.mxu0 0.0
    %4218 = vmatpush2.msra.mxu0 0.0
    %4219 = vmatprep.subr.mxu0 0.0
    %4220 = vmatpush2.msra.mxu0 0.0
    %4221 = vmatprep.subr.mxu0 0.0
    %4222 = vmatpush2.msra.mxu0 0.0
    %4223 = vmatprep.subr.mxu0 0.0
    %4224 = vmatpush2.msra.mxu0 0.0
    %4225 = vmatprep.subr.mxu0 0.0
    %4226 = vmatpush2.msra.mxu0 0.0
    %4227 = vmatprep.mubr.f32.mxu0 0.0
    %4228 = vmatmul.mubr.f32.gmra.mxu0 %v4161
    %v4229 = vpop.f32.mrf.mxu0
    %v4230 = vadd.f32 0.0, %v4229
    %v4231 = vpop.f32.mrf.mxu0
    %4232 = vdwg.mxu0
    %4233 = vrot.lane.b32.xlu0 %v2721, 32
    %v4234 = vpop.permute.xlu0 %4233
    %v4237 = vsel %vm638, %v4156, 0
    %4239 = vmatprep.subr.mxu0 0.0
    %4240 = vmatpush1.msra.mxu0 0.0
    %4241 = vmatprep.subr.mxu0 0.0
    %4242 = vmatpush1.msra.mxu0 0.0
    %4243 = vmatprep.subr.mxu0 0.0
    %4244 = vmatpush1.msra.mxu0 0.0
    %4245 = vmatprep.subr.mxu0 0.0
    %4246 = vmatpush1.msra.mxu0 0.0
    %4247 = vmatprep.subr.mxu0 0.0
    %4248 = vmatpush1.msra.mxu0 0.0
    %4249 = vmatprep.subr.mxu0 0.0
    %4250 = vmatpush1.msra.mxu0 0.0
    %4251 = vmatprep.subr.mxu0 0.0
    %4252 = vmatpush1.msra.mxu0 0.0
    %4253 = vmatprep.subr.mxu0 0.0
    %4254 = vmatpush1.msra.mxu0 0.0
    %4255 = vmatprep.subr.mxu0 0.0
    %4256 = vmatpush1.msra.mxu0 0.0
    %4257 = vmatprep.subr.mxu0 0.0
    %4258 = vmatpush1.msra.mxu0 0.0
    %4259 = vmatprep.subr.mxu0 0.0
    %4260 = vmatpush1.msra.mxu0 0.0
    %4261 = vmatprep.subr.mxu0 0.0
    %4262 = vmatpush1.msra.mxu0 0.0
    %4263 = vmatprep.subr.mxu0 0.0
    %4264 = vmatpush1.msra.mxu0 0.0
    %4265 = vmatprep.subr.mxu0 0.0
    %4266 = vmatpush1.msra.mxu0 0.0
    %4267 = vmatprep.subr.mxu0 0.0
    %4268 = vmatpush1.msra.mxu0 0.0
    %4269 = vmatprep.subr.mxu0 0.0
    %4270 = vmatpush1.msra.mxu0 %v4234
    %4271 = vmatprep.subr.mxu0 0.0
    %4272 = vmatpush2.msra.mxu0 0.0
    %4273 = vmatprep.subr.mxu0 0.0
    %4274 = vmatpush2.msra.mxu0 0.0
    %4275 = vmatprep.subr.mxu0 0.0
    %4276 = vmatpush2.msra.mxu0 0.0
    %4277 = vmatprep.subr.mxu0 0.0
    %4278 = vmatpush2.msra.mxu0 0.0
    %4279 = vmatprep.subr.mxu0 0.0
    %4280 = vmatpush2.msra.mxu0 0.0
    %4281 = vmatprep.subr.mxu0 0.0
    %4282 = vmatpush2.msra.mxu0 0.0
    %4283 = vmatprep.subr.mxu0 0.0
    %4284 = vmatpush2.msra.mxu0 0.0
    %4285 = vmatprep.subr.mxu0 0.0
    %4286 = vmatpush2.msra.mxu0 0.0
    %4287 = vmatprep.subr.mxu0 0.0
    %4288 = vmatpush2.msra.mxu0 0.0
    %4289 = vmatprep.subr.mxu0 0.0
    %4290 = vmatpush2.msra.mxu0 0.0
    %4291 = vmatprep.subr.mxu0 0.0
    %4292 = vmatpush2.msra.mxu0 0.0
    %4293 = vmatprep.subr.mxu0 0.0
    %4294 = vmatpush2.msra.mxu0 0.0
    %4295 = vmatprep.subr.mxu0 0.0
    %4296 = vmatpush2.msra.mxu0 0.0
    %4297 = vmatprep.subr.mxu0 0.0
    %4298 = vmatpush2.msra.mxu0 0.0
    %4299 = vmatprep.subr.mxu0 0.0
    %4300 = vmatpush2.msra.mxu0 0.0
    %4301 = vmatprep.subr.mxu0 0.0
    %4302 = vmatpush2.msra.mxu0 0.0
    %4303 = vmatprep.mubr.f32.mxu0 0.0
    %4304 = vmatmul.mubr.f32.gmra.mxu0 %v4237
    %v4305 = vpop.f32.mrf.mxu0
    %v4306 = vadd.f32 0.0, %v4305
    %v4307 = vpop.f32.mrf.mxu0
    %4308 = vdwg.mxu0
    %v4309 = vld [vmem:[%s3055 + $0x60] sm:$0xff]
    %v4310 = vld [vmem:[%s3055 + $0x68] sm:$0xff]
    %v4311 = vld [vmem:[%s3055 + $0x70] sm:$0xff]
    %v4312 = vld [vmem:[%s3055 + $0x78] sm:$0xff]
    %v4314 = vsel %vm485, %v4230, 0
    %v4317 = vsel %vm485, %v4306, 0
    %4319 = vmatprep.subr.mxu0 0.0
    %4320 = vmatpush1.msra.mxu0 0.0
    %4321 = vmatprep.subr.mxu0 0.0
    %4322 = vmatpush1.msra.mxu0 0.0
    %4323 = vmatprep.subr.mxu0 0.0
    %4324 = vmatpush1.msra.mxu0 0.0
    %4325 = vmatprep.subr.mxu0 0.0
    %4326 = vmatpush1.msra.mxu0 0.0
    %4327 = vmatprep.subr.mxu0 0.0
    %4328 = vmatpush1.msra.mxu0 0.0
    %4329 = vmatprep.subr.mxu0 0.0
    %4330 = vmatpush1.msra.mxu0 0.0
    %4331 = vmatprep.subr.mxu0 0.0
    %4332 = vmatpush1.msra.mxu0 0.0
    %4333 = vmatprep.subr.mxu0 0.0
    %4334 = vmatpush1.msra.mxu0 0.0
    %4335 = vmatprep.subr.mxu0 0.0
    %4336 = vmatpush1.msra.mxu0 0.0
    %4337 = vmatprep.subr.mxu0 0.0
    %4338 = vmatpush1.msra.mxu0 0.0
    %4339 = vmatprep.subr.mxu0 0.0
    %4340 = vmatpush1.msra.mxu0 0.0
    %4341 = vmatprep.subr.mxu0 0.0
    %4342 = vmatpush1.msra.mxu0 0.0
    %4343 = vmatprep.subr.mxu0 0.0
    %4344 = vmatpush1.msra.mxu0 %v4312
    %4345 = vmatprep.subr.mxu0 0.0
    %4346 = vmatpush1.msra.mxu0 %v4311
    %4347 = vmatprep.subr.mxu0 0.0
    %4348 = vmatpush1.msra.mxu0 %v4310
    %4349 = vmatprep.subr.mxu0 0.0
    %4350 = vmatpush1.msra.mxu0 %v4309
    %4351 = vmatprep.subr.mxu0 0.0
    %4352 = vmatpush2.msra.mxu0 0.0
    %4353 = vmatprep.subr.mxu0 0.0
    %4354 = vmatpush2.msra.mxu0 0.0
    %4355 = vmatprep.subr.mxu0 0.0
    %4356 = vmatpush2.msra.mxu0 0.0
    %4357 = vmatprep.subr.mxu0 0.0
    %4358 = vmatpush2.msra.mxu0 0.0
    %4359 = vmatprep.subr.mxu0 0.0
    %4360 = vmatpush2.msra.mxu0 0.0
    %4361 = vmatprep.subr.mxu0 0.0
    %4362 = vmatpush2.msra.mxu0 0.0
    %4363 = vmatprep.subr.mxu0 0.0
    %4364 = vmatpush2.msra.mxu0 0.0
    %4365 = vmatprep.subr.mxu0 0.0
    %4366 = vmatpush2.msra.mxu0 0.0
    %4367 = vmatprep.subr.mxu0 0.0
    %4368 = vmatpush2.msra.mxu0 0.0
    %4369 = vmatprep.subr.mxu0 0.0
    %4370 = vmatpush2.msra.mxu0 0.0
    %4371 = vmatprep.subr.mxu0 0.0
    %4372 = vmatpush2.msra.mxu0 0.0
    %4373 = vmatprep.subr.mxu0 0.0
    %4374 = vmatpush2.msra.mxu0 0.0
    %4375 = vmatprep.subr.mxu0 0.0
    %4376 = vmatpush2.msra.mxu0 0.0
    %4377 = vmatprep.subr.mxu0 0.0
    %4378 = vmatpush2.msra.mxu0 0.0
    %4379 = vmatprep.subr.mxu0 0.0
    %4380 = vmatpush2.msra.mxu0 0.0
    %4381 = vmatprep.subr.mxu0 0.0
    %4382 = vmatpush2.msra.mxu0 0.0
    %4383 = vmatprep.mubr.f32.mxu0 0.0
    %4384 = vmatmul.mubr.f32.gmra.mxu0 %v4314
    %v4385 = vpop.f32.mrf.mxu0
    %v4386 = vadd.f32 0.0, %v4385
    %v4387 = vpop.f32.mrf.mxu0
    %4388 = vmatprep.mubr.f32.mxu0 0.0
    %4389 = vmatmul.mubr.f32.gmra.mxu0 %v4317
    %v4390 = vpop.f32.mrf.mxu0
    %v4391 = vadd.f32 0.0, %v4390
    %v4392 = vpop.f32.mrf.mxu0
    %4393 = vdwg.mxu0
    %v4394 = vadd.f32 %v3977, %v4386
    %v4395 = vadd.f32 %v3978, %v4391
    %v4396 = vadd.f32 %v4394, %v2461
    %v4397 = vadd.f32 %v4395, %v2462
    %s4398 = scalar_lea.vmem [#allocation11], 1
    %v4399 = vld [vmem:[%s4398] sm:$0x1]
    %s4400 = scalar_lea.vmem [#allocation12], 1
    %v4401 = vld [vmem:[%s4400] sm:$0x1]
    %4402 = vadd.xlane.f32.xlu0 %v4396
    %v4403 = vpop.xlane.xlu0 %4402
    %4404 = vadd.xlane.f32.xlu0 %v4397
    %v4405 = vpop.xlane.xlu0 %4404
    %v4406 = vmul.f32 %v4403, %v2155
    %v4407 = vmul.f32 %v4405, %v2155
    %v4408 = vsub.f32 %v4396, %v4406
    %v4409 = vsub.f32 %v4397, %v4407
    %v4410 = vmul.f32 %v4408, %v4408
    %v4411 = vmul.f32 %v4409, %v4409
    %4412 = vadd.xlane.f32.xlu0 %v4410
    %v4413 = vpop.xlane.xlu0 %4412
    %4414 = vadd.xlane.f32.xlu0 %v4411
    %v4415 = vpop.xlane.xlu0 %4414
    %v4416 = vmul.f32 %v4413, %v2155
    %v4417 = vmul.f32 %v4415, %v2155
    %v4418 = vadd.f32 %v4416, 1e-06
    %v4419 = vadd.f32 %v4417, 1e-06
    %v4420 = vrsqrt.pop %v4418
    %v4421 = vrsqrt.pop %v4419
    %v4422 = vmul.f32 %v4408, %v4420
    %v4423 = vmul.f32 %v4409, %v4421
    %v4425 = vlaneseq
    %v4426 = vshrl.u32 %v4425, 7
    %v4427 = vsub.s32 0, %v4426
    %v4428 = vrot.slane %v4399, %v4427
    %v4430 = vmul.f32 %v4422, %v4428
    %v4431 = vmul.f32 %v4423, %v4428
    %v4433 = vlaneseq
    %v4434 = vshrl.u32 %v4433, 7
    %v4435 = vsub.s32 0, %v4434
    %v4436 = vrot.slane %v4401, %v4435
    %v4438 = vadd.f32 %v4430, %v4436
    %v4439 = vadd.f32 %v4431, %v4436
    %s4440 = scalar_lea.vmem [#allocation14], 256
    %v4441 = vld [vmem:[%s4440] sm:$0xff]
    %v4442 = vld [vmem:[%s4440 + $0x8] sm:$0xff]
    %v4443 = vld [vmem:[%s4440 + $0x10] sm:$0xff]
    %v4444 = vld [vmem:[%s4440 + $0x18] sm:$0xff]
    %v4445 = vld [vmem:[%s4440 + $0x20] sm:$0xff]
    %v4446 = vld [vmem:[%s4440 + $0x28] sm:$0xff]
    %v4447 = vld [vmem:[%s4440 + $0x30] sm:$0xff]
    %v4448 = vld [vmem:[%s4440 + $0x38] sm:$0xff]
    %v4449 = vld [vmem:[%s4440 + $0x40] sm:$0xff]
    %v4450 = vld [vmem:[%s4440 + $0x48] sm:$0xff]
    %v4451 = vld [vmem:[%s4440 + $0x50] sm:$0xff]
    %v4452 = vld [vmem:[%s4440 + $0x58] sm:$0xff]
    %v4453 = vld [vmem:[%s4440 + $0x60] sm:$0xff]
    %v4454 = vld [vmem:[%s4440 + $0x68] sm:$0xff]
    %v4455 = vld [vmem:[%s4440 + $0x70] sm:$0xff]
    %v4456 = vld [vmem:[%s4440 + $0x78] sm:$0xff]
    %v4457 = vld [vmem:[%s4440 + $0x80] sm:$0xff]
    %v4458 = vld [vmem:[%s4440 + $0x88] sm:$0xff]
    %v4459 = vld [vmem:[%s4440 + $0x90] sm:$0xff]
    %v4460 = vld [vmem:[%s4440 + $0x98] sm:$0xff]
    %v4461 = vld [vmem:[%s4440 + $0xa0] sm:$0xff]
    %v4462 = vld [vmem:[%s4440 + $0xa8] sm:$0xff]
    %v4463 = vld [vmem:[%s4440 + $0xb0] sm:$0xff]
    %v4464 = vld [vmem:[%s4440 + $0xb8] sm:$0xff]
    %v4465 = vld [vmem:[%s4440 + $0xc0] sm:$0xff]
    %v4466 = vld [vmem:[%s4440 + $0xc8] sm:$0xff]
    %v4467 = vld [vmem:[%s4440 + $0xd0] sm:$0xff]
    %v4468 = vld [vmem:[%s4440 + $0xd8] sm:$0xff]
    %v4469 = vld [vmem:[%s4440 + $0xe0] sm:$0xff]
    %v4470 = vld [vmem:[%s4440 + $0xe8] sm:$0xff]
    %v4471 = vld [vmem:[%s4440 + $0xf0] sm:$0xff]
    %v4472 = vld [vmem:[%s4440 + $0xf8] sm:$0xff]
    %s4473 = scalar_lea.vmem [#allocation15], 2
    %v4474 = vld [vmem:[%s4473] sm:$0x3]
    %v4476 = vlaneseq
    %v4477 = vshrl.u32 %v4476, 7
    %v4478 = vsub.s32 0, %v4477
    %v4479 = vrot.slane %v4474, %v4478
    %v4480 = vlaneseq
    %v4481 = vshrl.u32 %v4480, 7
    %v4482 = vsub.s32 1, %v4481
    %v4483 = vrot.slane %v4474, %v4482
    %4486 = vmatprep.subr.mxu0 %v4472
    %4487 = vmatpush1.msra.mxu0 %v4471
    %4488 = vmatprep.subr.mxu0 %v4470
    %4489 = vmatpush1.msra.mxu0 %v4469
    %4490 = vmatprep.subr.mxu0 %v4468
    %4491 = vmatpush1.msra.mxu0 %v4467
    %4492 = vmatprep.subr.mxu0 %v4466
    %4493 = vmatpush1.msra.mxu0 %v4465
    %4494 = vmatprep.subr.mxu0 %v4464
    %4495 = vmatpush1.msra.mxu0 %v4463
    %4496 = vmatprep.subr.mxu0 %v4462
    %4497 = vmatpush1.msra.mxu0 %v4461
    %4498 = vmatprep.subr.mxu0 %v4460
    %4499 = vmatpush1.msra.mxu0 %v4459
    %4500 = vmatprep.subr.mxu0 %v4458
    %4501 = vmatpush1.msra.mxu0 %v4457
    %4502 = vmatprep.subr.mxu0 %v4456
    %4503 = vmatpush1.msra.mxu0 %v4455
    %4504 = vmatprep.subr.mxu0 %v4454
    %4505 = vmatpush1.msra.mxu0 %v4453
    %4506 = vmatprep.subr.mxu0 %v4452
    %4507 = vmatpush1.msra.mxu0 %v4451
    %4508 = vmatprep.subr.mxu0 %v4450
    %4509 = vmatpush1.msra.mxu0 %v4449
    %4510 = vmatprep.subr.mxu0 %v4448
    %4511 = vmatpush1.msra.mxu0 %v4447
    %4512 = vmatprep.subr.mxu0 %v4446
    %4513 = vmatpush1.msra.mxu0 %v4445
    %4514 = vmatprep.subr.mxu0 %v4444
    %4515 = vmatpush1.msra.mxu0 %v4443
    %4516 = vmatprep.subr.mxu0 %v4442
    %4517 = vmatpush1.msra.mxu0 %v4441
    %4518 = vmatprep.subr.mxu0 0.0
    %4519 = vmatpush2.msra.mxu0 0.0
    %4520 = vmatprep.subr.mxu0 0.0
    %4521 = vmatpush2.msra.mxu0 0.0
    %4522 = vmatprep.subr.mxu0 0.0
    %4523 = vmatpush2.msra.mxu0 0.0
    %4524 = vmatprep.subr.mxu0 0.0
    %4525 = vmatpush2.msra.mxu0 0.0
    %4526 = vmatprep.subr.mxu0 0.0
    %4527 = vmatpush2.msra.mxu0 0.0
    %4528 = vmatprep.subr.mxu0 0.0
    %4529 = vmatpush2.msra.mxu0 0.0
    %4530 = vmatprep.subr.mxu0 0.0
    %4531 = vmatpush2.msra.mxu0 0.0
    %4532 = vmatprep.subr.mxu0 0.0
    %4533 = vmatpush2.msra.mxu0 0.0
    %4534 = vmatprep.subr.mxu0 0.0
    %4535 = vmatpush2.msra.mxu0 0.0
    %4536 = vmatprep.subr.mxu0 0.0
    %4537 = vmatpush2.msra.mxu0 0.0
    %4538 = vmatprep.subr.mxu0 0.0
    %4539 = vmatpush2.msra.mxu0 0.0
    %4540 = vmatprep.subr.mxu0 0.0
    %4541 = vmatpush2.msra.mxu0 0.0
    %4542 = vmatprep.subr.mxu0 0.0
    %4543 = vmatpush2.msra.mxu0 0.0
    %4544 = vmatprep.subr.mxu0 0.0
    %4545 = vmatpush2.msra.mxu0 0.0
    %4546 = vmatprep.subr.mxu0 0.0
    %4547 = vmatpush2.msra.mxu0 0.0
    %4548 = vmatprep.subr.mxu0 0.0
    %4549 = vmatpush2.msra.mxu0 0.0
    %4550 = vmatprep.mubr.f32.mxu0 0.0
    %4551 = vmatmul.mubr.f32.gmra.mxu0 %v4438
    %v4552 = vpop.f32.mrf.mxu0
    %v4553 = vadd.f32 %v4479, %v4552
    %v4554 = vpop.f32.mrf.mxu0
    %v4555 = vadd.f32 %v4483, %v4554
    %4556 = vmatprep.mubr.f32.mxu0 0.0
    %4557 = vmatmul.mubr.f32.gmra.mxu0 %v4439
    %v4558 = vpop.f32.mrf.mxu0
    %v4559 = vadd.f32 %v4479, %v4558
    %v4560 = vpop.f32.mrf.mxu0
    %v4561 = vadd.f32 %v4483, %v4560
    %4562 = vdwg.mxu0
    %v4563 = vmul.f32 %v4553, 0.5
    %v4564 = vmul.f32 %v4555, 0.5
    %v4565 = vmul.f32 %v4559, 0.5
    %v4566 = vmul.f32 %v4561, 0.5
    %v4567 = vmul.f32 %v4553, 0.044715
    %v4568 = vmul.f32 %v4555, 0.044715
    %v4569 = vmul.f32 %v4559, 0.044715
    %v4570 = vmul.f32 %v4561, 0.044715
    %v4571 = vmul.f32 %v4567, %v4553
    %v4572 = vmul.f32 %v4568, %v4555
    %v4573 = vmul.f32 %v4569, %v4559
    %v4574 = vmul.f32 %v4570, %v4561
    %v4575 = vmul.f32 %v4571, %v4553
    %v4576 = vmul.f32 %v4572, %v4555
    %v4577 = vmul.f32 %v4573, %v4559
    %v4578 = vmul.f32 %v4574, %v4561
    %v4579 = vadd.f32 %v4553, %v4575
    %v4580 = vadd.f32 %v4555, %v4576
    %v4581 = vadd.f32 %v4559, %v4577
    %v4582 = vadd.f32 %v4561, %v4578
    %v4583 = vmul.f32 %v4579, 0.7978846
    %v4584 = vmul.f32 %v4580, 0.7978846
    %v4585 = vmul.f32 %v4581, 0.7978846
    %v4586 = vmul.f32 %v4582, 0.7978846
    %v4587 = vtanh.pop %v4583
    %v4588 = vtanh.pop %v4584
    %v4589 = vtanh.pop %v4585
    %v4590 = vtanh.pop %v4586
    %v4591 = vadd.f32 %v4587, 1.0
    %v4592 = vadd.f32 %v4588, 1.0
    %v4593 = vadd.f32 %v4589, 1.0
    %v4594 = vadd.f32 %v4590, 1.0
    %v4595 = vmul.f32 %v4563, %v4591
    %v4596 = vmul.f32 %v4564, %v4592
    %v4597 = vmul.f32 %v4565, %v4593
    %v4598 = vmul.f32 %v4566, %v4594
    %s4599 = scalar_lea.vmem [#allocation17], 256
    %v4600 = vld [vmem:[%s4599] sm:$0xff]
    %v4601 = vld [vmem:[%s4599 + $0x8] sm:$0xff]
    %v4602 = vld [vmem:[%s4599 + $0x10] sm:$0xff]
    %v4603 = vld [vmem:[%s4599 + $0x18] sm:$0xff]
    %v4604 = vld [vmem:[%s4599 + $0x20] sm:$0xff]
    %v4605 = vld [vmem:[%s4599 + $0x28] sm:$0xff]
    %v4606 = vld [vmem:[%s4599 + $0x30] sm:$0xff]
    %v4607 = vld [vmem:[%s4599 + $0x38] sm:$0xff]
    %v4608 = vld [vmem:[%s4599 + $0x40] sm:$0xff]
    %v4609 = vld [vmem:[%s4599 + $0x48] sm:$0xff]
    %v4610 = vld [vmem:[%s4599 + $0x50] sm:$0xff]
    %v4611 = vld [vmem:[%s4599 + $0x58] sm:$0xff]
    %v4612 = vld [vmem:[%s4599 + $0x60] sm:$0xff]
    %v4613 = vld [vmem:[%s4599 + $0x68] sm:$0xff]
    %v4614 = vld [vmem:[%s4599 + $0x70] sm:$0xff]
    %v4615 = vld [vmem:[%s4599 + $0x78] sm:$0xff]
    %v4616 = vld [vmem:[%s4599 + $0x80] sm:$0xff]
    %v4617 = vld [vmem:[%s4599 + $0x88] sm:$0xff]
    %v4618 = vld [vmem:[%s4599 + $0x90] sm:$0xff]
    %v4619 = vld [vmem:[%s4599 + $0x98] sm:$0xff]
    %v4620 = vld [vmem:[%s4599 + $0xa0] sm:$0xff]
    %v4621 = vld [vmem:[%s4599 + $0xa8] sm:$0xff]
    %v4622 = vld [vmem:[%s4599 + $0xb0] sm:$0xff]
    %v4623 = vld [vmem:[%s4599 + $0xb8] sm:$0xff]
    %v4624 = vld [vmem:[%s4599 + $0xc0] sm:$0xff]
    %v4625 = vld [vmem:[%s4599 + $0xc8] sm:$0xff]
    %v4626 = vld [vmem:[%s4599 + $0xd0] sm:$0xff]
    %v4627 = vld [vmem:[%s4599 + $0xd8] sm:$0xff]
    %v4628 = vld [vmem:[%s4599 + $0xe0] sm:$0xff]
    %v4629 = vld [vmem:[%s4599 + $0xe8] sm:$0xff]
    %v4630 = vld [vmem:[%s4599 + $0xf0] sm:$0xff]
    %v4631 = vld [vmem:[%s4599 + $0xf8] sm:$0xff]
    %s4632 = scalar_lea.vmem [#allocation18], 1
    %v4633 = vld [vmem:[%s4632] sm:$0x1]
    %v4635 = vlaneseq
    %v4636 = vshrl.u32 %v4635, 7
    %v4637 = vsub.s32 0, %v4636
    %v4638 = vrot.slane %v4633, %v4637
    %4640 = vmatprep.subr.mxu0 0.0
    %4641 = vmatpush1.msra.mxu0 %v4615
    %4642 = vmatprep.subr.mxu0 0.0
    %4643 = vmatpush1.msra.mxu0 %v4614
    %4644 = vmatprep.subr.mxu0 0.0
    %4645 = vmatpush1.msra.mxu0 %v4613
    %4646 = vmatprep.subr.mxu0 0.0
    %4647 = vmatpush1.msra.mxu0 %v4612
    %4648 = vmatprep.subr.mxu0 0.0
    %4649 = vmatpush1.msra.mxu0 %v4611
    %4650 = vmatprep.subr.mxu0 0.0
    %4651 = vmatpush1.msra.mxu0 %v4610
    %4652 = vmatprep.subr.mxu0 0.0
    %4653 = vmatpush1.msra.mxu0 %v4609
    %4654 = vmatprep.subr.mxu0 0.0
    %4655 = vmatpush1.msra.mxu0 %v4608
    %4656 = vmatprep.subr.mxu0 0.0
    %4657 = vmatpush1.msra.mxu0 %v4607
    %4658 = vmatprep.subr.mxu0 0.0
    %4659 = vmatpush1.msra.mxu0 %v4606
    %4660 = vmatprep.subr.mxu0 0.0
    %4661 = vmatpush1.msra.mxu0 %v4605
    %4662 = vmatprep.subr.mxu0 0.0
    %4663 = vmatpush1.msra.mxu0 %v4604
    %4664 = vmatprep.subr.mxu0 0.0
    %4665 = vmatpush1.msra.mxu0 %v4603
    %4666 = vmatprep.subr.mxu0 0.0
    %4667 = vmatpush1.msra.mxu0 %v4602
    %4668 = vmatprep.subr.mxu0 0.0
    %4669 = vmatpush1.msra.mxu0 %v4601
    %4670 = vmatprep.subr.mxu0 0.0
    %4671 = vmatpush1.msra.mxu0 %v4600
    %4672 = vmatprep.subr.mxu0 0.0
    %4673 = vmatpush2.msra.mxu0 %v4631
    %4674 = vmatprep.subr.mxu0 0.0
    %4675 = vmatpush2.msra.mxu0 %v4630
    %4676 = vmatprep.subr.mxu0 0.0
    %4677 = vmatpush2.msra.mxu0 %v4629
    %4678 = vmatprep.subr.mxu0 0.0
    %4679 = vmatpush2.msra.mxu0 %v4628
    %4680 = vmatprep.subr.mxu0 0.0
    %4681 = vmatpush2.msra.mxu0 %v4627
    %4682 = vmatprep.subr.mxu0 0.0
    %4683 = vmatpush2.msra.mxu0 %v4626
    %4684 = vmatprep.subr.mxu0 0.0
    %4685 = vmatpush2.msra.mxu0 %v4625
    %4686 = vmatprep.subr.mxu0 0.0
    %4687 = vmatpush2.msra.mxu0 %v4624
    %4688 = vmatprep.subr.mxu0 0.0
    %4689 = vmatpush2.msra.mxu0 %v4623
    %4690 = vmatprep.subr.mxu0 0.0
    %4691 = vmatpush2.msra.mxu0 %v4622
    %4692 = vmatprep.subr.mxu0 0.0
    %4693 = vmatpush2.msra.mxu0 %v4621
    %4694 = vmatprep.subr.mxu0 0.0
    %4695 = vmatpush2.msra.mxu0 %v4620
    %4696 = vmatprep.subr.mxu0 0.0
    %4697 = vmatpush2.msra.mxu0 %v4619
    %4698 = vmatprep.subr.mxu0 0.0
    %4699 = vmatpush2.msra.mxu0 %v4618
    %4700 = vmatprep.subr.mxu0 0.0
    %4701 = vmatpush2.msra.mxu0 %v4617
    %4702 = vmatprep.subr.mxu0 0.0
    %4703 = vmatpush2.msra.mxu0 %v4616
    %4704 = vmatprep.mubr.f32.mxu0 %v4596
    %4705 = vmatmul.mubr.f32.gmra.mxu0 %v4595
    %v4706 = vpop.f32.mrf.mxu0
    %v4707 = vadd.f32 %v4638, %v4706
    %v4708 = vpop.f32.mrf.mxu0
    %4709 = vmatprep.mubr.f32.mxu0 %v4598
    %4710 = vmatmul.mubr.f32.gmra.mxu0 %v4597
    %v4711 = vpop.f32.mrf.mxu0
    %v4712 = vadd.f32 %v4638, %v4711
    %v4713 = vpop.f32.mrf.mxu0
    %4714 = vdwg.mxu0
    %v4715 = vadd.f32 %v4707, %v4396
    %v4716 = vadd.f32 %v4712, %v4397
    %v4717 = vld [vmem:[%s15] sm:$0x1]
    %v4718 = vld [vmem:[%s16] sm:$0x1]
    %4719 = vadd.xlane.f32.xlu0 %v4715
    %v4720 = vpop.xlane.xlu0 %4719
    %4721 = vadd.xlane.f32.xlu0 %v4716
    %v4722 = vpop.xlane.xlu0 %4721
    %v4723 = vmul.f32 %v4720, %v2155
    %v4724 = vmul.f32 %v4722, %v2155
    %v4725 = vsub.f32 %v4715, %v4723
    %v4726 = vsub.f32 %v4716, %v4724
    %v4727 = vmul.f32 %v4725, %v4725
    %v4728 = vmul.f32 %v4726, %v4726
    %4729 = vadd.xlane.f32.xlu0 %v4727
    %v4730 = vpop.xlane.xlu0 %4729
    %4731 = vadd.xlane.f32.xlu0 %v4728
    %v4732 = vpop.xlane.xlu0 %4731
    %v4733 = vmul.f32 %v4730, %v2155
    %v4734 = vmul.f32 %v4732, %v2155
    %v4735 = vadd.f32 %v4733, 1e-06
    %v4736 = vadd.f32 %v4734, 1e-06
    %v4737 = vrsqrt.pop %v4735
    %v4738 = vrsqrt.pop %v4736
    %v4739 = vmul.f32 %v4725, %v4737
    %v4740 = vmul.f32 %v4726, %v4738
    %v4742 = vlaneseq
    %v4743 = vshrl.u32 %v4742, 7
    %v4744 = vsub.s32 0, %v4743
    %v4745 = vrot.slane %v4717, %v4744
    %v4747 = vmul.f32 %v4739, %v4745
    %v4748 = vmul.f32 %v4740, %v4745
    %v4750 = vlaneseq
    %v4751 = vshrl.u32 %v4750, 7
    %v4752 = vsub.s32 0, %v4751
    %v4753 = vrot.slane %v4718, %v4752
    %v4755 = vadd.f32 %v4747, %v4753
    %v4756 = vadd.f32 %v4748, %v4753
    %v4757 = vld [vmem:[%s17] sm:$0x1]
    %v4759 = vlaneseq
    %v4760 = vshrl.u32 %v4759, 7
    %v4761 = vsub.s32 0, %v4760
    %v4762 = vrot.slane %v4757, %v4761
    %v4764 = vmul.f32 %v4755, %v4762
    %v4765 = vmul.f32 %v4756, %v4762
    %4766 = vadd.xlane.f32.xlu0 %v4764
    %v4767 = vpop.xlane.xlu0 %4766
    %4768 = vadd.xlane.f32.xlu0 %v4765
    %v4769 = vpop.xlane.xlu0 %4768
    %v4770 = vld [vmem:[#allocation2] sm:$0x1]
    %v4772 = vlaneseq
    %v4773 = vshrl.u32 %v4772, 7
    %v4774 = vsub.s32 0, %v4773
    %v4775 = vrot.slane %v4770, %v4774
    %4776 = vset.pattern.permute.xlu0 0
    %4777 = vperm.xlu0 %4776, %v4775
    %v4778 = vpop.permute.xlu0 %4777
    %v4780 = vadd.f32 %v4767, %v4778
    %v4781 = vadd.f32 %v4769, %v4778
    %v4782 = vsub.f32 0.0, %v4780
    %v4783 = vsub.f32 0.0, %v4781
    %v4784 = vmul.f32 %v4782, 1.442695
    %v4785 = vpow.pop %v4784
    %v4786 = vmul.f32 %v4783, 1.442695
    %v4787 = vpow.pop %v4786
    %v4788 = vadd.f32 %v4785, 1.0
    %v4789 = vadd.f32 %v4787, 1.0
    %v4790 = vrcp.pop %v4788
    %v4791 = vmul.f32 1.0, %v4790
    %v4792 = vrcp.pop %v4789
    %v4793 = vmul.f32 1.0, %v4792
    %v4795 = vlaneseq
    %v4796 = vshrl.u32 %v4795, 7
    %v4797 = vsub.s32 0, %v4796
    %v4798 = vrot.slane %v201, %v4797
    %4800 = vbcast.lane.b32.xlu0 %v4798, 256
    %v4801 = vpop.permute.xlu0 %4800
    %v4802 = vlaneseq
    %v4803 = vshrl.u32 %v4802, 7
    %v4804 = vsub.s32 1, %v4803
    %v4805 = vrot.slane %v201, %v4804
    %4807 = vbcast.lane.b32.xlu0 %v4805, 256
    %v4808 = vpop.permute.xlu0 %4807
    %v4811 = vmul.f32 %v4791, %v4801
    %v4812 = vmul.f32 %v4793, %v4808
    %4815 = vset.pattern.permute.xlu0 0
    %4816 = vperm.xlu0 %4815, %v4811
    %v4817 = vpop.permute.xlu0 %4816
    %4818 = vset.pattern.permute.xlu0 0
    %4819 = vperm.xlu0 %4818, %v4812
    %v4820 = vpop.permute.xlu0 %4819
    %v4821 = vlaneseq
    %v4822 = vand.u32 %v4821, 127
    %v4823 = vlaneseq
    %v4824 = vshrl.u32 %v4823, 7
    %v4825 = vsub.s32 %v4822, %v4824
    %v4826 = vrot.slane %v4817, %v4825
    %v4827 = vlaneseq
    %v4828 = vshrl.u32 %v4827, 7
    %v4829 = vsub.s32 %v4822, %v4828
    %v4830 = vrot.slane %v4820, %v4829
    %vm4831 = vcmask 1041409
    %v4832 = vsel %vm4831, %v4830, %v4826
    %vm4834 = vcmask 58368
    %4835 = vst.msk [vmem:[#allocation20] sm:$0x3] %vm4834, %v4832
    // Predicated region
    $region118: #{ext_transformer_encoder_forward.1} parent=1 // pred_check
      _
    $region119: #{ext_transformer_encoder_forward.1} parent=1 // pred_check_branch
      %4837 = sbr.rel (0) target = $region121
    $region120: #{ext_transformer_encoder_forward.1} parent=1 // pred_region
      %s4839 = ssub.s32 32, 32
      %4840 = vsyncadd [#allocation5], %s4839
      %s4842 = sshll.u32 [#allocation20], 4
      %s4843 = int_to_ptr.vmem [resolvable:$true] %s4842
      %4845 = dma.vmem_to_hbm [thread:$0]  %s4843, 32, %s19, [#allocation5]
    $region121: #{ext_transformer_encoder_forward.1} parent=1 // pred_fallthru
      _
    // Predicated region
    $region122: #{ext_transformer_encoder_forward.1} parent=1 // pred_check
      _
    $region123: #{ext_transformer_encoder_forward.1} parent=1 // pred_check_branch
      %4847 = sbr.rel (0) target = $region125
    $region124: #{ext_transformer_encoder_forward.1} parent=1 // pred_region
      %4848 = dma.done [#allocation5], 32
    $region125: #{ext_transformer_encoder_forward.1} parent=1 // pred_fallthru
      _
    %4849 = vsyncpa [#allocation4], 1
    %4850 = vsyncpa [#allocation7], 1
    %4851 = vsyncpa [#allocation10], 1
    %4852 = vsyncpa [#allocation13], 1
    %4853 = vsyncpa [#allocation16], 1
    %4854 = vsyncpa [#allocation19], 1
    %4855 = vsyncpa [#allocation5], 1

</llo_original>
